<compile_context>
chip_gen: v6e
topology: v6e:2x2x1
jax: 0.10.0
libtpu: 0.0.40
codegen_flags: <defaults>
</compile_context>

<pallas_src>
import functools

import jax
import jax.numpy as jnp
from jax.experimental import pallas as pl
from jax.experimental.pallas import tpu as pltpu

SUBLANE = 8                              # f32 sublane granularity for row tiles
_VMEM_LIMIT_BYTES = 48 * 1024 * 1024     # safe on v7x (64 MiB physical), roomy on v5e/v6e
_HIGHEST = jax.lax.Precision.HIGHEST


# ----------------------------------------------------------------------------
# small helpers
# ----------------------------------------------------------------------------
def _round_up(x, m):
    return ((x + m - 1) // m) * m


def _nbytes(arrays):
    return int(sum(a.size * a.dtype.itemsize for a in arrays))


def _pick_row_tile(M, tm):
    """Largest row tile <= tm, multiple of 8, and (when possible) >= 2 grid steps
    so both TensorCores are used on v7x.  Partial edge blocks are left to Pallas."""
    if M <= 2 * SUBLANE:
        return M                                   # full-dim block (always legal)
    half = _round_up((M + 1) // 2, SUBLANE)
    return max(SUBLANE, min(tm, half))


# ----------------------------------------------------------------------------
# in-kernel building blocks
# ----------------------------------------------------------------------------
def _dot(a, w):
    """MXU matmul, fp32 accumulation.  Activations are cast to the weight dtype
    (bf16 weights -> native bf16 MXU pass; fp32 weights -> fp32 matmul)."""
    return jnp.dot(a.astype(w.dtype), w, preferred_element_type=jnp.float32)


def _mlp3(x, w1, b1, w2, b2, w3, b3, final_relu):
    """Fused Linear->ReLU->Linear->ReLU->Linear(->ReLU) on VMEM values/refs."""
    h = jnp.maximum(_dot(x, w1[...]) + b1[...], 0.0)
    h = jnp.maximum(_dot(h, w2[...]) + b2[...], 0.0)
    h = _dot(h, w3[...]) + b3[...]
    return jnp.maximum(h, 0.0) if final_relu else h


# ----------------------------------------------------------------------------
# kernels
# ----------------------------------------------------------------------------
def _mlp3_kernel(x_ref, w1, b1, w2, b2, w3, b3, o_ref, *, final_relu):
    o_ref[...] = _mlp3(x_ref[...], w1, b1, w2, b2, w3, b3,
                       final_relu).astype(o_ref.dtype)


def _dynamics_core_kernel(
        # per-batch data blocks
        p_in_ref, rel_in_ref, rr_ref, rs_ref, rrt_ref, st_ref,
        # particle encoder
        pe_w1, pe_b1, pe_w2, pe_b2, pe_w3, pe_b3,
        # relation encoder
        re_w1, re_b1, re_w2, re_b2, re_w3, re_b3,
        # relation propagator (row-split: [relation_encode | effect_r | effect_s])
        rp_wa, rp_wb, rp_wc, rp_b,
        # particle propagator (row-split: [particle_encode | effect_rel_agg])
        pp_wa, pp_wb, pp_b,
        # non-rigid predictor
        nr_w1, nr_b1, nr_w2, nr_b2, nr_w3, nr_b3,
        # outputs
        pos_ref, mot_ref,
        *, pstep, n_p, clamp):
    p_in = p_in_ref[0]            # (N, d_in)
    rel_in = rel_in_ref[0]        # (n_rel, d_rel)
    rr = rr_ref[0]                # (n_rel, N) receiver incidence
    rs = rs_ref[0]                # (n_rel, N) sender incidence
    rrt = rrt_ref[0]              # (N, n_rel) receiver incidence, transposed

    particle_encode = _mlp3(p_in, pe_w1, pe_b1, pe_w2, pe_b2, pe_w3, pe_b3, True)
    relation_encode = _mlp3(rel_in, re_w1, re_b1, re_w2, re_b2, re_w3, re_b3, True)

    # pstep-invariant partial products of the two propagators, hoisted out of the loop
    rel_base = _dot(relation_encode, rp_wa[...]) + rp_b[...]
    par_base = _dot(particle_encode, pp_wa[...]) + pp_b[...]

    eff = particle_encode
    for _ in range(pstep):                         # pstep is small -> static unroll
        effect_r = jnp.dot(rr, eff, preferred_element_type=jnp.float32)
        effect_s = jnp.dot(rs, eff, preferred_element_type=jnp.float32)
        effect_rel = jnp.maximum(
            rel_base + _dot(effect_r, rp_wb[...]) + _dot(effect_s, rp_wc[...]), 0.0)
        agg = jnp.dot(rrt, effect_rel, preferred_element_type=jnp.float32)
        eff = jnp.maximum(par_base + _dot(agg, pp_wb[...]) + eff, 0.0)

    motion = _mlp3(eff[:n_p], nr_w1, nr_b1, nr_w2, nr_b2, nr_w3, nr_b3, False)
    mot_ref[0] = motion.astype(mot_ref.dtype)
    pos_ref[0] = (st_ref[0] + jnp.clip(motion, -clamp, clamp)).astype(pos_ref.dtype)


# ----------------------------------------------------------------------------
# wrappers
# ----------------------------------------------------------------------------
def mlp3_forward(x, params, *, tm=1024, vmem_limit_bytes=_VMEM_LIMIT_BYTES):
    """Standalone fused Encoder / ParticlePredictor: x(..., d_in) -> (..., d_out)."""
    w1, w2, w3 = params["w"]
    b1, b2, b3 = params["b"]
    d_in, d_h, d_out = params["d_in"], params["d_hidden"], params["d_out"]
    assert x.shape[-1] == d_in
    lead = x.shape[:-1]

    x2 = x.reshape(-1, d_in).astype(jnp.float32)
    M = x2.shape[0]
    tm_eff = _pick_row_tile(M, tm)
    weights = (w1, b1, w2, b2, w3, b3)

    out = pl.pallas_call(
        functools.partial(_mlp3_kernel, final_relu=params["final_relu"]),
        out_shape=jax.ShapeDtypeStruct((M, d_out), jnp.float32),
        grid_spec=pltpu.PrefetchScalarGridSpec(
            num_scalar_prefetch=0,
            grid=(pl.cdiv(M, tm_eff),),
            # activations: unpadded last dim (== full logical dim), partial row
            # edge block handled by Pallas; weights: whole-array blocks with a
            # constant index map (fetched once, reused every step).
            in_specs=[pl.BlockSpec((tm_eff, d_in), lambda i: (i, 0))]
                     + [pl.BlockSpec(w.shape, lambda i: (0, 0)) for w in weights],
            out_specs=pl.BlockSpec((tm_eff, d_out), lambda i: (i, 0)),
        ),
        compiler_params=pltpu.CompilerParams(
            dimension_semantics=("parallel",),
            vmem_limit_bytes=vmem_limit_bytes,
        ),
        cost_estimate=pl.CostEstimate(
            flops=int(2 * M * (d_in * d_h + d_h * d_h + d_h * d_out)),
            transcendentals=0,
            bytes_accessed=int(4 * M * (d_in + d_out) + _nbytes(weights)),
        ),
    )(x2, *weights)
    return out.reshape(lead + (d_out,))


def dynamics_core_forward(params, p_inputs, rel_inputs, Rr, Rs, state_last_p,
                          *, pstep, clamp, vmem_limit_bytes=_VMEM_LIMIT_BYTES):
    """One fused pallas_call: encoders + pstep message passing + predictor + clamp."""
    B, N, d_in = p_inputs.shape
    _, n_rel, d_rel = rel_inputs.shape
    n_p, sd = state_last_p.shape[1], state_last_p.shape[2]
    f32 = jnp.float32
    Rr_t = jnp.swapaxes(Rr, 1, 2)

    pe, re = params["particle_encoder"], params["relation_encoder"]
    rp, pp = params["relation_propagator"], params["particle_propagator"]
    nr = params["non_rigid_predictor"]
    nf = pp["d_out"]

    weights = (pe["w"][0], pe["b"][0], pe["w"][1], pe["b"][1], pe["w"][2], pe["b"][2],
               re["w"][0], re["b"][0], re["w"][1], re["b"][1], re["w"][2], re["b"][2],
               rp["w_parts"][0], rp["w_parts"][1], rp["w_parts"][2], rp["b"],
               pp["w_parts"][0], pp["w_parts"][1], pp["b"],
               nr["w"][0], nr["b"][0], nr["w"][1], nr["b"][1], nr["w"][2], nr["b"][2])
    data = (p_inputs.astype(f32), rel_inputs.astype(f32),
            Rr.astype(f32), Rs.astype(f32), Rr_t.astype(f32), state_last_p.astype(f32))

    data_specs = [
        pl.BlockSpec((1, N, d_in), lambda b: (b, 0, 0)),
        pl.BlockSpec((1, n_rel, d_rel), lambda b: (b, 0, 0)),
        pl.BlockSpec((1, n_rel, N), lambda b: (b, 0, 0)),
        pl.BlockSpec((1, n_rel, N), lambda b: (b, 0, 0)),
        pl.BlockSpec((1, N, n_rel), lambda b: (b, 0, 0)),
        pl.BlockSpec((1, n_p, sd), lambda b: (b, 0, 0)),
    ]
    weight_specs = [pl.BlockSpec(w.shape, lambda b: (0, 0)) for w in weights]
    out_spec = pl.BlockSpec((1, n_p, 3), lambda b: (b, 0, 0))

    def _mlp3_flops(m, p):
        return 2 * m * (p["d_in"] * p["d_hidden"]
                        + p["d_hidden"] * p["d_hidden"]
                        + p["d_hidden"] * p["d_out"])

    flops = B * (_mlp3_flops(N, pe) + _mlp3_flops(n_rel, re) + _mlp3_flops(n_p, nr)
                 + pstep * 2 * (3 * n_rel * N * nf + 3 * n_rel * nf * nf
                                + 2 * N * nf * nf))

    pred_pos, pred_motion = pl.pallas_call(
        functools.partial(_dynamics_core_kernel, pstep=pstep, n_p=n_p,
                          clamp=float(clamp)),
        out_shape=(jax.ShapeDtypeStruct((B, n_p, 3), f32),
                   jax.ShapeDtypeStruct((B, n_p, 3), f32)),
        grid_spec=pltpu.PrefetchScalarGridSpec(
            num_scalar_prefetch=0,
            grid=(B,),                            # batch-parallel: v7x megacore
            in_specs=data_specs + weight_specs,
            out_specs=(out_spec, out_spec),
        ),
        compiler_params=pltpu.CompilerParams(
            dimension_semantics=("parallel",),
            vmem_limit_bytes=vmem_limit_bytes,
        ),
        cost_estimate=pl.CostEstimate(
            flops=int(flops), transcendentals=0,
            bytes_accessed=int(_nbytes(data) + _nbytes(weights) + 2 * B * n_p * 3 * 4),
        ),
    )(*data, *weights)
    return pred_pos, pred_motion


# ----------------------------------------------------------------------------
# parameters (nn.Linear-style init; weights stored (in, out), bf16 by default)
# ----------------------------------------------------------------------------
def _init_linear(kw, kb, fan_in, fan_out):
    bound = float(fan_in) ** -0.5
    w = jax.random.uniform(kw, (fan_in, fan_out), jnp.float32, -bound, bound)
    b = jax.random.uniform(kb, (fan_out,), jnp.float32, -bound, bound)
    return w, b


def make_mlp3_params(key, d_in, d_hidden, d_out, *, final_relu=True,
                     weight_dtype=jnp.bfloat16):
    ks = jax.random.split(key, 6)
    w1, b1 = _init_linear(ks[0], ks[1], d_in, d_hidden)
    w2, b2 = _init_linear(ks[2], ks[3], d_hidden, d_hidden)
    w3, b3 = _init_linear(ks[4], ks[5], d_hidden, d_out)
    wq = [w.astype(weight_dtype) for w in (w1, w2, w3)]
    return {
        "w": wq,                                         # kernel weights
        "b": [b[None, :] for b in (b1, b2, b3)],         # fp32 (1, d) biases
        "w_ref": [w.astype(jnp.float32) for w in wq],    # quantization-consistent ref
        "b_ref": [b1, b2, b3],
        "d_in": d_in, "d_hidden": d_hidden, "d_out": d_out, "final_relu": final_relu,
    }


def make_propagator_params(key, d_ins, d_out, *, weight_dtype=jnp.bfloat16):
    kw, kb = jax.random.split(key)
    d_in = sum(d_ins)
    w, b = _init_linear(kw, kb, d_in, d_out)
    wq = w.astype(weight_dtype)
    parts, off = [], 0
    for d in d_ins:                      # row-split so the kernel avoids the concat
        parts.append(wq[off:off + d])
        off += d
    return {
        "w_parts": parts, "b": b[None, :],
        "w_ref": wq.astype(jnp.float32), "b_ref": b,
        "d_ins": tuple(d_ins), "d_in": d_in, "d_out": d_out,
    }


def build_dynamics_params(key, *, input_dim, rel_input_dim, nf_particle,
                          nf_relation, nf_effect, weight_dtype=jnp.bfloat16):
    ks = jax.random.split(key, 5)
    return {
        "particle_encoder": make_mlp3_params(
            ks[0], input_dim, nf_particle, nf_effect, weight_dtype=weight_dtype),
        "relation_encoder": make_mlp3_params(
            ks[1], rel_input_dim, nf_relation, nf_effect, weight_dtype=weight_dtype),
        "relation_propagator": make_propagator_params(
            ks[2], [nf_effect, nf_effect, nf_effect], nf_effect,
            weight_dtype=weight_dtype),
        "particle_propagator": make_propagator_params(
            ks[3], [nf_effect, nf_effect], nf_effect, weight_dtype=weight_dtype),
        "non_rigid_predictor": make_mlp3_params(
            ks[4], nf_effect, nf_effect, 3, final_relu=False,
            weight_dtype=weight_dtype),
    }


# ----------------------------------------------------------------------------
# pure-JAX references (same quantized weights, PyTorch-faithful structure)
# ----------------------------------------------------------------------------
def mlp3_reference(x, params):
    w1, w2, w3 = params["w_ref"]
    b1, b2, b3 = params["b_ref"]
    h = x.reshape(-1, params["d_in"]).astype(jnp.float32)
    h = jnp.maximum(jnp.dot(h, w1, precision=_HIGHEST) + b1, 0.0)
    h = jnp.maximum(jnp.dot(h, w2, precision=_HIGHEST) + b2, 0.0)
    h = jnp.dot(h, w3, precision=_HIGHEST) + b3
    if params["final_relu"]:
        h = jnp.maximum(h, 0.0)
    return h.reshape(x.shape[:-1] + (params["d_out"],))


def propagator_reference(x, params, res=None):
    h = jnp.dot(x.reshape(-1, params["d_in"]).astype(jnp.float32),
                params["w_ref"], precision=_HIGHEST) + params["b_ref"]
    if res is not None:
        h = h + res.reshape(-1, params["d_out"])
    return jnp.maximum(h, 0.0).reshape(x.shape[:-1] + (params["d_out"],))


def _dynamics_core_reference(params, p_inputs, rel_inputs, Rr, Rs, state_last_p,
                             *, pstep, clamp):
    Rr_t = jnp.swapaxes(Rr, 1, 2)
    particle_encode = mlp3_reference(p_inputs, params["particle_encoder"])
    relation_encode = mlp3_reference(rel_inputs, params["relation_encoder"])
    particle_effect = particle_encode
    for _ in range(pstep):
        effect_r = _bmm(Rr, particle_effect)
        effect_s = _bmm(Rs, particle_effect)
        effect_rel = propagator_reference(
            jnp.concatenate([relation_encode, effect_r, effect_s], axis=2),
            params["relation_propagator"])
        effect_rel_agg = _bmm(Rr_t, effect_rel)
        particle_effect = propagator_reference(
            jnp.concatenate([particle_encode, effect_rel_agg], axis=2),
            params["particle_propagator"], res=particle_effect)
    n_p = state_last_p.shape[1]
    motion = mlp3_reference(particle_effect[:, :n_p], params["non_rigid_predictor"])
    pos = state_last_p + jnp.clip(motion, -clamp, clamp)
    return pos, motion


# ----------------------------------------------------------------------------
# DynamicsPredictor forward (single-material configuration)
# ----------------------------------------------------------------------------
def _bmm(a, b):
    # Rr / Rs are 0-1 incidence matrices; dense bmm via XLA einsum.
    # TODO(synk): replace with an index-gather / segment-sum Pallas kernel
    #             (scalar-prefetched receiver/sender ids) for large sparse graphs.
    return jnp.einsum("bij,bjk->bik", a, b, precision=_HIGHEST)


def dynamics_predictor_forward(params, config, state, attrs, Rr, Rs, p_instance,
                               action, particle_den, physics_param,
                               *, use_pallas=True):
    """state:(B,n_his,N,3) attrs:(B,N,attr) Rr/Rs:(B,n_rel,N) p_instance:(B,n_p,n_inst)
    action:(B,N,act) particle_den:(B,) physics_param:(B,phys)."""
    B, n_his, N, state_dim = state.shape
    n_p = p_instance.shape[1]
    n_s = N - n_p
    n_instance = p_instance.shape[2]
    attr_dim = attrs.shape[-1]
    f32 = jnp.float32

    # temporal features: per-step residuals + current state (state_normalize=False)
    state_res = state[:, 1:] - state[:, :-1]
    state_cur = state[:, -1:]
    state_norm = jnp.concatenate([state_res, state_cur], axis=1)
    state_norm_t = jnp.swapaxes(state_norm, 1, 2).reshape(B, N, n_his * state_dim)

    # particle inputs: [attrs | states | physics | action | density]
    phys = jnp.concatenate(
        [jnp.tile(physics_param[:, None, :], (1, n_p, 1)),
         jnp.zeros((B, n_s, physics_param.shape[-1]), f32)], axis=1)
    den = jnp.concatenate(
        [jnp.tile(particle_den[:, None, None], (1, n_p, 1)),
         jnp.zeros((B, n_s, 1), f32)], axis=1)
    p_inputs = jnp.concatenate([attrs, state_norm_t, phys, action, den], axis=2)
    input_dim = p_inputs.shape[-1]
    # NOTE: instance_center feeds only the offset_dim>0 branch, which raises
    # NotImplementedError in the PyTorch reference -> skipped.
    # TODO(synk): multi-material (num_materials > 1) masked physics-encoder branch.

    # relation inputs: 2 dense incidence bmms over [p_inputs | group]; attrs_r/s,
    # pos_diff, dens_diff, group_diff are column slices of the same results.
    g = jnp.concatenate(
        [p_instance, jnp.zeros((B, n_s, n_instance), f32)], axis=1)
    p_aug = jnp.concatenate([p_inputs, g], axis=2)
    aug_r, aug_s = _bmm(Rr, p_aug), _bmm(Rs, p_aug)
    p_r, p_s = aug_r[..., :input_dim], aug_s[..., :input_dim]
    attrs_r, attrs_s = aug_r[..., :attr_dim], aug_s[..., :attr_dim]
    sl_pos = slice(attr_dim, attr_dim + n_his * state_dim)
    pos_diff = aug_r[..., sl_pos] - aug_s[..., sl_pos]
    dens_diff = (aug_r[..., input_dim - 1:input_dim]
                 - aug_s[..., input_dim - 1:input_dim])
    group_diff = jnp.sum(jnp.abs(aug_r[..., input_dim:] - aug_s[..., input_dim:]),
                         axis=2, keepdims=True)
    rel_inputs = jnp.concatenate(
        [p_r, p_s, attrs_r, attrs_s, group_diff, pos_diff, dens_diff], axis=2)

    state_last_p = state[:, -1, :n_p]
    pstep, clamp = config["pstep"], config["motion_clamp"]

    if use_pallas:
        return dynamics_core_forward(params, p_inputs, rel_inputs, Rr, Rs,
                                     state_last_p, pstep=pstep, clamp=clamp)
    return _dynamics_core_reference(params, p_inputs, rel_inputs, Rr, Rs,
                                    state_last_p, pstep=pstep, clamp=clamp)


# ----------------------------------------------------------------------------
# demo / self-check
# ----------------------------------------------------------------------------
if __name__ == "__main__":
    key = jax.random.PRNGKey(0)

    # small DynamicsPredictor configuration
    B, n_p, n_s, n_instance, n_rel = 2, 12, 4, 2, 24
    N = n_p + n_s
    n_his, state_dim, attr_dim, action_dim, density_dim, phys_dim = 3, 3, 2, 3, 1, 2
    nf_particle = nf_relation = nf_effect = 32
    config = {"pstep": 2, "motion_clamp": 100.0}

    input_dim = n_his * state_dim + attr_dim + action_dim + density_dim + phys_dim  # 17
    rel_input_dim = 2 * input_dim + 2 * attr_dim + 1 + state_dim * n_his + 1        # 49

    kparam, kin = jax.random.split(key)
    params_f32 = build_dynamics_params(
        kparam, input_dim=input_dim, rel_input_dim=rel_input_dim,
        nf_particle=nf_particle, nf_relation=nf_relation, nf_effect=nf_effect,
        weight_dtype=jnp.float32)
    params_bf16 = build_dynamics_params(       # bf16 weights: the MXU-native default
        kparam, input_dim=input_dim, rel_input_dim=rel_input_dim,
        nf_particle=nf_particle, nf_relation=nf_relation, nf_effect=nf_effect)

    ks = jax.random.split(kin, 9)
    state = jax.random.normal(ks[0], (B, n_his, N, state_dim), jnp.float32)
    attrs = jax.random.normal(ks[1], (B, N, attr_dim), jnp.float32)
    Rr = jax.nn.one_hot(jax.random.randint(ks[2], (B, n_rel), 0, N), N,
                        dtype=jnp.float32)
    Rs = jax.nn.one_hot(jax.random.randint(ks[3], (B, n_rel), 0, N), N,
                        dtype=jnp.float32)
    p_instance = jax.nn.one_hot(
        jax.random.randint(ks[4], (B, n_p), 0, n_instance), n_instance,
        dtype=jnp.float32)
    action = jax.random.normal(ks[5], (B, N, action_dim), jnp.float32)
    particle_den = jax.random.uniform(ks[6], (B,), jnp.float32, 0.5, 1.5)
    physics_param = jax.random.normal(ks[7], (B, phys_dim), jnp.float32)

    args = (state, attrs, Rr, Rs, p_instance, action, particle_den, physics_param)

    # 1) fp32 weights: fully fused Pallas forward vs pure-JAX reference (tight tol)
    pred_pos, pred_motion = dynamics_predictor_forward(params_f32, config, *args)
    pred_pos = jax.block_until_ready(pred_pos)
    pred_motion = jax.block_until_ready(pred_motion)
    assert pred_pos.shape == (B, n_p, state_dim)
    assert pred_motion.shape == (B, n_p, 3)
    pos_ref, mot_ref = dynamics_predictor_forward(params_f32, config, *args,
                                                  use_pallas=False)
    assert jnp.allclose(pred_motion, mot_ref, atol=2e-3, rtol=2e-3)
    assert jnp.allclose(pred_pos, pos_ref, atol=2e-3, rtol=2e-3)

    # 2) default bf16 weights (fp32 accumulation / biases) -- looser tolerance
    pos16, mot16 = dynamics_predictor_forward(params_bf16, config, *args)
    pos16 = jax.block_until_ready(pos16)
    pos16_ref, mot16_ref = dynamics_predictor_forward(params_bf16, config, *args,
                                                      use_pallas=False)
    assert jnp.allclose(mot16, mot16_ref, atol=5e-2, rtol=5e-2)
    assert jnp.allclose(pos16, pos16_ref, atol=5e-2, rtol=5e-2)

    # 3) standalone encoder kernel: multi-tile row grid incl. a partial edge block
    xb = jax.random.normal(ks[8], (4, 91, input_dim), jnp.float32)   # 364 rows
    y = jax.block_until_ready(mlp3_forward(xb, params_f32["particle_encoder"], tm=256))
    assert jnp.allclose(y, mlp3_reference(xb, params_f32["particle_encoder"]),
                        atol=2e-3, rtol=2e-3)
    y16 = jax.block_until_ready(mlp3_forward(xb, params_bf16["particle_encoder"],
                                             tm=256))
    assert jnp.allclose(y16, mlp3_reference(xb, params_bf16["particle_encoder"]),
                        atol=5e-2, rtol=5e-2)

    print("KERNEL_OK")
</pallas_src>

<mosaic_0001>
module attributes {stable_mosaic.version = 11 : i64} {
  func.func @_dynamics_core_kernel(%arg0: i32, %arg1: memref<1x16x17xf32, #tpu.memory_space<vmem>>, %arg2: memref<1x24x49xf32, #tpu.memory_space<vmem>>, %arg3: memref<1x24x16xf32, #tpu.memory_space<vmem>>, %arg4: memref<1x24x16xf32, #tpu.memory_space<vmem>>, %arg5: memref<1x16x24xf32, #tpu.memory_space<vmem>>, %arg6: memref<1x12x3xf32, #tpu.memory_space<vmem>>, %arg7: memref<17x32xf32, #tpu.memory_space<vmem>>, %arg8: memref<1x32xf32, #tpu.memory_space<vmem>>, %arg9: memref<32x32xf32, #tpu.memory_space<vmem>>, %arg10: memref<1x32xf32, #tpu.memory_space<vmem>>, %arg11: memref<32x32xf32, #tpu.memory_space<vmem>>, %arg12: memref<1x32xf32, #tpu.memory_space<vmem>>, %arg13: memref<49x32xf32, #tpu.memory_space<vmem>>, %arg14: memref<1x32xf32, #tpu.memory_space<vmem>>, %arg15: memref<32x32xf32, #tpu.memory_space<vmem>>, %arg16: memref<1x32xf32, #tpu.memory_space<vmem>>, %arg17: memref<32x32xf32, #tpu.memory_space<vmem>>, %arg18: memref<1x32xf32, #tpu.memory_space<vmem>>, %arg19: memref<32x32xf32, #tpu.memory_space<vmem>>, %arg20: memref<32x32xf32, #tpu.memory_space<vmem>>, %arg21: memref<32x32xf32, #tpu.memory_space<vmem>>, %arg22: memref<1x32xf32, #tpu.memory_space<vmem>>, %arg23: memref<32x32xf32, #tpu.memory_space<vmem>>, %arg24: memref<32x32xf32, #tpu.memory_space<vmem>>, %arg25: memref<1x32xf32, #tpu.memory_space<vmem>>, %arg26: memref<32x32xf32, #tpu.memory_space<vmem>>, %arg27: memref<1x32xf32, #tpu.memory_space<vmem>>, %arg28: memref<32x32xf32, #tpu.memory_space<vmem>>, %arg29: memref<1x32xf32, #tpu.memory_space<vmem>>, %arg30: memref<32x3xf32, #tpu.memory_space<vmem>>, %arg31: memref<1x3xf32, #tpu.memory_space<vmem>>, %arg32: memref<1x12x3xf32, #tpu.memory_space<vmem>>, %arg33: memref<1x12x3xf32, #tpu.memory_space<vmem>>) attributes {dimension_semantics = [#tpu.dimension_semantics<parallel>], iteration_bounds = array<i64: 2>, scalar_prefetch = 0 : i64, scratch_operands = 0 : i64, tpu.core_type = #tpu.core_type<tc>, window_params = [{transform_indices = @transform_0, window_bounds = array<i64: 1, 16, 17>}, {transform_indices = @transform_1, window_bounds = array<i64: 1, 24, 49>}, {transform_indices = @transform_2, window_bounds = array<i64: 1, 24, 16>}, {transform_indices = @transform_3, window_bounds = array<i64: 1, 24, 16>}, {transform_indices = @transform_4, window_bounds = array<i64: 1, 16, 24>}, {transform_indices = @transform_5, window_bounds = array<i64: 1, 12, 3>}, {pipeline_mode = #tpu.pipeline_mode<synchronous>, transform_indices = @transform_6, window_bounds = array<i64: 17, 32>}, {pipeline_mode = #tpu.pipeline_mode<synchronous>, transform_indices = @transform_7, window_bounds = array<i64: 1, 32>}, {pipeline_mode = #tpu.pipeline_mode<synchronous>, transform_indices = @transform_8, window_bounds = array<i64: 32, 32>}, {pipeline_mode = #tpu.pipeline_mode<synchronous>, transform_indices = @transform_9, window_bounds = array<i64: 1, 32>}, {pipeline_mode = #tpu.pipeline_mode<synchronous>, transform_indices = @transform_10, window_bounds = array<i64: 32, 32>}, {pipeline_mode = #tpu.pipeline_mode<synchronous>, transform_indices = @transform_11, window_bounds = array<i64: 1, 32>}, {pipeline_mode = #tpu.pipeline_mode<synchronous>, transform_indices = @transform_12, window_bounds = array<i64: 49, 32>}, {pipeline_mode = #tpu.pipeline_mode<synchronous>, transform_indices = @transform_13, window_bounds = array<i64: 1, 32>}, {pipeline_mode = #tpu.pipeline_mode<synchronous>, transform_indices = @transform_14, window_bounds = array<i64: 32, 32>}, {pipeline_mode = #tpu.pipeline_mode<synchronous>, transform_indices = @transform_15, window_bounds = array<i64: 1, 32>}, {pipeline_mode = #tpu.pipeline_mode<synchronous>, transform_indices = @transform_16, window_bounds = array<i64: 32, 32>}, {pipeline_mode = #tpu.pipeline_mode<synchronous>, transform_indices = @transform_17, window_bounds = array<i64: 1, 32>}, {pipeline_mode = #tpu.pipeline_mode<synchronous>, transform_indices = @transform_18, window_bounds = array<i64: 32, 32>}, {pipeline_mode = #tpu.pipeline_mode<synchronous>, transform_indices = @transform_19, window_bounds = array<i64: 32, 32>}, {pipeline_mode = #tpu.pipeline_mode<synchronous>, transform_indices = @transform_20, window_bounds = array<i64: 32, 32>}, {pipeline_mode = #tpu.pipeline_mode<synchronous>, transform_indices = @transform_21, window_bounds = array<i64: 1, 32>}, {pipeline_mode = #tpu.pipeline_mode<synchronous>, transform_indices = @transform_22, window_bounds = array<i64: 32, 32>}, {pipeline_mode = #tpu.pipeline_mode<synchronous>, transform_indices = @transform_23, window_bounds = array<i64: 32, 32>}, {pipeline_mode = #tpu.pipeline_mode<synchronous>, transform_indices = @transform_24, window_bounds = array<i64: 1, 32>}, {pipeline_mode = #tpu.pipeline_mode<synchronous>, transform_indices = @transform_25, window_bounds = array<i64: 32, 32>}, {pipeline_mode = #tpu.pipeline_mode<synchronous>, transform_indices = @transform_26, window_bounds = array<i64: 1, 32>}, {pipeline_mode = #tpu.pipeline_mode<synchronous>, transform_indices = @transform_27, window_bounds = array<i64: 32, 32>}, {pipeline_mode = #tpu.pipeline_mode<synchronous>, transform_indices = @transform_28, window_bounds = array<i64: 1, 32>}, {pipeline_mode = #tpu.pipeline_mode<synchronous>, transform_indices = @transform_29, window_bounds = array<i64: 32, 3>}, {pipeline_mode = #tpu.pipeline_mode<synchronous>, transform_indices = @transform_30, window_bounds = array<i64: 1, 3>}, {transform_indices = @transform_31, window_bounds = array<i64: 1, 12, 3>}, {transform_indices = @transform_32, window_bounds = array<i64: 1, 12, 3>}]} {
    %c0 = arith.constant 0 : index
    %c0_0 = arith.constant 0 : index
    %c0_1 = arith.constant 0 : index
    %0 = vector.load %arg1[%c0, %c0_0, %c0_1] : memref<1x16x17xf32, #tpu.memory_space<vmem>>, vector<1x16x17xf32>
    %1 = vector.shape_cast %0 : vector<1x16x17xf32> to vector<16x17xf32>
    %c0_2 = arith.constant 0 : index
    %c0_3 = arith.constant 0 : index
    %c0_4 = arith.constant 0 : index
    %2 = vector.load %arg2[%c0_2, %c0_3, %c0_4] : memref<1x24x49xf32, #tpu.memory_space<vmem>>, vector<1x24x49xf32>
    %3 = vector.shape_cast %2 : vector<1x24x49xf32> to vector<24x49xf32>
    %c0_5 = arith.constant 0 : index
    %c0_6 = arith.constant 0 : index
    %c0_7 = arith.constant 0 : index
    %4 = vector.load %arg3[%c0_5, %c0_6, %c0_7] : memref<1x24x16xf32, #tpu.memory_space<vmem>>, vector<1x24x16xf32>
    %5 = vector.shape_cast %4 : vector<1x24x16xf32> to vector<24x16xf32>
    %c0_8 = arith.constant 0 : index
    %c0_9 = arith.constant 0 : index
    %c0_10 = arith.constant 0 : index
    %6 = vector.load %arg4[%c0_8, %c0_9, %c0_10] : memref<1x24x16xf32, #tpu.memory_space<vmem>>, vector<1x24x16xf32>
    %7 = vector.shape_cast %6 : vector<1x24x16xf32> to vector<24x16xf32>
    %c0_11 = arith.constant 0 : index
    %c0_12 = arith.constant 0 : index
    %c0_13 = arith.constant 0 : index
    %8 = vector.load %arg5[%c0_11, %c0_12, %c0_13] : memref<1x16x24xf32, #tpu.memory_space<vmem>>, vector<1x16x24xf32>
    %9 = vector.shape_cast %8 : vector<1x16x24xf32> to vector<16x24xf32>
    %c0_14 = arith.constant 0 : index
    %c0_15 = arith.constant 0 : index
    %10 = vector.load %arg7[%c0_14, %c0_15] : memref<17x32xf32, #tpu.memory_space<vmem>>, vector<17x32xf32>
    %cst = arith.constant dense<0.000000e+00> : vector<16x32xf32>
    %11 = tpu.matmul %1, %10, %cst {dimension_numbers = #tpu.dot_dimension_numbers<[1], [0], [0], [1], [0, 0, 1, 1], [], []>} : vector<16x17xf32>, vector<17x32xf32>, vector<16x32xf32> -> vector<16x32xf32>
    %c0_16 = arith.constant 0 : index
    %c0_17 = arith.constant 0 : index
    %12 = vector.load %arg8[%c0_16, %c0_17] : memref<1x32xf32, #tpu.memory_space<vmem>>, vector<1x32xf32>
    %13 = vector.broadcast %12 : vector<1x32xf32> to vector<16x32xf32>
    %14 = arith.addf %11, %13 : vector<16x32xf32>
    %cst_18 = arith.constant 0.000000e+00 : f32
    %15 = vector.broadcast %cst_18 : f32 to vector<16x32xf32>
    %16 = arith.maximumf %14, %15 : vector<16x32xf32>
    %c0_19 = arith.constant 0 : index
    %c0_20 = arith.constant 0 : index
    %17 = vector.load %arg9[%c0_19, %c0_20] : memref<32x32xf32, #tpu.memory_space<vmem>>, vector<32x32xf32>
    %cst_21 = arith.constant dense<0.000000e+00> : vector<16x32xf32>
    %18 = tpu.matmul %16, %17, %cst_21 {dimension_numbers = #tpu.dot_dimension_numbers<[1], [0], [0], [1], [0, 0, 1, 1], [], []>} : vector<16x32xf32>, vector<32x32xf32>, vector<16x32xf32> -> vector<16x32xf32>
    %c0_22 = arith.constant 0 : index
    %c0_23 = arith.constant 0 : index
    %19 = vector.load %arg10[%c0_22, %c0_23] : memref<1x32xf32, #tpu.memory_space<vmem>>, vector<1x32xf32>
    %20 = vector.broadcast %19 : vector<1x32xf32> to vector<16x32xf32>
    %21 = arith.addf %18, %20 : vector<16x32xf32>
    %cst_24 = arith.constant 0.000000e+00 : f32
    %22 = vector.broadcast %cst_24 : f32 to vector<16x32xf32>
    %23 = arith.maximumf %21, %22 : vector<16x32xf32>
    %c0_25 = arith.constant 0 : index
    %c0_26 = arith.constant 0 : index
    %24 = vector.load %arg11[%c0_25, %c0_26] : memref<32x32xf32, #tpu.memory_space<vmem>>, vector<32x32xf32>
    %cst_27 = arith.constant dense<0.000000e+00> : vector<16x32xf32>
    %25 = tpu.matmul %23, %24, %cst_27 {dimension_numbers = #tpu.dot_dimension_numbers<[1], [0], [0], [1], [0, 0, 1, 1], [], []>} : vector<16x32xf32>, vector<32x32xf32>, vector<16x32xf32> -> vector<16x32xf32>
    %c0_28 = arith.constant 0 : index
    %c0_29 = arith.constant 0 : index
    %26 = vector.load %arg12[%c0_28, %c0_29] : memref<1x32xf32, #tpu.memory_space<vmem>>, vector<1x32xf32>
    %27 = vector.broadcast %26 : vector<1x32xf32> to vector<16x32xf32>
    %28 = arith.addf %25, %27 : vector<16x32xf32>
    %cst_30 = arith.constant 0.000000e+00 : f32
    %29 = vector.broadcast %cst_30 : f32 to vector<16x32xf32>
    %30 = arith.maximumf %28, %29 : vector<16x32xf32>
    %c0_31 = arith.constant 0 : index
    %c0_32 = arith.constant 0 : index
    %31 = vector.load %arg13[%c0_31, %c0_32] : memref<49x32xf32, #tpu.memory_space<vmem>>, vector<49x32xf32>
    %cst_33 = arith.constant dense<0.000000e+00> : vector<24x32xf32>
    %32 = tpu.matmul %3, %31, %cst_33 {dimension_numbers = #tpu.dot_dimension_numbers<[1], [0], [0], [1], [0, 0, 1, 1], [], []>} : vector<24x49xf32>, vector<49x32xf32>, vector<24x32xf32> -> vector<24x32xf32>
    %c0_34 = arith.constant 0 : index
    %c0_35 = arith.constant 0 : index
    %33 = vector.load %arg14[%c0_34, %c0_35] : memref<1x32xf32, #tpu.memory_space<vmem>>, vector<1x32xf32>
    %34 = vector.broadcast %33 : vector<1x32xf32> to vector<24x32xf32>
    %35 = arith.addf %32, %34 : vector<24x32xf32>
    %cst_36 = arith.constant 0.000000e+00 : f32
    %36 = vector.broadcast %cst_36 : f32 to vector<24x32xf32>
    %37 = arith.maximumf %35, %36 : vector<24x32xf32>
    %c0_37 = arith.constant 0 : index
    %c0_38 = arith.constant 0 : index
    %38 = vector.load %arg15[%c0_37, %c0_38] : memref<32x32xf32, #tpu.memory_space<vmem>>, vector<32x32xf32>
    %cst_39 = arith.constant dense<0.000000e+00> : vector<24x32xf32>
    %39 = tpu.matmul %37, %38, %cst_39 {dimension_numbers = #tpu.dot_dimension_numbers<[1], [0], [0], [1], [0, 0, 1, 1], [], []>} : vector<24x32xf32>, vector<32x32xf32>, vector<24x32xf32> -> vector<24x32xf32>
    %c0_40 = arith.constant 0 : index
    %c0_41 = arith.constant 0 : index
    %40 = vector.load %arg16[%c0_40, %c0_41] : memref<1x32xf32, #tpu.memory_space<vmem>>, vector<1x32xf32>
    %41 = vector.broadcast %40 : vector<1x32xf32> to vector<24x32xf32>
    %42 = arith.addf %39, %41 : vector<24x32xf32>
    %cst_42 = arith.constant 0.000000e+00 : f32
    %43 = vector.broadcast %cst_42 : f32 to vector<24x32xf32>
    %44 = arith.maximumf %42, %43 : vector<24x32xf32>
    %c0_43 = arith.constant 0 : index
    %c0_44 = arith.constant 0 : index
    %45 = vector.load %arg17[%c0_43, %c0_44] : memref<32x32xf32, #tpu.memory_space<vmem>>, vector<32x32xf32>
    %cst_45 = arith.constant dense<0.000000e+00> : vector<24x32xf32>
    %46 = tpu.matmul %44, %45, %cst_45 {dimension_numbers = #tpu.dot_dimension_numbers<[1], [0], [0], [1], [0, 0, 1, 1], [], []>} : vector<24x32xf32>, vector<32x32xf32>, vector<24x32xf32> -> vector<24x32xf32>
    %c0_46 = arith.constant 0 : index
    %c0_47 = arith.constant 0 : index
    %47 = vector.load %arg18[%c0_46, %c0_47] : memref<1x32xf32, #tpu.memory_space<vmem>>, vector<1x32xf32>
    %48 = vector.broadcast %47 : vector<1x32xf32> to vector<24x32xf32>
    %49 = arith.addf %46, %48 : vector<24x32xf32>
    %cst_48 = arith.constant 0.000000e+00 : f32
    %50 = vector.broadcast %cst_48 : f32 to vector<24x32xf32>
    %51 = arith.maximumf %49, %50 : vector<24x32xf32>
    %c0_49 = arith.constant 0 : index
    %c0_50 = arith.constant 0 : index
    %52 = vector.load %arg19[%c0_49, %c0_50] : memref<32x32xf32, #tpu.memory_space<vmem>>, vector<32x32xf32>
    %cst_51 = arith.constant dense<0.000000e+00> : vector<24x32xf32>
    %53 = tpu.matmul %51, %52, %cst_51 {dimension_numbers = #tpu.dot_dimension_numbers<[1], [0], [0], [1], [0, 0, 1, 1], [], []>} : vector<24x32xf32>, vector<32x32xf32>, vector<24x32xf32> -> vector<24x32xf32>
    %c0_52 = arith.constant 0 : index
    %c0_53 = arith.constant 0 : index
    %54 = vector.load %arg22[%c0_52, %c0_53] : memref<1x32xf32, #tpu.memory_space<vmem>>, vector<1x32xf32>
    %55 = vector.broadcast %54 : vector<1x32xf32> to vector<24x32xf32>
    %56 = arith.addf %53, %55 : vector<24x32xf32>
    %c0_54 = arith.constant 0 : index
    %c0_55 = arith.constant 0 : index
    %57 = vector.load %arg23[%c0_54, %c0_55] : memref<32x32xf32, #tpu.memory_space<vmem>>, vector<32x32xf32>
    %cst_56 = arith.constant dense<0.000000e+00> : vector<16x32xf32>
    %58 = tpu.matmul %30, %57, %cst_56 {dimension_numbers = #tpu.dot_dimension_numbers<[1], [0], [0], [1], [0, 0, 1, 1], [], []>} : vector<16x32xf32>, vector<32x32xf32>, vector<16x32xf32> -> vector<16x32xf32>
    %c0_57 = arith.constant 0 : index
    %c0_58 = arith.constant 0 : index
    %59 = vector.load %arg25[%c0_57, %c0_58] : memref<1x32xf32, #tpu.memory_space<vmem>>, vector<1x32xf32>
    %60 = vector.broadcast %59 : vector<1x32xf32> to vector<16x32xf32>
    %61 = arith.addf %58, %60 : vector<16x32xf32>
    %cst_59 = arith.constant dense<0.000000e+00> : vector<24x32xf32>
    %62 = tpu.matmul %5, %30, %cst_59 {dimension_numbers = #tpu.dot_dimension_numbers<[1], [0], [0], [1], [0, 0, 1, 1], [], []>} : vector<24x16xf32>, vector<16x32xf32>, vector<24x32xf32> -> vector<24x32xf32>
    %cst_60 = arith.constant dense<0.000000e+00> : vector<24x32xf32>
    %63 = tpu.matmul %7, %30, %cst_60 {dimension_numbers = #tpu.dot_dimension_numbers<[1], [0], [0], [1], [0, 0, 1, 1], [], []>} : vector<24x16xf32>, vector<16x32xf32>, vector<24x32xf32> -> vector<24x32xf32>
    %c0_61 = arith.constant 0 : index
    %c0_62 = arith.constant 0 : index
    %64 = vector.load %arg20[%c0_61, %c0_62] : memref<32x32xf32, #tpu.memory_space<vmem>>, vector<32x32xf32>
    %cst_63 = arith.constant dense<0.000000e+00> : vector<24x32xf32>
    %65 = tpu.matmul %62, %64, %cst_63 {dimension_numbers = #tpu.dot_dimension_numbers<[1], [0], [0], [1], [0, 0, 1, 1], [], []>} : vector<24x32xf32>, vector<32x32xf32>, vector<24x32xf32> -> vector<24x32xf32>
    %66 = arith.addf %56, %65 : vector<24x32xf32>
    %c0_64 = arith.constant 0 : index
    %c0_65 = arith.constant 0 : index
    %67 = vector.load %arg21[%c0_64, %c0_65] : memref<32x32xf32, #tpu.memory_space<vmem>>, vector<32x32xf32>
    %cst_66 = arith.constant dense<0.000000e+00> : vector<24x32xf32>
    %68 = tpu.matmul %63, %67, %cst_66 {dimension_numbers = #tpu.dot_dimension_numbers<[1], [0], [0], [1], [0, 0, 1, 1], [], []>} : vector<24x32xf32>, vector<32x32xf32>, vector<24x32xf32> -> vector<24x32xf32>
    %69 = arith.addf %66, %68 : vector<24x32xf32>
    %cst_67 = arith.constant 0.000000e+00 : f32
    %70 = vector.broadcast %cst_67 : f32 to vector<24x32xf32>
    %71 = arith.maximumf %69, %70 : vector<24x32xf32>
    %cst_68 = arith.constant dense<0.000000e+00> : vector<16x32xf32>
    %72 = tpu.matmul %9, %71, %cst_68 {dimension_numbers = #tpu.dot_dimension_numbers<[1], [0], [0], [1], [0, 0, 1, 1], [], []>} : vector<16x24xf32>, vector<24x32xf32>, vector<16x32xf32> -> vector<16x32xf32>
    %c0_69 = arith.constant 0 : index
    %c0_70 = arith.constant 0 : index
    %73 = vector.load %arg24[%c0_69, %c0_70] : memref<32x32xf32, #tpu.memory_space<vmem>>, vector<32x32xf32>
    %cst_71 = arith.constant dense<0.000000e+00> : vector<16x32xf32>
    %74 = tpu.matmul %72, %73, %cst_71 {dimension_numbers = #tpu.dot_dimension_numbers<[1], [0], [0], [1], [0, 0, 1, 1], [], []>} : vector<16x32xf32>, vector<32x32xf32>, vector<16x32xf32> -> vector<16x32xf32>
    %75 = arith.addf %61, %74 : vector<16x32xf32>
    %76 = arith.addf %75, %30 : vector<16x32xf32>
    %cst_72 = arith.constant 0.000000e+00 : f32
    %77 = vector.broadcast %cst_72 : f32 to vector<16x32xf32>
    %78 = arith.maximumf %76, %77 : vector<16x32xf32>
    %cst_73 = arith.constant dense<0.000000e+00> : vector<24x32xf32>
    %79 = tpu.matmul %5, %78, %cst_73 {dimension_numbers = #tpu.dot_dimension_numbers<[1], [0], [0], [1], [0, 0, 1, 1], [], []>} : vector<24x16xf32>, vector<16x32xf32>, vector<24x32xf32> -> vector<24x32xf32>
    %cst_74 = arith.constant dense<0.000000e+00> : vector<24x32xf32>
    %80 = tpu.matmul %7, %78, %cst_74 {dimension_numbers = #tpu.dot_dimension_numbers<[1], [0], [0], [1], [0, 0, 1, 1], [], []>} : vector<24x16xf32>, vector<16x32xf32>, vector<24x32xf32> -> vector<24x32xf32>
    %c0_75 = arith.constant 0 : index
    %c0_76 = arith.constant 0 : index
    %81 = vector.load %arg20[%c0_75, %c0_76] : memref<32x32xf32, #tpu.memory_space<vmem>>, vector<32x32xf32>
    %cst_77 = arith.constant dense<0.000000e+00> : vector<24x32xf32>
    %82 = tpu.matmul %79, %81, %cst_77 {dimension_numbers = #tpu.dot_dimension_numbers<[1], [0], [0], [1], [0, 0, 1, 1], [], []>} : vector<24x32xf32>, vector<32x32xf32>, vector<24x32xf32> -> vector<24x32xf32>
    %83 = arith.addf %56, %82 : vector<24x32xf32>
    %c0_78 = arith.constant 0 : index
    %c0_79 = arith.constant 0 : index
    %84 = vector.load %arg21[%c0_78, %c0_79] : memref<32x32xf32, #tpu.memory_space<vmem>>, vector<32x32xf32>
    %cst_80 = arith.constant dense<0.000000e+00> : vector<24x32xf32>
    %85 = tpu.matmul %80, %84, %cst_80 {dimension_numbers = #tpu.dot_dimension_numbers<[1], [0], [0], [1], [0, 0, 1, 1], [], []>} : vector<24x32xf32>, vector<32x32xf32>, vector<24x32xf32> -> vector<24x32xf32>
    %86 = arith.addf %83, %85 : vector<24x32xf32>
    %cst_81 = arith.constant 0.000000e+00 : f32
    %87 = vector.broadcast %cst_81 : f32 to vector<24x32xf32>
    %88 = arith.maximumf %86, %87 : vector<24x32xf32>
    %cst_82 = arith.constant dense<0.000000e+00> : vector<16x32xf32>
    %89 = tpu.matmul %9, %88, %cst_82 {dimension_numbers = #tpu.dot_dimension_numbers<[1], [0], [0], [1], [0, 0, 1, 1], [], []>} : vector<16x24xf32>, vector<24x32xf32>, vector<16x32xf32> -> vector<16x32xf32>
    %c0_83 = arith.constant 0 : index
    %c0_84 = arith.constant 0 : index
    %90 = vector.load %arg24[%c0_83, %c0_84] : memref<32x32xf32, #tpu.memory_space<vmem>>, vector<32x32xf32>
    %cst_85 = arith.constant dense<0.000000e+00> : vector<16x32xf32>
    %91 = tpu.matmul %89, %90, %cst_85 {dimension_numbers = #tpu.dot_dimension_numbers<[1], [0], [0], [1], [0, 0, 1, 1], [], []>} : vector<16x32xf32>, vector<32x32xf32>, vector<16x32xf32> -> vector<16x32xf32>
    %92 = arith.addf %61, %91 : vector<16x32xf32>
    %93 = arith.addf %92, %78 : vector<16x32xf32>
    %cst_86 = arith.constant 0.000000e+00 : f32
    %94 = vector.broadcast %cst_86 : f32 to vector<16x32xf32>
    %95 = arith.maximumf %93, %94 : vector<16x32xf32>
    %96 = vector.extract_strided_slice %95 {offsets = [0, 0], sizes = [12, 32], strides = [1, 1]} : vector<16x32xf32> to vector<12x32xf32>
    %c0_87 = arith.constant 0 : index
    %c0_88 = arith.constant 0 : index
    %97 = vector.load %arg26[%c0_87, %c0_88] : memref<32x32xf32, #tpu.memory_space<vmem>>, vector<32x32xf32>
    %cst_89 = arith.constant dense<0.000000e+00> : vector<12x32xf32>
    %98 = tpu.matmul %96, %97, %cst_89 {dimension_numbers = #tpu.dot_dimension_numbers<[1], [0], [0], [1], [0, 0, 1, 1], [], []>} : vector<12x32xf32>, vector<32x32xf32>, vector<12x32xf32> -> vector<12x32xf32>
    %c0_90 = arith.constant 0 : index
    %c0_91 = arith.constant 0 : index
    %99 = vector.load %arg27[%c0_90, %c0_91] : memref<1x32xf32, #tpu.memory_space<vmem>>, vector<1x32xf32>
    %100 = vector.broadcast %99 : vector<1x32xf32> to vector<12x32xf32>
    %101 = arith.addf %98, %100 : vector<12x32xf32>
    %cst_92 = arith.constant 0.000000e+00 : f32
    %102 = vector.broadcast %cst_92 : f32 to vector<12x32xf32>
    %103 = arith.maximumf %101, %102 : vector<12x32xf32>
    %c0_93 = arith.constant 0 : index
    %c0_94 = arith.constant 0 : index
    %104 = vector.load %arg28[%c0_93, %c0_94] : memref<32x32xf32, #tpu.memory_space<vmem>>, vector<32x32xf32>
    %cst_95 = arith.constant dense<0.000000e+00> : vector<12x32xf32>
    %105 = tpu.matmul %103, %104, %cst_95 {dimension_numbers = #tpu.dot_dimension_numbers<[1], [0], [0], [1], [0, 0, 1, 1], [], []>} : vector<12x32xf32>, vector<32x32xf32>, vector<12x32xf32> -> vector<12x32xf32>
    %c0_96 = arith.constant 0 : index
    %c0_97 = arith.constant 0 : index
    %106 = vector.load %arg29[%c0_96, %c0_97] : memref<1x32xf32, #tpu.memory_space<vmem>>, vector<1x32xf32>
    %107 = vector.broadcast %106 : vector<1x32xf32> to vector<12x32xf32>
    %108 = arith.addf %105, %107 : vector<12x32xf32>
    %cst_98 = arith.constant 0.000000e+00 : f32
    %109 = vector.broadcast %cst_98 : f32 to vector<12x32xf32>
    %110 = arith.maximumf %108, %109 : vector<12x32xf32>
    %c0_99 = arith.constant 0 : index
    %c0_100 = arith.constant 0 : index
    %111 = vector.load %arg30[%c0_99, %c0_100] : memref<32x3xf32, #tpu.memory_space<vmem>>, vector<32x3xf32>
    %cst_101 = arith.constant dense<0.000000e+00> : vector<12x3xf32>
    %112 = tpu.matmul %110, %111, %cst_101 {dimension_numbers = #tpu.dot_dimension_numbers<[1], [0], [0], [1], [0, 0, 1, 1], [], []>} : vector<12x32xf32>, vector<32x3xf32>, vector<12x3xf32> -> vector<12x3xf32>
    %c0_102 = arith.constant 0 : index
    %c0_103 = arith.constant 0 : index
    %113 = vector.load %arg31[%c0_102, %c0_103] : memref<1x3xf32, #tpu.memory_space<vmem>>, vector<1x3xf32>
    %114 = vector.broadcast %113 : vector<1x3xf32> to vector<12x3xf32>
    %115 = arith.addf %112, %114 : vector<12x3xf32>
    %c0_104 = arith.constant 0 : index
    %c0_105 = arith.constant 0 : index
    %c0_106 = arith.constant 0 : index
    %116 = vector.load %arg33[%c0_104, %c0_105, %c0_106] : memref<1x12x3xf32, #tpu.memory_space<vmem>>, vector<1x12x3xf32>
    %117 = vector.shape_cast %116 : vector<1x12x3xf32> to vector<12x3xf32>
    %118 = vector.shape_cast %115 : vector<12x3xf32> to vector<1x12x3xf32>
    tpu.vector_store %arg33[%c0_104, %c0_105, %c0_106], %118 {strides = array<i32>} : memref<1x12x3xf32, #tpu.memory_space<vmem>>, vector<1x12x3xf32>,
    %c0_107 = arith.constant 0 : index
    %c0_108 = arith.constant 0 : index
    %c0_109 = arith.constant 0 : index
    %119 = vector.load %arg6[%c0_107, %c0_108, %c0_109] : memref<1x12x3xf32, #tpu.memory_space<vmem>>, vector<1x12x3xf32>
    %120 = vector.shape_cast %119 : vector<1x12x3xf32> to vector<12x3xf32>
    %cst_110 = arith.constant -1.000000e+02 : f32
    %cst_111 = arith.constant 1.000000e+02 : f32
    %121 = vector.broadcast %cst_110 : f32 to vector<12x3xf32>
    %122 = arith.maximumf %121, %115 : vector<12x3xf32>
    %123 = vector.broadcast %cst_111 : f32 to vector<12x3xf32>
    %124 = arith.minimumf %123, %122 : vector<12x3xf32>
    %125 = arith.addf %120, %124 : vector<12x3xf32>
    %c0_112 = arith.constant 0 : index
    %c0_113 = arith.constant 0 : index
    %c0_114 = arith.constant 0 : index
    %126 = vector.load %arg32[%c0_112, %c0_113, %c0_114] : memref<1x12x3xf32, #tpu.memory_space<vmem>>, vector<1x12x3xf32>
    %127 = vector.shape_cast %126 : vector<1x12x3xf32> to vector<12x3xf32>
    %128 = vector.shape_cast %125 : vector<12x3xf32> to vector<1x12x3xf32>
    tpu.vector_store %arg32[%c0_112, %c0_113, %c0_114], %128 {strides = array<i32>} : memref<1x12x3xf32, #tpu.memory_space<vmem>>, vector<1x12x3xf32>,
    return
  }
  func.func @transform_0(%arg0: i32) -> (i32, i32, i32) {
    %c0_i32 = arith.constant 0 : i32
    %c0_i32_0 = arith.constant 0 : i32
    %c0_i32_1 = arith.constant 0 : i32
    return %arg0, %c0_i32, %c0_i32_0 : i32, i32, i32
  }
  func.func @transform_1(%arg0: i32) -> (i32, i32, i32) {
    %c0_i32 = arith.constant 0 : i32
    %c0_i32_0 = arith.constant 0 : i32
    %c0_i32_1 = arith.constant 0 : i32
    return %arg0, %c0_i32, %c0_i32_0 : i32, i32, i32
  }
  func.func @transform_2(%arg0: i32) -> (i32, i32, i32) {
    %c0_i32 = arith.constant 0 : i32
    %c0_i32_0 = arith.constant 0 : i32
    %c0_i32_1 = arith.constant 0 : i32
    return %arg0, %c0_i32, %c0_i32_0 : i32, i32, i32
  }
  func.func @transform_3(%arg0: i32) -> (i32, i32, i32) {
    %c0_i32 = arith.constant 0 : i32
    %c0_i32_0 = arith.constant 0 : i32
    %c0_i32_1 = arith.constant 0 : i32
    return %arg0, %c0_i32, %c0_i32_0 : i32, i32, i32
  }
  func.func @transform_4(%arg0: i32) -> (i32, i32, i32) {
    %c0_i32 = arith.constant 0 : i32
    %c0_i32_0 = arith.constant 0 : i32
    %c0_i32_1 = arith.constant 0 : i32
    return %arg0, %c0_i32, %c0_i32_0 : i32, i32, i32
  }
  func.func @transform_5(%arg0: i32) -> (i32, i32, i32) {
    %c0_i32 = arith.constant 0 : i32
    %c0_i32_0 = arith.constant 0 : i32
    %c0_i32_1 = arith.constant 0 : i32
    return %arg0, %c0_i32, %c0_i32_0 : i32, i32, i32
  }
  func.func @transform_6(%arg0: i32) -> (i32, i32) {
    %c0_i32 = arith.constant 0 : i32
    %c0_i32_0 = arith.constant 0 : i32
    %c0_i32_1 = arith.constant 0 : i32
    return %c0_i32, %c0_i32_0 : i32, i32
  }
  func.func @transform_7(%arg0: i32) -> (i32, i32) {
    %c0_i32 = arith.constant 0 : i32
    %c0_i32_0 = arith.constant 0 : i32
    %c0_i32_1 = arith.constant 0 : i32
    return %c0_i32, %c0_i32_0 : i32, i32
  }
  func.func @transform_8(%arg0: i32) -> (i32, i32) {
    %c0_i32 = arith.constant 0 : i32
    %c0_i32_0 = arith.constant 0 : i32
    %c0_i32_1 = arith.constant 0 : i32
    return %c0_i32, %c0_i32_0 : i32, i32
  }
  func.func @transform_9(%arg0: i32) -> (i32, i32) {
    %c0_i32 = arith.constant 0 : i32
    %c0_i32_0 = arith.constant 0 : i32
    %c0_i32_1 = arith.constant 0 : i32
    return %c0_i32, %c0_i32_0 : i32, i32
  }
  func.func @transform_10(%arg0: i32) -> (i32, i32) {
    %c0_i32 = arith.constant 0 : i32
    %c0_i32_0 = arith.constant 0 : i32
    %c0_i32_1 = arith.constant 0 : i32
    return %c0_i32, %c0_i32_0 : i32, i32
  }
  func.func @transform_11(%arg0: i32) -> (i32, i32) {
    %c0_i32 = arith.constant 0 : i32
    %c0_i32_0 = arith.constant 0 : i32
    %c0_i32_1 = arith.constant 0 : i32
    return %c0_i32, %c0_i32_0 : i32, i32
  }
  func.func @transform_12(%arg0: i32) -> (i32, i32) {
    %c0_i32 = arith.constant 0 : i32
    %c0_i32_0 = arith.constant 0 : i32
    %c0_i32_1 = arith.constant 0 : i32
    return %c0_i32, %c0_i32_0 : i32, i32
  }
  func.func @transform_13(%arg0: i32) -> (i32, i32) {
    %c0_i32 = arith.constant 0 : i32
    %c0_i32_0 = arith.constant 0 : i32
    %c0_i32_1 = arith.constant 0 : i32
    return %c0_i32, %c0_i32_0 : i32, i32
  }
  func.func @transform_14(%arg0: i32) -> (i32, i32) {
    %c0_i32 = arith.constant 0 : i32
    %c0_i32_0 = arith.constant 0 : i32
    %c0_i32_1 = arith.constant 0 : i32
    return %c0_i32, %c0_i32_0 : i32, i32
  }
  func.func @transform_15(%arg0: i32) -> (i32, i32) {
    %c0_i32 = arith.constant 0 : i32
    %c0_i32_0 = arith.constant 0 : i32
    %c0_i32_1 = arith.constant 0 : i32
    return %c0_i32, %c0_i32_0 : i32, i32
  }
  func.func @transform_16(%arg0: i32) -> (i32, i32) {
    %c0_i32 = arith.constant 0 : i32
    %c0_i32_0 = arith.constant 0 : i32
    %c0_i32_1 = arith.constant 0 : i32
    return %c0_i32, %c0_i32_0 : i32, i32
  }
  func.func @transform_17(%arg0: i32) -> (i32, i32) {
    %c0_i32 = arith.constant 0 : i32
    %c0_i32_0 = arith.constant 0 : i32
    %c0_i32_1 = arith.constant 0 : i32
    return %c0_i32, %c0_i32_0 : i32, i32
  }
  func.func @transform_18(%arg0: i32) -> (i32, i32) {
    %c0_i32 = arith.constant 0 : i32
    %c0_i32_0 = arith.constant 0 : i32
    %c0_i32_1 = arith.constant 0 : i32
    return %c0_i32, %c0_i32_0 : i32, i32
  }
  func.func @transform_19(%arg0: i32) -> (i32, i32) {
    %c0_i32 = arith.constant 0 : i32
    %c0_i32_0 = arith.constant 0 : i32
    %c0_i32_1 = arith.constant 0 : i32
    return %c0_i32, %c0_i32_0 : i32, i32
  }
  func.func @transform_20(%arg0: i32) -> (i32, i32) {
    %c0_i32 = arith.constant 0 : i32
    %c0_i32_0 = arith.constant 0 : i32
    %c0_i32_1 = arith.constant 0 : i32
    return %c0_i32, %c0_i32_0 : i32, i32
  }
  func.func @transform_21(%arg0: i32) -> (i32, i32) {
    %c0_i32 = arith.constant 0 : i32
    %c0_i32_0 = arith.constant 0 : i32
    %c0_i32_1 = arith.constant 0 : i32
    return %c0_i32, %c0_i32_0 : i32, i32
  }
  func.func @transform_22(%arg0: i32) -> (i32, i32) {
    %c0_i32 = arith.constant 0 : i32
    %c0_i32_0 = arith.constant 0 : i32
    %c0_i32_1 = arith.constant 0 : i32
    return %c0_i32, %c0_i32_0 : i32, i32
  }
  func.func @transform_23(%arg0: i32) -> (i32, i32) {
    %c0_i32 = arith.constant 0 : i32
    %c0_i32_0 = arith.constant 0 : i32
    %c0_i32_1 = arith.constant 0 : i32
    return %c0_i32, %c0_i32_0 : i32, i32
  }
  func.func @transform_24(%arg0: i32) -> (i32, i32) {
    %c0_i32 = arith.constant 0 : i32
    %c0_i32_0 = arith.constant 0 : i32
    %c0_i32_1 = arith.constant 0 : i32
    return %c0_i32, %c0_i32_0 : i32, i32
  }
  func.func @transform_25(%arg0: i32) -> (i32, i32) {
    %c0_i32 = arith.constant 0 : i32
    %c0_i32_0 = arith.constant 0 : i32
    %c0_i32_1 = arith.constant 0 : i32
    return %c0_i32, %c0_i32_0 : i32, i32
  }
  func.func @transform_26(%arg0: i32) -> (i32, i32) {
    %c0_i32 = arith.constant 0 : i32
    %c0_i32_0 = arith.constant 0 : i32
    %c0_i32_1 = arith.constant 0 : i32
    return %c0_i32, %c0_i32_0 : i32, i32
  }
  func.func @transform_27(%arg0: i32) -> (i32, i32) {
    %c0_i32 = arith.constant 0 : i32
    %c0_i32_0 = arith.constant 0 : i32
    %c0_i32_1 = arith.constant 0 : i32
    return %c0_i32, %c0_i32_0 : i32, i32
  }
  func.func @transform_28(%arg0: i32) -> (i32, i32) {
    %c0_i32 = arith.constant 0 : i32
    %c0_i32_0 = arith.constant 0 : i32
    %c0_i32_1 = arith.constant 0 : i32
    return %c0_i32, %c0_i32_0 : i32, i32
  }
  func.func @transform_29(%arg0: i32) -> (i32, i32) {
    %c0_i32 = arith.constant 0 : i32
    %c0_i32_0 = arith.constant 0 : i32
    %c0_i32_1 = arith.constant 0 : i32
    return %c0_i32, %c0_i32_0 : i32, i32
  }
  func.func @transform_30(%arg0: i32) -> (i32, i32) {
    %c0_i32 = arith.constant 0 : i32
    %c0_i32_0 = arith.constant 0 : i32
    %c0_i32_1 = arith.constant 0 : i32
    return %c0_i32, %c0_i32_0 : i32, i32
  }
  func.func @transform_31(%arg0: i32) -> (i32, i32, i32) {
    %c0_i32 = arith.constant 0 : i32
    %c0_i32_0 = arith.constant 0 : i32
    %c0_i32_1 = arith.constant 0 : i32
    return %arg0, %c0_i32, %c0_i32_0 : i32, i32, i32
  }
  func.func @transform_32(%arg0: i32) -> (i32, i32, i32) {
    %c0_i32 = arith.constant 0 : i32
    %c0_i32_0 = arith.constant 0 : i32
    %c0_i32_1 = arith.constant 0 : i32
    return %arg0, %c0_i32, %c0_i32_0 : i32, i32, i32
  }
}

</mosaic_0001>

<llo_original>
// kernel: tpu_custom_call.1
$region0: #{tpu_custom_call.1}
  #allocation0 [shape = 'u32[]', space=smem, size = 0x4, offset = 0x4, fixed_abs, tag = 'smem constant byte address 0x4 - core index']
  #allocation1 [shape = 'u32[144,128]{1,0:T(1,128)}', space=vmem, size = 0x12000, scoped, tag = 'internal scratch']
  %s0 = inlined_call_operand.smem [shape: u32[33], index: -1, kind: input, shape index: {}]
  %s1 = sld [smem:[%s0]]
  %s2 = scalar_lea.smem %s0, 1
  %s3 = sld [smem:[%s2]]
  %s4 = scalar_lea.smem %s0, 2
  %s5 = sld [smem:[%s4]]
  %s6 = scalar_lea.smem %s0, 3
  %s7 = sld [smem:[%s6]]
  %s8 = scalar_lea.smem %s0, 4
  %s9 = sld [smem:[%s8]]
  %s10 = scalar_lea.smem %s0, 5
  %s11 = sld [smem:[%s10]]
  %s12 = scalar_lea.smem %s0, 6
  %s13 = sld [smem:[%s12]]
  %s14 = scalar_lea.smem %s0, 7
  %s15 = sld [smem:[%s14]]
  %s16 = scalar_lea.smem %s0, 8
  %s17 = sld [smem:[%s16]]
  %s18 = scalar_lea.smem %s0, 9
  %s19 = sld [smem:[%s18]]
  %s20 = scalar_lea.smem %s0, 10
  %s21 = sld [smem:[%s20]]
  %s22 = scalar_lea.smem %s0, 11
  %s23 = sld [smem:[%s22]]
  %s24 = scalar_lea.smem %s0, 12
  %s25 = sld [smem:[%s24]]
  %s26 = scalar_lea.smem %s0, 13
  %s27 = sld [smem:[%s26]]
  %s28 = scalar_lea.smem %s0, 14
  %s29 = sld [smem:[%s28]]
  %s30 = scalar_lea.smem %s0, 15
  %s31 = sld [smem:[%s30]]
  %s32 = scalar_lea.smem %s0, 16
  %s33 = sld [smem:[%s32]]
  %s34 = scalar_lea.smem %s0, 17
  %s35 = sld [smem:[%s34]]
  %s36 = scalar_lea.smem %s0, 18
  %s37 = sld [smem:[%s36]]
  %s38 = scalar_lea.smem %s0, 19
  %s39 = sld [smem:[%s38]]
  %s40 = scalar_lea.smem %s0, 20
  %s41 = sld [smem:[%s40]]
  %s42 = scalar_lea.smem %s0, 21
  %s43 = sld [smem:[%s42]]
  %s44 = scalar_lea.smem %s0, 22
  %s45 = sld [smem:[%s44]]
  %s46 = scalar_lea.smem %s0, 23
  %s47 = sld [smem:[%s46]]
  %s48 = scalar_lea.smem %s0, 24
  %s49 = sld [smem:[%s48]]
  %s50 = scalar_lea.smem %s0, 25
  %s51 = sld [smem:[%s50]]
  %s52 = scalar_lea.smem %s0, 26
  %s53 = sld [smem:[%s52]]
  %s54 = scalar_lea.smem %s0, 27
  %s55 = sld [smem:[%s54]]
  %s56 = scalar_lea.smem %s0, 28
  %s57 = sld [smem:[%s56]]
  %s58 = scalar_lea.smem %s0, 29
  %s59 = sld [smem:[%s58]]
  %s60 = scalar_lea.smem %s0, 30
  %s61 = sld [smem:[%s60]]
  %s62 = scalar_lea.smem %s0, 31
  %s63 = sld [smem:[%s62]]
  %s64 = scalar_lea.smem %s0, 32
  %s65 = sld [smem:[%s64]]
  %66 = xla_tuple %s63, %s65
  %s67 = sld [smem:[#allocation0]]
  $region229: #{tpu_custom_call.1} parent=0
    _
  %s69 = ssub.s32 1, %s67
  %s70 = scalar_select 0, %s69, %s67
  $region1: #{tpu_custom_call.1} parent=0
    #allocation2 [shape = 'u8[12288]{0}', space=vmem, size = 0x3000, scoped, tag = 'input window, operand 6, single buffered']
    #allocation3 [shape = 's32[2]{0}', space=sflag, size = 0x8, scoped, tag = 'scoped memory for tpu_custom_call.1']
    #allocation4 [shape = 'u8[512]{0}', space=vmem, size = 0x400, scoped, tag = 'input window, operand 7, single buffered']
    #allocation5 [shape = 's32[1]{0}', space=sflag, size = 0x4, scoped, tag = 'scoped memory for tpu_custom_call.1']
    #allocation6 [shape = 'u8[512]{0}', space=vmem, size = 0x400, scoped, tag = 'input window, operand 9, single buffered']
    #allocation7 [shape = 'u8[512]{0}', space=vmem, size = 0x400, scoped, tag = 'input window, operand 13, single buffered']
    #allocation8 [shape = 's32[1]{0}', space=sflag, size = 0x4, scoped, tag = 'scoped memory for tpu_custom_call.1']
    #allocation9 [shape = 'u8[512]{0}', space=vmem, size = 0x400, scoped, tag = 'input window, operand 15, single buffered']
    #allocation10 [shape = 'u8[512]{0}', space=vmem, size = 0x400, scoped, tag = 'input window, operand 17, single buffered']
    #allocation11 [shape = 's32[1]{0}', space=sflag, size = 0x4, scoped, tag = 'scoped memory for tpu_custom_call.1']
    #allocation12 [shape = 'u8[16384]{0}', space=vmem, size = 0x4000, scoped, tag = 'input window, operand 18, single buffered']
    #allocation13 [shape = 'u8[16384]{0}', space=vmem, size = 0x4000, scoped, tag = 'input window, operand 19, single buffered']
    #allocation14 [shape = 's32[1]{0}', space=sflag, size = 0x4, scoped, tag = 'scoped memory for tpu_custom_call.1']
    #allocation15 [shape = 'u8[16384]{0}', space=vmem, size = 0x4000, scoped, tag = 'input window, operand 20, single buffered']
    #allocation16 [shape = 'u8[512]{0}', space=vmem, size = 0x400, scoped, tag = 'input window, operand 21, single buffered']
    #allocation17 [shape = 's32[1]{0}', space=sflag, size = 0x4, scoped, tag = 'scoped memory for tpu_custom_call.1']
    #allocation18 [shape = 'u8[16384]{0}', space=vmem, size = 0x4000, scoped, tag = 'input window, operand 22, single buffered']
    #allocation19 [shape = 'u8[16384]{0}', space=vmem, size = 0x4000, scoped, tag = 'input window, operand 23, single buffered']
    #allocation20 [shape = 's32[1]{0}', space=sflag, size = 0x4, scoped, tag = 'scoped memory for tpu_custom_call.1']
    #allocation21 [shape = 'u8[512]{0}', space=vmem, size = 0x400, scoped, tag = 'input window, operand 24, single buffered']
    #allocation22 [shape = 'u8[16384]{0}', space=vmem, size = 0x4000, scoped, tag = 'input window, operand 25, single buffered']
    #allocation23 [shape = 's32[1]{0}', space=sflag, size = 0x4, scoped, tag = 'scoped memory for tpu_custom_call.1']
    #allocation24 [shape = 'u8[512]{0}', space=vmem, size = 0x400, scoped, tag = 'input window, operand 26, single buffered']
    #allocation25 [shape = 'u8[512]{0}', space=vmem, size = 0x400, scoped, tag = 'input window, operand 28, single buffered']
    #allocation26 [shape = 's32[1]{0}', space=sflag, size = 0x4, scoped, tag = 'scoped memory for tpu_custom_call.1']
    %71 = vsyncpa [#allocation3], 0
    %72 = vsyncpa [#allocation5], 0
    %73 = vsyncpa [#allocation8], 0
    %74 = vsyncpa [#allocation11], 0
    %75 = vsyncpa [#allocation14], 0
    %76 = vsyncpa [#allocation17], 0
    %77 = vsyncpa [#allocation20], 0
    %78 = vsyncpa [#allocation23], 0
    %79 = vsyncpa [#allocation26], 0
    loop: start=0, step=1, limit=4
    $region2: #{tpu_custom_call.1} parent=1 // loop_pre_header
      _
    $region3: #{tpu_custom_call.1} parent=1 // loop_header
      %s81 = sphi 0, %s85
      %p82 = scmp.ge.s32.totalorder %s81, 4
      %s91 = sphi 0, %s93
      %s94 = sphi 0, %s91
      %s95 = sphi 0, %s94
      %s111 = sphi 0, %s95
      %s117 = sphi 0, %s119
      %s120 = sphi 0, %s117
      %s121 = sphi 0, %s120
      %s137 = sphi 0, %s121
      %s143 = sphi 0, %s145
      %s146 = sphi 0, %s143
      %s147 = sphi 0, %s146
      %s163 = sphi 0, %s147
      %s169 = sphi 0, %s171
      %s172 = sphi 0, %s169
      %s173 = sphi 0, %s172
      %s189 = sphi 0, %s173
      %s195 = sphi 0, %s197
      %s198 = sphi 0, %s195
      %s199 = sphi 0, %s198
      %s215 = sphi 0, %s199
      %s221 = sphi 0, %s223
      %s224 = sphi 0, %s221
      %s225 = sphi 0, %s224
      %s241 = sphi 0, %s225
      %s245 = sphi 0, %s245
      %s247 = sphi 0, %s245
      %s248 = sphi 0, %s247
      %s262 = sphi 0, %s248
      %s266 = sphi 0, %s266
      %s268 = sphi 0, %s266
      %s269 = sphi 0, %s268
      %s283 = sphi 0, %s269
      %s287 = sphi 0, %s287
      %s289 = sphi 0, %s287
      %s290 = sphi 0, %s289
      %s304 = sphi 0, %s290
      %s308 = sphi 0, %s308
      %s310 = sphi 0, %s308
      %s311 = sphi 0, %s310
      %s325 = sphi 0, %s311
      %s329 = sphi 0, %s329
      %s331 = sphi 0, %s329
      %s332 = sphi 0, %s331
      %s346 = sphi 0, %s332
      %s350 = sphi 0, %s350
      %s352 = sphi 0, %s350
      %s353 = sphi 0, %s352
      %s367 = sphi 0, %s353
      %s371 = sphi 0, %s371
      %s373 = sphi 0, %s371
      %s374 = sphi 0, %s373
      %s388 = sphi 0, %s374
      %s392 = sphi 0, %s392
      %s394 = sphi 0, %s392
      %s395 = sphi 0, %s394
      %s409 = sphi 0, %s395
      %s413 = sphi 0, %s413
      %s415 = sphi 0, %s413
      %s416 = sphi 0, %s415
      %s430 = sphi 0, %s416
      %s434 = sphi 0, %s434
      %s436 = sphi 0, %s434
      %s437 = sphi 0, %s436
      %s451 = sphi 0, %s437
      %s455 = sphi 0, %s455
      %s457 = sphi 0, %s455
      %s458 = sphi 0, %s457
      %s472 = sphi 0, %s458
      %s476 = sphi 0, %s476
      %s478 = sphi 0, %s476
      %s479 = sphi 0, %s478
      %s493 = sphi 0, %s479
      %s497 = sphi 0, %s497
      %s499 = sphi 0, %s497
      %s500 = sphi 0, %s499
      %s514 = sphi 0, %s500
      %s518 = sphi 0, %s518
      %s520 = sphi 0, %s518
      %s521 = sphi 0, %s520
      %s535 = sphi 0, %s521
      %s539 = sphi 0, %s539
      %s541 = sphi 0, %s539
      %s542 = sphi 0, %s541
      %s556 = sphi 0, %s542
      %s560 = sphi 0, %s560
      %s562 = sphi 0, %s560
      %s563 = sphi 0, %s562
      %s577 = sphi 0, %s563
      %s581 = sphi 0, %s581
      %s583 = sphi 0, %s581
      %s584 = sphi 0, %s583
      %s598 = sphi 0, %s584
      %s602 = sphi 0, %s602
      %s604 = sphi 0, %s602
      %s605 = sphi 0, %s604
      %s619 = sphi 0, %s605
      %s623 = sphi 0, %s623
      %s625 = sphi 0, %s623
      %s626 = sphi 0, %s625
      %s640 = sphi 0, %s626
      %s644 = sphi 0, %s644
      %s646 = sphi 0, %s644
      %s647 = sphi 0, %s646
      %s661 = sphi 0, %s647
      %s665 = sphi 0, %s665
      %s667 = sphi 0, %s665
      %s668 = sphi 0, %s667
      %s682 = sphi 0, %s668
      %s686 = sphi 0, %s686
      %s688 = sphi 0, %s686
      %s689 = sphi 0, %s688
      %s703 = sphi 0, %s689
      %s707 = sphi 0, %s707
      %s709 = sphi 0, %s707
      %s710 = sphi 0, %s709
      %s724 = sphi 0, %s710
      %s728 = sphi 0, %s728
      %s730 = sphi 0, %s728
      %s731 = sphi 0, %s730
      %s745 = sphi 0, %s731
      %s749 = sphi 0, %s749
      %s751 = sphi 0, %s749
      %s752 = sphi 0, %s751
      %s766 = sphi 0, %s752
      %s772 = sphi 0, %s774
      %s775 = sphi 0, %s772
      %s776 = sphi 0, %s775
      %s792 = sphi 0, %s776
      %s798 = sphi 0, %s800
      %s801 = sphi 0, %s798
      %s802 = sphi 0, %s801
      %s818 = sphi 0, %s802
    $region4: #{tpu_custom_call.1} parent=1 // loop_header_branch
      %84 = sbr.rel (%p82) target = $region8
    $region5: #{tpu_custom_call.1} parent=1 // loop_body
      %s86 = ssub.s32 %s81, 1
      %s87 = ssub.s32 %s81, 2
      %s88 = sadd.s32 %s81, 1
      %s89 = ssub.s32 %s81, %s88
      %p90 = scmp.eq.s32.totalorder %s89, 0
      %s92 = sadd.s32 %s91, 1
      %s93 = scalar_select %p90, %s91, %s92
      %p96 = pneg %p90
      %p97 = scmp.eq.s32.totalorder %s81, 1
      %p98 = por %p96, %p97
      %p99 = scmp.ne.s32.totalorder %s91, %s94
      %p100 = scmp.eq.s32.totalorder %s81, 0
      %p101 = por %p99, %p100
      %p102 = scmp.ne.s32.totalorder %s91, %s94
      %p103 = scmp.eq.s32.totalorder %s86, 1
      %p104 = por %p102, %p103
      %p105 = scmp.ne.s32.totalorder %s94, %s95
      %p106 = scmp.eq.s32.totalorder %s86, 0
      %p107 = por %p105, %p106
      %p108 = scmp.ne.s32.totalorder %s94, %s95
      %p109 = scmp.eq.s32.totalorder %s87, 1
      %p110 = por %p108, %p109
      %p112 = scmp.ne.s32.totalorder %s95, %s111
      %p113 = scmp.eq.s32.totalorder %s87, 0
      %p114 = por %p112, %p113
      %s115 = ssub.s32 %s81, %s88
      %p116 = scmp.eq.s32.totalorder %s115, 0
      %s118 = sadd.s32 %s117, 1
      %s119 = scalar_select %p116, %s117, %s118
      %p122 = pneg %p116
      %p123 = scmp.eq.s32.totalorder %s81, 1
      %p124 = por %p122, %p123
      %p125 = scmp.ne.s32.totalorder %s117, %s120
      %p126 = scmp.eq.s32.totalorder %s81, 0
      %p127 = por %p125, %p126
      %p128 = scmp.ne.s32.totalorder %s117, %s120
      %p129 = scmp.eq.s32.totalorder %s86, 1
      %p130 = por %p128, %p129
      %p131 = scmp.ne.s32.totalorder %s120, %s121
      %p132 = scmp.eq.s32.totalorder %s86, 0
      %p133 = por %p131, %p132
      %p134 = scmp.ne.s32.totalorder %s120, %s121
      %p135 = scmp.eq.s32.totalorder %s87, 1
      %p136 = por %p134, %p135
      %p138 = scmp.ne.s32.totalorder %s121, %s137
      %p139 = scmp.eq.s32.totalorder %s87, 0
      %p140 = por %p138, %p139
      %s141 = ssub.s32 %s81, %s88
      %p142 = scmp.eq.s32.totalorder %s141, 0
      %s144 = sadd.s32 %s143, 1
      %s145 = scalar_select %p142, %s143, %s144
      %p148 = pneg %p142
      %p149 = scmp.eq.s32.totalorder %s81, 1
      %p150 = por %p148, %p149
      %p151 = scmp.ne.s32.totalorder %s143, %s146
      %p152 = scmp.eq.s32.totalorder %s81, 0
      %p153 = por %p151, %p152
      %p154 = scmp.ne.s32.totalorder %s143, %s146
      %p155 = scmp.eq.s32.totalorder %s86, 1
      %p156 = por %p154, %p155
      %p157 = scmp.ne.s32.totalorder %s146, %s147
      %p158 = scmp.eq.s32.totalorder %s86, 0
      %p159 = por %p157, %p158
      %p160 = scmp.ne.s32.totalorder %s146, %s147
      %p161 = scmp.eq.s32.totalorder %s87, 1
      %p162 = por %p160, %p161
      %p164 = scmp.ne.s32.totalorder %s147, %s163
      %p165 = scmp.eq.s32.totalorder %s87, 0
      %p166 = por %p164, %p165
      %s167 = ssub.s32 %s81, %s88
      %p168 = scmp.eq.s32.totalorder %s167, 0
      %s170 = sadd.s32 %s169, 1
      %s171 = scalar_select %p168, %s169, %s170
      %p174 = pneg %p168
      %p175 = scmp.eq.s32.totalorder %s81, 1
      %p176 = por %p174, %p175
      %p177 = scmp.ne.s32.totalorder %s169, %s172
      %p178 = scmp.eq.s32.totalorder %s81, 0
      %p179 = por %p177, %p178
      %p180 = scmp.ne.s32.totalorder %s169, %s172
      %p181 = scmp.eq.s32.totalorder %s86, 1
      %p182 = por %p180, %p181
      %p183 = scmp.ne.s32.totalorder %s172, %s173
      %p184 = scmp.eq.s32.totalorder %s86, 0
      %p185 = por %p183, %p184
      %p186 = scmp.ne.s32.totalorder %s172, %s173
      %p187 = scmp.eq.s32.totalorder %s87, 1
      %p188 = por %p186, %p187
      %p190 = scmp.ne.s32.totalorder %s173, %s189
      %p191 = scmp.eq.s32.totalorder %s87, 0
      %p192 = por %p190, %p191
      %s193 = ssub.s32 %s81, %s88
      %p194 = scmp.eq.s32.totalorder %s193, 0
      %s196 = sadd.s32 %s195, 1
      %s197 = scalar_select %p194, %s195, %s196
      %p200 = pneg %p194
      %p201 = scmp.eq.s32.totalorder %s81, 1
      %p202 = por %p200, %p201
      %p203 = scmp.ne.s32.totalorder %s195, %s198
      %p204 = scmp.eq.s32.totalorder %s81, 0
      %p205 = por %p203, %p204
      %p206 = scmp.ne.s32.totalorder %s195, %s198
      %p207 = scmp.eq.s32.totalorder %s86, 1
      %p208 = por %p206, %p207
      %p209 = scmp.ne.s32.totalorder %s198, %s199
      %p210 = scmp.eq.s32.totalorder %s86, 0
      %p211 = por %p209, %p210
      %p212 = scmp.ne.s32.totalorder %s198, %s199
      %p213 = scmp.eq.s32.totalorder %s87, 1
      %p214 = por %p212, %p213
      %p216 = scmp.ne.s32.totalorder %s199, %s215
      %p217 = scmp.eq.s32.totalorder %s87, 0
      %p218 = por %p216, %p217
      %s219 = ssub.s32 %s81, %s88
      %p220 = scmp.eq.s32.totalorder %s219, 0
      %s222 = sadd.s32 %s221, 1
      %s223 = scalar_select %p220, %s221, %s222
      %p226 = pneg %p220
      %p227 = scmp.eq.s32.totalorder %s81, 1
      %p228 = por %p226, %p227
      %p229 = scmp.ne.s32.totalorder %s221, %s224
      %p230 = scmp.eq.s32.totalorder %s81, 0
      %p231 = por %p229, %p230
      %p232 = scmp.ne.s32.totalorder %s221, %s224
      %p233 = scmp.eq.s32.totalorder %s86, 1
      %p234 = por %p232, %p233
      %p235 = scmp.ne.s32.totalorder %s224, %s225
      %p236 = scmp.eq.s32.totalorder %s86, 0
      %p237 = por %p235, %p236
      %p238 = scmp.ne.s32.totalorder %s224, %s225
      %p239 = scmp.eq.s32.totalorder %s87, 1
      %p240 = por %p238, %p239
      %p242 = scmp.ne.s32.totalorder %s225, %s241
      %p243 = scmp.eq.s32.totalorder %s87, 0
      %p244 = por %p242, %p243
      %s246 = sadd.s32 %s245, 1
      %p249 = scmp.eq.s32.totalorder %s81, 1
      %p250 = scmp.ne.s32.totalorder %s245, %s247
      %p251 = scmp.eq.s32.totalorder %s81, 0
      %p252 = por %p250, %p251
      %p253 = scmp.ne.s32.totalorder %s245, %s247
      %p254 = scmp.eq.s32.totalorder %s86, 1
      %p255 = por %p253, %p254
      %p256 = scmp.ne.s32.totalorder %s247, %s248
      %p257 = scmp.eq.s32.totalorder %s86, 0
      %p258 = por %p256, %p257
      %p259 = scmp.ne.s32.totalorder %s247, %s248
      %p260 = scmp.eq.s32.totalorder %s87, 1
      %p261 = por %p259, %p260
      %p263 = scmp.ne.s32.totalorder %s248, %s262
      %p264 = scmp.eq.s32.totalorder %s87, 0
      %p265 = por %p263, %p264
      %s267 = sadd.s32 %s266, 1
      %p270 = scmp.eq.s32.totalorder %s81, 1
      %p271 = scmp.ne.s32.totalorder %s266, %s268
      %p272 = scmp.eq.s32.totalorder %s81, 0
      %p273 = por %p271, %p272
      %p274 = scmp.ne.s32.totalorder %s266, %s268
      %p275 = scmp.eq.s32.totalorder %s86, 1
      %p276 = por %p274, %p275
      %p277 = scmp.ne.s32.totalorder %s268, %s269
      %p278 = scmp.eq.s32.totalorder %s86, 0
      %p279 = por %p277, %p278
      %p280 = scmp.ne.s32.totalorder %s268, %s269
      %p281 = scmp.eq.s32.totalorder %s87, 1
      %p282 = por %p280, %p281
      %p284 = scmp.ne.s32.totalorder %s269, %s283
      %p285 = scmp.eq.s32.totalorder %s87, 0
      %p286 = por %p284, %p285
      %s288 = sadd.s32 %s287, 1
      %p291 = scmp.eq.s32.totalorder %s81, 1
      %p292 = scmp.ne.s32.totalorder %s287, %s289
      %p293 = scmp.eq.s32.totalorder %s81, 0
      %p294 = por %p292, %p293
      %p295 = scmp.ne.s32.totalorder %s287, %s289
      %p296 = scmp.eq.s32.totalorder %s86, 1
      %p297 = por %p295, %p296
      %p298 = scmp.ne.s32.totalorder %s289, %s290
      %p299 = scmp.eq.s32.totalorder %s86, 0
      %p300 = por %p298, %p299
      %p301 = scmp.ne.s32.totalorder %s289, %s290
      %p302 = scmp.eq.s32.totalorder %s87, 1
      %p303 = por %p301, %p302
      %p305 = scmp.ne.s32.totalorder %s290, %s304
      %p306 = scmp.eq.s32.totalorder %s87, 0
      %p307 = por %p305, %p306
      %s309 = sadd.s32 %s308, 1
      %p312 = scmp.eq.s32.totalorder %s81, 1
      %p313 = scmp.ne.s32.totalorder %s308, %s310
      %p314 = scmp.eq.s32.totalorder %s81, 0
      %p315 = por %p313, %p314
      %p316 = scmp.ne.s32.totalorder %s308, %s310
      %p317 = scmp.eq.s32.totalorder %s86, 1
      %p318 = por %p316, %p317
      %p319 = scmp.ne.s32.totalorder %s310, %s311
      %p320 = scmp.eq.s32.totalorder %s86, 0
      %p321 = por %p319, %p320
      %p322 = scmp.ne.s32.totalorder %s310, %s311
      %p323 = scmp.eq.s32.totalorder %s87, 1
      %p324 = por %p322, %p323
      %p326 = scmp.ne.s32.totalorder %s311, %s325
      %p327 = scmp.eq.s32.totalorder %s87, 0
      %p328 = por %p326, %p327
      %s330 = sadd.s32 %s329, 1
      %p333 = scmp.eq.s32.totalorder %s81, 1
      %p334 = scmp.ne.s32.totalorder %s329, %s331
      %p335 = scmp.eq.s32.totalorder %s81, 0
      %p336 = por %p334, %p335
      %p337 = scmp.ne.s32.totalorder %s329, %s331
      %p338 = scmp.eq.s32.totalorder %s86, 1
      %p339 = por %p337, %p338
      %p340 = scmp.ne.s32.totalorder %s331, %s332
      %p341 = scmp.eq.s32.totalorder %s86, 0
      %p342 = por %p340, %p341
      %p343 = scmp.ne.s32.totalorder %s331, %s332
      %p344 = scmp.eq.s32.totalorder %s87, 1
      %p345 = por %p343, %p344
      %p347 = scmp.ne.s32.totalorder %s332, %s346
      %p348 = scmp.eq.s32.totalorder %s87, 0
      %p349 = por %p347, %p348
      %s351 = sadd.s32 %s350, 1
      %p354 = scmp.eq.s32.totalorder %s81, 1
      %p355 = scmp.ne.s32.totalorder %s350, %s352
      %p356 = scmp.eq.s32.totalorder %s81, 0
      %p357 = por %p355, %p356
      %p358 = scmp.ne.s32.totalorder %s350, %s352
      %p359 = scmp.eq.s32.totalorder %s86, 1
      %p360 = por %p358, %p359
      %p361 = scmp.ne.s32.totalorder %s352, %s353
      %p362 = scmp.eq.s32.totalorder %s86, 0
      %p363 = por %p361, %p362
      %p364 = scmp.ne.s32.totalorder %s352, %s353
      %p365 = scmp.eq.s32.totalorder %s87, 1
      %p366 = por %p364, %p365
      %p368 = scmp.ne.s32.totalorder %s353, %s367
      %p369 = scmp.eq.s32.totalorder %s87, 0
      %p370 = por %p368, %p369
      %s372 = sadd.s32 %s371, 1
      %p375 = scmp.eq.s32.totalorder %s81, 1
      %p376 = scmp.ne.s32.totalorder %s371, %s373
      %p377 = scmp.eq.s32.totalorder %s81, 0
      %p378 = por %p376, %p377
      %p379 = scmp.ne.s32.totalorder %s371, %s373
      %p380 = scmp.eq.s32.totalorder %s86, 1
      %p381 = por %p379, %p380
      %p382 = scmp.ne.s32.totalorder %s373, %s374
      %p383 = scmp.eq.s32.totalorder %s86, 0
      %p384 = por %p382, %p383
      %p385 = scmp.ne.s32.totalorder %s373, %s374
      %p386 = scmp.eq.s32.totalorder %s87, 1
      %p387 = por %p385, %p386
      %p389 = scmp.ne.s32.totalorder %s374, %s388
      %p390 = scmp.eq.s32.totalorder %s87, 0
      %p391 = por %p389, %p390
      %s393 = sadd.s32 %s392, 1
      %p396 = scmp.eq.s32.totalorder %s81, 1
      %p397 = scmp.ne.s32.totalorder %s392, %s394
      %p398 = scmp.eq.s32.totalorder %s81, 0
      %p399 = por %p397, %p398
      %p400 = scmp.ne.s32.totalorder %s392, %s394
      %p401 = scmp.eq.s32.totalorder %s86, 1
      %p402 = por %p400, %p401
      %p403 = scmp.ne.s32.totalorder %s394, %s395
      %p404 = scmp.eq.s32.totalorder %s86, 0
      %p405 = por %p403, %p404
      %p406 = scmp.ne.s32.totalorder %s394, %s395
      %p407 = scmp.eq.s32.totalorder %s87, 1
      %p408 = por %p406, %p407
      %p410 = scmp.ne.s32.totalorder %s395, %s409
      %p411 = scmp.eq.s32.totalorder %s87, 0
      %p412 = por %p410, %p411
      %s414 = sadd.s32 %s413, 1
      %p417 = scmp.eq.s32.totalorder %s81, 1
      %p418 = scmp.ne.s32.totalorder %s413, %s415
      %p419 = scmp.eq.s32.totalorder %s81, 0
      %p420 = por %p418, %p419
      %p421 = scmp.ne.s32.totalorder %s413, %s415
      %p422 = scmp.eq.s32.totalorder %s86, 1
      %p423 = por %p421, %p422
      %p424 = scmp.ne.s32.totalorder %s415, %s416
      %p425 = scmp.eq.s32.totalorder %s86, 0
      %p426 = por %p424, %p425
      %p427 = scmp.ne.s32.totalorder %s415, %s416
      %p428 = scmp.eq.s32.totalorder %s87, 1
      %p429 = por %p427, %p428
      %p431 = scmp.ne.s32.totalorder %s416, %s430
      %p432 = scmp.eq.s32.totalorder %s87, 0
      %p433 = por %p431, %p432
      %s435 = sadd.s32 %s434, 1
      %p438 = scmp.eq.s32.totalorder %s81, 1
      %p439 = scmp.ne.s32.totalorder %s434, %s436
      %p440 = scmp.eq.s32.totalorder %s81, 0
      %p441 = por %p439, %p440
      %p442 = scmp.ne.s32.totalorder %s434, %s436
      %p443 = scmp.eq.s32.totalorder %s86, 1
      %p444 = por %p442, %p443
      %p445 = scmp.ne.s32.totalorder %s436, %s437
      %p446 = scmp.eq.s32.totalorder %s86, 0
      %p447 = por %p445, %p446
      %p448 = scmp.ne.s32.totalorder %s436, %s437
      %p449 = scmp.eq.s32.totalorder %s87, 1
      %p450 = por %p448, %p449
      %p452 = scmp.ne.s32.totalorder %s437, %s451
      %p453 = scmp.eq.s32.totalorder %s87, 0
      %p454 = por %p452, %p453
      %s456 = sadd.s32 %s455, 1
      %p459 = scmp.eq.s32.totalorder %s81, 1
      %p460 = scmp.ne.s32.totalorder %s455, %s457
      %p461 = scmp.eq.s32.totalorder %s81, 0
      %p462 = por %p460, %p461
      %p463 = scmp.ne.s32.totalorder %s455, %s457
      %p464 = scmp.eq.s32.totalorder %s86, 1
      %p465 = por %p463, %p464
      %p466 = scmp.ne.s32.totalorder %s457, %s458
      %p467 = scmp.eq.s32.totalorder %s86, 0
      %p468 = por %p466, %p467
      %p469 = scmp.ne.s32.totalorder %s457, %s458
      %p470 = scmp.eq.s32.totalorder %s87, 1
      %p471 = por %p469, %p470
      %p473 = scmp.ne.s32.totalorder %s458, %s472
      %p474 = scmp.eq.s32.totalorder %s87, 0
      %p475 = por %p473, %p474
      %s477 = sadd.s32 %s476, 1
      %p480 = scmp.eq.s32.totalorder %s81, 1
      %p481 = scmp.ne.s32.totalorder %s476, %s478
      %p482 = scmp.eq.s32.totalorder %s81, 0
      %p483 = por %p481, %p482
      %p484 = scmp.ne.s32.totalorder %s476, %s478
      %p485 = scmp.eq.s32.totalorder %s86, 1
      %p486 = por %p484, %p485
      %p487 = scmp.ne.s32.totalorder %s478, %s479
      %p488 = scmp.eq.s32.totalorder %s86, 0
      %p489 = por %p487, %p488
      %p490 = scmp.ne.s32.totalorder %s478, %s479
      %p491 = scmp.eq.s32.totalorder %s87, 1
      %p492 = por %p490, %p491
      %p494 = scmp.ne.s32.totalorder %s479, %s493
      %p495 = scmp.eq.s32.totalorder %s87, 0
      %p496 = por %p494, %p495
      %s498 = sadd.s32 %s497, 1
      %p501 = scmp.eq.s32.totalorder %s81, 1
      %p502 = scmp.ne.s32.totalorder %s497, %s499
      %p503 = scmp.eq.s32.totalorder %s81, 0
      %p504 = por %p502, %p503
      %p505 = scmp.ne.s32.totalorder %s497, %s499
      %p506 = scmp.eq.s32.totalorder %s86, 1
      %p507 = por %p505, %p506
      %p508 = scmp.ne.s32.totalorder %s499, %s500
      %p509 = scmp.eq.s32.totalorder %s86, 0
      %p510 = por %p508, %p509
      %p511 = scmp.ne.s32.totalorder %s499, %s500
      %p512 = scmp.eq.s32.totalorder %s87, 1
      %p513 = por %p511, %p512
      %p515 = scmp.ne.s32.totalorder %s500, %s514
      %p516 = scmp.eq.s32.totalorder %s87, 0
      %p517 = por %p515, %p516
      %s519 = sadd.s32 %s518, 1
      %p522 = scmp.eq.s32.totalorder %s81, 1
      %p523 = scmp.ne.s32.totalorder %s518, %s520
      %p524 = scmp.eq.s32.totalorder %s81, 0
      %p525 = por %p523, %p524
      %p526 = scmp.ne.s32.totalorder %s518, %s520
      %p527 = scmp.eq.s32.totalorder %s86, 1
      %p528 = por %p526, %p527
      %p529 = scmp.ne.s32.totalorder %s520, %s521
      %p530 = scmp.eq.s32.totalorder %s86, 0
      %p531 = por %p529, %p530
      %p532 = scmp.ne.s32.totalorder %s520, %s521
      %p533 = scmp.eq.s32.totalorder %s87, 1
      %p534 = por %p532, %p533
      %p536 = scmp.ne.s32.totalorder %s521, %s535
      %p537 = scmp.eq.s32.totalorder %s87, 0
      %p538 = por %p536, %p537
      %s540 = sadd.s32 %s539, 1
      %p543 = scmp.eq.s32.totalorder %s81, 1
      %p544 = scmp.ne.s32.totalorder %s539, %s541
      %p545 = scmp.eq.s32.totalorder %s81, 0
      %p546 = por %p544, %p545
      %p547 = scmp.ne.s32.totalorder %s539, %s541
      %p548 = scmp.eq.s32.totalorder %s86, 1
      %p549 = por %p547, %p548
      %p550 = scmp.ne.s32.totalorder %s541, %s542
      %p551 = scmp.eq.s32.totalorder %s86, 0
      %p552 = por %p550, %p551
      %p553 = scmp.ne.s32.totalorder %s541, %s542
      %p554 = scmp.eq.s32.totalorder %s87, 1
      %p555 = por %p553, %p554
      %p557 = scmp.ne.s32.totalorder %s542, %s556
      %p558 = scmp.eq.s32.totalorder %s87, 0
      %p559 = por %p557, %p558
      %s561 = sadd.s32 %s560, 1
      %p564 = scmp.eq.s32.totalorder %s81, 1
      %p565 = scmp.ne.s32.totalorder %s560, %s562
      %p566 = scmp.eq.s32.totalorder %s81, 0
      %p567 = por %p565, %p566
      %p568 = scmp.ne.s32.totalorder %s560, %s562
      %p569 = scmp.eq.s32.totalorder %s86, 1
      %p570 = por %p568, %p569
      %p571 = scmp.ne.s32.totalorder %s562, %s563
      %p572 = scmp.eq.s32.totalorder %s86, 0
      %p573 = por %p571, %p572
      %p574 = scmp.ne.s32.totalorder %s562, %s563
      %p575 = scmp.eq.s32.totalorder %s87, 1
      %p576 = por %p574, %p575
      %p578 = scmp.ne.s32.totalorder %s563, %s577
      %p579 = scmp.eq.s32.totalorder %s87, 0
      %p580 = por %p578, %p579
      %s582 = sadd.s32 %s581, 1
      %p585 = scmp.eq.s32.totalorder %s81, 1
      %p586 = scmp.ne.s32.totalorder %s581, %s583
      %p587 = scmp.eq.s32.totalorder %s81, 0
      %p588 = por %p586, %p587
      %p589 = scmp.ne.s32.totalorder %s581, %s583
      %p590 = scmp.eq.s32.totalorder %s86, 1
      %p591 = por %p589, %p590
      %p592 = scmp.ne.s32.totalorder %s583, %s584
      %p593 = scmp.eq.s32.totalorder %s86, 0
      %p594 = por %p592, %p593
      %p595 = scmp.ne.s32.totalorder %s583, %s584
      %p596 = scmp.eq.s32.totalorder %s87, 1
      %p597 = por %p595, %p596
      %p599 = scmp.ne.s32.totalorder %s584, %s598
      %p600 = scmp.eq.s32.totalorder %s87, 0
      %p601 = por %p599, %p600
      %s603 = sadd.s32 %s602, 1
      %p606 = scmp.eq.s32.totalorder %s81, 1
      %p607 = scmp.ne.s32.totalorder %s602, %s604
      %p608 = scmp.eq.s32.totalorder %s81, 0
      %p609 = por %p607, %p608
      %p610 = scmp.ne.s32.totalorder %s602, %s604
      %p611 = scmp.eq.s32.totalorder %s86, 1
      %p612 = por %p610, %p611
      %p613 = scmp.ne.s32.totalorder %s604, %s605
      %p614 = scmp.eq.s32.totalorder %s86, 0
      %p615 = por %p613, %p614
      %p616 = scmp.ne.s32.totalorder %s604, %s605
      %p617 = scmp.eq.s32.totalorder %s87, 1
      %p618 = por %p616, %p617
      %p620 = scmp.ne.s32.totalorder %s605, %s619
      %p621 = scmp.eq.s32.totalorder %s87, 0
      %p622 = por %p620, %p621
      %s624 = sadd.s32 %s623, 1
      %p627 = scmp.eq.s32.totalorder %s81, 1
      %p628 = scmp.ne.s32.totalorder %s623, %s625
      %p629 = scmp.eq.s32.totalorder %s81, 0
      %p630 = por %p628, %p629
      %p631 = scmp.ne.s32.totalorder %s623, %s625
      %p632 = scmp.eq.s32.totalorder %s86, 1
      %p633 = por %p631, %p632
      %p634 = scmp.ne.s32.totalorder %s625, %s626
      %p635 = scmp.eq.s32.totalorder %s86, 0
      %p636 = por %p634, %p635
      %p637 = scmp.ne.s32.totalorder %s625, %s626
      %p638 = scmp.eq.s32.totalorder %s87, 1
      %p639 = por %p637, %p638
      %p641 = scmp.ne.s32.totalorder %s626, %s640
      %p642 = scmp.eq.s32.totalorder %s87, 0
      %p643 = por %p641, %p642
      %s645 = sadd.s32 %s644, 1
      %p648 = scmp.eq.s32.totalorder %s81, 1
      %p649 = scmp.ne.s32.totalorder %s644, %s646
      %p650 = scmp.eq.s32.totalorder %s81, 0
      %p651 = por %p649, %p650
      %p652 = scmp.ne.s32.totalorder %s644, %s646
      %p653 = scmp.eq.s32.totalorder %s86, 1
      %p654 = por %p652, %p653
      %p655 = scmp.ne.s32.totalorder %s646, %s647
      %p656 = scmp.eq.s32.totalorder %s86, 0
      %p657 = por %p655, %p656
      %p658 = scmp.ne.s32.totalorder %s646, %s647
      %p659 = scmp.eq.s32.totalorder %s87, 1
      %p660 = por %p658, %p659
      %p662 = scmp.ne.s32.totalorder %s647, %s661
      %p663 = scmp.eq.s32.totalorder %s87, 0
      %p664 = por %p662, %p663
      %s666 = sadd.s32 %s665, 1
      %p669 = scmp.eq.s32.totalorder %s81, 1
      %p670 = scmp.ne.s32.totalorder %s665, %s667
      %p671 = scmp.eq.s32.totalorder %s81, 0
      %p672 = por %p670, %p671
      %p673 = scmp.ne.s32.totalorder %s665, %s667
      %p674 = scmp.eq.s32.totalorder %s86, 1
      %p675 = por %p673, %p674
      %p676 = scmp.ne.s32.totalorder %s667, %s668
      %p677 = scmp.eq.s32.totalorder %s86, 0
      %p678 = por %p676, %p677
      %p679 = scmp.ne.s32.totalorder %s667, %s668
      %p680 = scmp.eq.s32.totalorder %s87, 1
      %p681 = por %p679, %p680
      %p683 = scmp.ne.s32.totalorder %s668, %s682
      %p684 = scmp.eq.s32.totalorder %s87, 0
      %p685 = por %p683, %p684
      %s687 = sadd.s32 %s686, 1
      %p690 = scmp.eq.s32.totalorder %s81, 1
      %p691 = scmp.ne.s32.totalorder %s686, %s688
      %p692 = scmp.eq.s32.totalorder %s81, 0
      %p693 = por %p691, %p692
      %p694 = scmp.ne.s32.totalorder %s686, %s688
      %p695 = scmp.eq.s32.totalorder %s86, 1
      %p696 = por %p694, %p695
      %p697 = scmp.ne.s32.totalorder %s688, %s689
      %p698 = scmp.eq.s32.totalorder %s86, 0
      %p699 = por %p697, %p698
      %p700 = scmp.ne.s32.totalorder %s688, %s689
      %p701 = scmp.eq.s32.totalorder %s87, 1
      %p702 = por %p700, %p701
      %p704 = scmp.ne.s32.totalorder %s689, %s703
      %p705 = scmp.eq.s32.totalorder %s87, 0
      %p706 = por %p704, %p705
      %s708 = sadd.s32 %s707, 1
      %p711 = scmp.eq.s32.totalorder %s81, 1
      %p712 = scmp.ne.s32.totalorder %s707, %s709
      %p713 = scmp.eq.s32.totalorder %s81, 0
      %p714 = por %p712, %p713
      %p715 = scmp.ne.s32.totalorder %s707, %s709
      %p716 = scmp.eq.s32.totalorder %s86, 1
      %p717 = por %p715, %p716
      %p718 = scmp.ne.s32.totalorder %s709, %s710
      %p719 = scmp.eq.s32.totalorder %s86, 0
      %p720 = por %p718, %p719
      %p721 = scmp.ne.s32.totalorder %s709, %s710
      %p722 = scmp.eq.s32.totalorder %s87, 1
      %p723 = por %p721, %p722
      %p725 = scmp.ne.s32.totalorder %s710, %s724
      %p726 = scmp.eq.s32.totalorder %s87, 0
      %p727 = por %p725, %p726
      %s729 = sadd.s32 %s728, 1
      %p732 = scmp.eq.s32.totalorder %s81, 1
      %p733 = scmp.ne.s32.totalorder %s728, %s730
      %p734 = scmp.eq.s32.totalorder %s81, 0
      %p735 = por %p733, %p734
      %p736 = scmp.ne.s32.totalorder %s728, %s730
      %p737 = scmp.eq.s32.totalorder %s86, 1
      %p738 = por %p736, %p737
      %p739 = scmp.ne.s32.totalorder %s730, %s731
      %p740 = scmp.eq.s32.totalorder %s86, 0
      %p741 = por %p739, %p740
      %p742 = scmp.ne.s32.totalorder %s730, %s731
      %p743 = scmp.eq.s32.totalorder %s87, 1
      %p744 = por %p742, %p743
      %p746 = scmp.ne.s32.totalorder %s731, %s745
      %p747 = scmp.eq.s32.totalorder %s87, 0
      %p748 = por %p746, %p747
      %s750 = sadd.s32 %s749, 1
      %p753 = scmp.eq.s32.totalorder %s81, 1
      %p754 = scmp.ne.s32.totalorder %s749, %s751
      %p755 = scmp.eq.s32.totalorder %s81, 0
      %p756 = por %p754, %p755
      %p757 = scmp.ne.s32.totalorder %s749, %s751
      %p758 = scmp.eq.s32.totalorder %s86, 1
      %p759 = por %p757, %p758
      %p760 = scmp.ne.s32.totalorder %s751, %s752
      %p761 = scmp.eq.s32.totalorder %s86, 0
      %p762 = por %p760, %p761
      %p763 = scmp.ne.s32.totalorder %s751, %s752
      %p764 = scmp.eq.s32.totalorder %s87, 1
      %p765 = por %p763, %p764
      %p767 = scmp.ne.s32.totalorder %s752, %s766
      %p768 = scmp.eq.s32.totalorder %s87, 0
      %p769 = por %p767, %p768
      %s770 = ssub.s32 %s81, %s88
      %p771 = scmp.eq.s32.totalorder %s770, 0
      %s773 = sadd.s32 %s772, 1
      %s774 = scalar_select %p771, %s772, %s773
      %p777 = pneg %p771
      %p778 = scmp.eq.s32.totalorder %s81, 1
      %p779 = por %p777, %p778
      %p780 = scmp.ne.s32.totalorder %s772, %s775
      %p781 = scmp.eq.s32.totalorder %s81, 0
      %p782 = por %p780, %p781
      %p783 = scmp.ne.s32.totalorder %s772, %s775
      %p784 = scmp.eq.s32.totalorder %s86, 1
      %p785 = por %p783, %p784
      %p786 = scmp.ne.s32.totalorder %s775, %s776
      %p787 = scmp.eq.s32.totalorder %s86, 0
      %p788 = por %p786, %p787
      %p789 = scmp.ne.s32.totalorder %s775, %s776
      %p790 = scmp.eq.s32.totalorder %s87, 1
      %p791 = por %p789, %p790
      %p793 = scmp.ne.s32.totalorder %s776, %s792
      %p794 = scmp.eq.s32.totalorder %s87, 0
      %p795 = por %p793, %p794
      %s796 = ssub.s32 %s81, %s88
      %p797 = scmp.eq.s32.totalorder %s796, 0
      %s799 = sadd.s32 %s798, 1
      %s800 = scalar_select %p797, %s798, %s799
      %p803 = pneg %p797
      %p804 = scmp.eq.s32.totalorder %s81, 1
      %p805 = por %p803, %p804
      %p806 = scmp.ne.s32.totalorder %s798, %s801
      %p807 = scmp.eq.s32.totalorder %s81, 0
      %p808 = por %p806, %p807
      %p809 = scmp.ne.s32.totalorder %s798, %s801
      %p810 = scmp.eq.s32.totalorder %s86, 1
      %p811 = por %p809, %p810
      %p812 = scmp.ne.s32.totalorder %s801, %s802
      %p813 = scmp.eq.s32.totalorder %s86, 0
      %p814 = por %p812, %p813
      %p815 = scmp.ne.s32.totalorder %s801, %s802
      %p816 = scmp.eq.s32.totalorder %s87, 1
      %p817 = por %p815, %p816
      %p819 = scmp.ne.s32.totalorder %s802, %s818
      %p820 = scmp.eq.s32.totalorder %s87, 0
      %p821 = por %p819, %p820
      %p822 = scmp.le.s32.totalorder 1, %s81
      %p823 = scmp.lt.s32.totalorder %s81, 3
      %p824 = pnand %p822, %p823
      %p825 = pneg %p824
      // Predicated region
      $region9: #{tpu_custom_call.1} parent=5 // pred_check
        _
      $region10: #{tpu_custom_call.1} parent=5 // pred_check_branch
        %827 = sbr.rel (%p824) target = $region12
      $region11: #{tpu_custom_call.1} parent=5 // pred_region
        %s828 = ssub.s32 %s81, 1
        // Predicated region
        $region13: #{tpu_custom_call.1} parent=11 // pred_check
          %p829 = pneg %p258
        $region14: #{tpu_custom_call.1} parent=11 // pred_check_branch
          %831 = sbr.rel (%p829) target = $region16
        $region15: #{tpu_custom_call.1} parent=11 // pred_region
          %s833 = ssub.s32 384, 384
          %834 = vsyncadd [#allocation3], %s833
          %s835 = sshll.u32 [#allocation2], 4
          %s836 = int_to_ptr.vmem [resolvable:$true] %s835
          %841 = dma.hbm_to_vmem [thread:$0]  %s13, 384, %s836, [#allocation3], 128, 128, 8
        $region16: #{tpu_custom_call.1} parent=11 // pred_fallthru
          _
        // Predicated region
        $region17: #{tpu_custom_call.1} parent=11 // pred_check
          %p842 = pneg %p279
        $region18: #{tpu_custom_call.1} parent=11 // pred_check_branch
          %844 = sbr.rel (%p842) target = $region20
        $region19: #{tpu_custom_call.1} parent=11 // pred_region
          %s846 = ssub.s32 16, 16
          %847 = vsyncadd [#allocation5], %s846
          %s849 = sshll.u32 [#allocation4], 4
          %s850 = int_to_ptr.vmem [resolvable:$true] %s849
          %852 = dma.hbm_to_vmem [thread:$0]  %s15, 16, %s850, [#allocation5]
        $region20: #{tpu_custom_call.1} parent=11 // pred_fallthru
          _
        // Predicated region
        $region21: #{tpu_custom_call.1} parent=11 // pred_check
          %p853 = pneg %p300
        $region22: #{tpu_custom_call.1} parent=11 // pred_check_branch
          %855 = sbr.rel (%p853) target = $region24
        $region23: #{tpu_custom_call.1} parent=11 // pred_region
          _
        $region24: #{tpu_custom_call.1} parent=11 // pred_fallthru
          _
        // Predicated region
        $region25: #{tpu_custom_call.1} parent=11 // pred_check
          %p856 = pneg %p321
        $region26: #{tpu_custom_call.1} parent=11 // pred_check_branch
          %858 = sbr.rel (%p856) target = $region28
        $region27: #{tpu_custom_call.1} parent=11 // pred_region
          %s860 = ssub.s32 16, 16
          %861 = vsyncadd [#allocation5], %s860
          %s863 = sshll.u32 [#allocation6], 4
          %s864 = int_to_ptr.vmem [resolvable:$true] %s863
          %866 = dma.hbm_to_vmem [thread:$0]  %s19, 16, %s864, [#allocation5]
        $region28: #{tpu_custom_call.1} parent=11 // pred_fallthru
          _
        // Predicated region
        $region29: #{tpu_custom_call.1} parent=11 // pred_check
          %p867 = pneg %p342
        $region30: #{tpu_custom_call.1} parent=11 // pred_check_branch
          %869 = sbr.rel (%p867) target = $region32
        $region31: #{tpu_custom_call.1} parent=11 // pred_region
          _
        $region32: #{tpu_custom_call.1} parent=11 // pred_fallthru
          _
        // Predicated region
        $region33: #{tpu_custom_call.1} parent=11 // pred_check
          %p870 = pneg %p363
        $region34: #{tpu_custom_call.1} parent=11 // pred_check_branch
          %872 = sbr.rel (%p870) target = $region36
        $region35: #{tpu_custom_call.1} parent=11 // pred_region
          _
        $region36: #{tpu_custom_call.1} parent=11 // pred_fallthru
          _
        // Predicated region
        $region37: #{tpu_custom_call.1} parent=11 // pred_check
          %p873 = pneg %p384
        $region38: #{tpu_custom_call.1} parent=11 // pred_check_branch
          %875 = sbr.rel (%p873) target = $region40
        $region39: #{tpu_custom_call.1} parent=11 // pred_region
          _
        $region40: #{tpu_custom_call.1} parent=11 // pred_fallthru
          _
        // Predicated region
        $region41: #{tpu_custom_call.1} parent=11 // pred_check
          %p876 = pneg %p405
        $region42: #{tpu_custom_call.1} parent=11 // pred_check_branch
          %878 = sbr.rel (%p876) target = $region44
        $region43: #{tpu_custom_call.1} parent=11 // pred_region
          %s880 = ssub.s32 16, 16
          %881 = vsyncadd [#allocation8], %s880
          %s883 = sshll.u32 [#allocation7], 4
          %s884 = int_to_ptr.vmem [resolvable:$true] %s883
          %886 = dma.hbm_to_vmem [thread:$0]  %s27, 16, %s884, [#allocation8]
        $region44: #{tpu_custom_call.1} parent=11 // pred_fallthru
          _
        // Predicated region
        $region45: #{tpu_custom_call.1} parent=11 // pred_check
          %p887 = pneg %p426
        $region46: #{tpu_custom_call.1} parent=11 // pred_check_branch
          %889 = sbr.rel (%p887) target = $region48
        $region47: #{tpu_custom_call.1} parent=11 // pred_region
          _
        $region48: #{tpu_custom_call.1} parent=11 // pred_fallthru
          _
        // Predicated region
        $region49: #{tpu_custom_call.1} parent=11 // pred_check
          %p890 = pneg %p447
        $region50: #{tpu_custom_call.1} parent=11 // pred_check_branch
          %892 = sbr.rel (%p890) target = $region52
        $region51: #{tpu_custom_call.1} parent=11 // pred_region
          %s894 = ssub.s32 16, 16
          %895 = vsyncadd [#allocation8], %s894
          %s897 = sshll.u32 [#allocation9], 4
          %s898 = int_to_ptr.vmem [resolvable:$true] %s897
          %900 = dma.hbm_to_vmem [thread:$0]  %s31, 16, %s898, [#allocation8]
        $region52: #{tpu_custom_call.1} parent=11 // pred_fallthru
          _
        // Predicated region
        $region53: #{tpu_custom_call.1} parent=11 // pred_check
          %p901 = pneg %p468
        $region54: #{tpu_custom_call.1} parent=11 // pred_check_branch
          %903 = sbr.rel (%p901) target = $region56
        $region55: #{tpu_custom_call.1} parent=11 // pred_region
          _
        $region56: #{tpu_custom_call.1} parent=11 // pred_fallthru
          _
        // Predicated region
        $region57: #{tpu_custom_call.1} parent=11 // pred_check
          %p904 = pneg %p489
        $region58: #{tpu_custom_call.1} parent=11 // pred_check_branch
          %906 = sbr.rel (%p904) target = $region60
        $region59: #{tpu_custom_call.1} parent=11 // pred_region
          %s908 = ssub.s32 16, 16
          %909 = vsyncadd [#allocation11], %s908
          %s911 = sshll.u32 [#allocation10], 4
          %s912 = int_to_ptr.vmem [resolvable:$true] %s911
          %914 = dma.hbm_to_vmem [thread:$0]  %s35, 16, %s912, [#allocation11]
        $region60: #{tpu_custom_call.1} parent=11 // pred_fallthru
          _
        // Predicated region
        $region61: #{tpu_custom_call.1} parent=11 // pred_check
          %p915 = pneg %p510
        $region62: #{tpu_custom_call.1} parent=11 // pred_check_branch
          %917 = sbr.rel (%p915) target = $region64
        $region63: #{tpu_custom_call.1} parent=11 // pred_region
          %s919 = ssub.s32 512, 512
          %920 = vsyncadd [#allocation11], %s919
          %s921 = sshll.u32 [#allocation12], 4
          %s922 = int_to_ptr.vmem [resolvable:$true] %s921
          %927 = dma.hbm_to_vmem [thread:$0]  %s37, 512, %s922, [#allocation11], 128, 128, 8
        $region64: #{tpu_custom_call.1} parent=11 // pred_fallthru
          _
        // Predicated region
        $region65: #{tpu_custom_call.1} parent=11 // pred_check
          %p928 = pneg %p531
        $region66: #{tpu_custom_call.1} parent=11 // pred_check_branch
          %930 = sbr.rel (%p928) target = $region68
        $region67: #{tpu_custom_call.1} parent=11 // pred_region
          %s932 = ssub.s32 512, 512
          %933 = vsyncadd [#allocation14], %s932
          %s934 = sshll.u32 [#allocation13], 4
          %s935 = int_to_ptr.vmem [resolvable:$true] %s934
          %940 = dma.hbm_to_vmem [thread:$0]  %s39, 512, %s935, [#allocation14], 128, 128, 8
        $region68: #{tpu_custom_call.1} parent=11 // pred_fallthru
          _
        // Predicated region
        $region69: #{tpu_custom_call.1} parent=11 // pred_check
          %p941 = pneg %p552
        $region70: #{tpu_custom_call.1} parent=11 // pred_check_branch
          %943 = sbr.rel (%p941) target = $region72
        $region71: #{tpu_custom_call.1} parent=11 // pred_region
          %s945 = ssub.s32 512, 512
          %946 = vsyncadd [#allocation14], %s945
          %s947 = sshll.u32 [#allocation15], 4
          %s948 = int_to_ptr.vmem [resolvable:$true] %s947
          %953 = dma.hbm_to_vmem [thread:$0]  %s41, 512, %s948, [#allocation14], 128, 128, 8
        $region72: #{tpu_custom_call.1} parent=11 // pred_fallthru
          _
        // Predicated region
        $region73: #{tpu_custom_call.1} parent=11 // pred_check
          %p954 = pneg %p573
        $region74: #{tpu_custom_call.1} parent=11 // pred_check_branch
          %956 = sbr.rel (%p954) target = $region76
        $region75: #{tpu_custom_call.1} parent=11 // pred_region
          %s958 = ssub.s32 16, 16
          %959 = vsyncadd [#allocation17], %s958
          %s961 = sshll.u32 [#allocation16], 4
          %s962 = int_to_ptr.vmem [resolvable:$true] %s961
          %964 = dma.hbm_to_vmem [thread:$0]  %s43, 16, %s962, [#allocation17]
        $region76: #{tpu_custom_call.1} parent=11 // pred_fallthru
          _
        // Predicated region
        $region77: #{tpu_custom_call.1} parent=11 // pred_check
          %p965 = pneg %p594
        $region78: #{tpu_custom_call.1} parent=11 // pred_check_branch
          %967 = sbr.rel (%p965) target = $region80
        $region79: #{tpu_custom_call.1} parent=11 // pred_region
          %s969 = ssub.s32 512, 512
          %970 = vsyncadd [#allocation17], %s969
          %s971 = sshll.u32 [#allocation18], 4
          %s972 = int_to_ptr.vmem [resolvable:$true] %s971
          %977 = dma.hbm_to_vmem [thread:$0]  %s45, 512, %s972, [#allocation17], 128, 128, 8
        $region80: #{tpu_custom_call.1} parent=11 // pred_fallthru
          _
        // Predicated region
        $region81: #{tpu_custom_call.1} parent=11 // pred_check
          %p978 = pneg %p615
        $region82: #{tpu_custom_call.1} parent=11 // pred_check_branch
          %980 = sbr.rel (%p978) target = $region84
        $region83: #{tpu_custom_call.1} parent=11 // pred_region
          %s982 = ssub.s32 512, 512
          %983 = vsyncadd [#allocation20], %s982
          %s984 = sshll.u32 [#allocation19], 4
          %s985 = int_to_ptr.vmem [resolvable:$true] %s984
          %990 = dma.hbm_to_vmem [thread:$0]  %s47, 512, %s985, [#allocation20], 128, 128, 8
        $region84: #{tpu_custom_call.1} parent=11 // pred_fallthru
          _
        // Predicated region
        $region85: #{tpu_custom_call.1} parent=11 // pred_check
          %p991 = pneg %p636
        $region86: #{tpu_custom_call.1} parent=11 // pred_check_branch
          %993 = sbr.rel (%p991) target = $region88
        $region87: #{tpu_custom_call.1} parent=11 // pred_region
          %s995 = ssub.s32 16, 16
          %996 = vsyncadd [#allocation20], %s995
          %s998 = sshll.u32 [#allocation21], 4
          %s999 = int_to_ptr.vmem [resolvable:$true] %s998
          %1001 = dma.hbm_to_vmem [thread:$0]  %s49, 16, %s999, [#allocation20]
        $region88: #{tpu_custom_call.1} parent=11 // pred_fallthru
          _
        // Predicated region
        $region89: #{tpu_custom_call.1} parent=11 // pred_check
          %p1002 = pneg %p657
        $region90: #{tpu_custom_call.1} parent=11 // pred_check_branch
          %1004 = sbr.rel (%p1002) target = $region92
        $region91: #{tpu_custom_call.1} parent=11 // pred_region
          %s1006 = ssub.s32 512, 512
          %1007 = vsyncadd [#allocation23], %s1006
          %s1008 = sshll.u32 [#allocation22], 4
          %s1009 = int_to_ptr.vmem [resolvable:$true] %s1008
          %1014 = dma.hbm_to_vmem [thread:$0]  %s51, 512, %s1009, [#allocation23], 128, 128, 8
        $region92: #{tpu_custom_call.1} parent=11 // pred_fallthru
          _
        // Predicated region
        $region93: #{tpu_custom_call.1} parent=11 // pred_check
          %p1015 = pneg %p678
        $region94: #{tpu_custom_call.1} parent=11 // pred_check_branch
          %1017 = sbr.rel (%p1015) target = $region96
        $region95: #{tpu_custom_call.1} parent=11 // pred_region
          %s1019 = ssub.s32 16, 16
          %1020 = vsyncadd [#allocation23], %s1019
          %s1022 = sshll.u32 [#allocation24], 4
          %s1023 = int_to_ptr.vmem [resolvable:$true] %s1022
          %1025 = dma.hbm_to_vmem [thread:$0]  %s53, 16, %s1023, [#allocation23]
        $region96: #{tpu_custom_call.1} parent=11 // pred_fallthru
          _
        // Predicated region
        $region97: #{tpu_custom_call.1} parent=11 // pred_check
          %p1026 = pneg %p699
        $region98: #{tpu_custom_call.1} parent=11 // pred_check_branch
          %1028 = sbr.rel (%p1026) target = $region100
        $region99: #{tpu_custom_call.1} parent=11 // pred_region
          _
        $region100: #{tpu_custom_call.1} parent=11 // pred_fallthru
          _
        // Predicated region
        $region101: #{tpu_custom_call.1} parent=11 // pred_check
          %p1029 = pneg %p720
        $region102: #{tpu_custom_call.1} parent=11 // pred_check_branch
          %1031 = sbr.rel (%p1029) target = $region104
        $region103: #{tpu_custom_call.1} parent=11 // pred_region
          %s1033 = ssub.s32 16, 16
          %1034 = vsyncadd [#allocation26], %s1033
          %s1036 = sshll.u32 [#allocation25], 4
          %s1037 = int_to_ptr.vmem [resolvable:$true] %s1036
          %1039 = dma.hbm_to_vmem [thread:$0]  %s57, 16, %s1037, [#allocation26]
        $region104: #{tpu_custom_call.1} parent=11 // pred_fallthru
          _
        // Predicated region
        $region105: #{tpu_custom_call.1} parent=11 // pred_check
          %p1040 = pneg %p741
        $region106: #{tpu_custom_call.1} parent=11 // pred_check_branch
          %1042 = sbr.rel (%p1040) target = $region108
        $region107: #{tpu_custom_call.1} parent=11 // pred_region
          _
        $region108: #{tpu_custom_call.1} parent=11 // pred_fallthru
          _
        // Predicated region
        $region109: #{tpu_custom_call.1} parent=11 // pred_check
          %p1043 = pneg %p762
        $region110: #{tpu_custom_call.1} parent=11 // pred_check_branch
          %1045 = sbr.rel (%p1043) target = $region112
        $region111: #{tpu_custom_call.1} parent=11 // pred_region
          _
        $region112: #{tpu_custom_call.1} parent=11 // pred_fallthru
          _
      $region12: #{tpu_custom_call.1} parent=5 // pred_fallthru
        _
      %p1046 = scmp.lt.s32.totalorder %s81, 2
      // Predicated region
      $region113: #{tpu_custom_call.1} parent=5 // pred_check
        %p1047 = pneg %p1046
      $region114: #{tpu_custom_call.1} parent=5 // pred_check_branch
        %1049 = sbr.rel (%p1047) target = $region116
      $region115: #{tpu_custom_call.1} parent=5 // pred_region
        // Predicated region
        $region117: #{tpu_custom_call.1} parent=115 // pred_check
          %p1050 = pneg %p101
        $region118: #{tpu_custom_call.1} parent=115 // pred_check_branch
          %1052 = sbr.rel (%p1050) target = $region120
        $region119: #{tpu_custom_call.1} parent=115 // pred_region
          %p1053 = scmp.lt.s32.totalorder %s81, 1
          %s1054 = scalar_select %p1053, %s81, 1
          %s1055 = smul.addr %s1054, 2
          %s1056 = smul.addr %s1055, 8
          %s1057 = scalar_lea.vmem %s1, %s1056
        $region120: #{tpu_custom_call.1} parent=115 // pred_fallthru
          _
        // Predicated region
        $region121: #{tpu_custom_call.1} parent=115 // pred_check
          %p1058 = pneg %p127
        $region122: #{tpu_custom_call.1} parent=115 // pred_check_branch
          %1060 = sbr.rel (%p1058) target = $region124
        $region123: #{tpu_custom_call.1} parent=115 // pred_region
          %p1061 = scmp.lt.s32.totalorder %s81, 1
          %s1062 = scalar_select %p1061, %s81, 1
          %s1063 = smul.addr %s1062, 3
          %s1064 = smul.addr %s1063, 8
          %s1065 = scalar_lea.vmem %s3, %s1064
        $region124: #{tpu_custom_call.1} parent=115 // pred_fallthru
          _
        // Predicated region
        $region125: #{tpu_custom_call.1} parent=115 // pred_check
          %p1066 = pneg %p153
        $region126: #{tpu_custom_call.1} parent=115 // pred_check_branch
          %1068 = sbr.rel (%p1066) target = $region128
        $region127: #{tpu_custom_call.1} parent=115 // pred_region
          %p1069 = scmp.lt.s32.totalorder %s81, 1
          %s1070 = scalar_select %p1069, %s81, 1
          %s1071 = smul.addr %s1070, 3
          %s1072 = smul.addr %s1071, 8
          %s1073 = scalar_lea.vmem %s5, %s1072
        $region128: #{tpu_custom_call.1} parent=115 // pred_fallthru
          _
        // Predicated region
        $region129: #{tpu_custom_call.1} parent=115 // pred_check
          %p1074 = pneg %p179
        $region130: #{tpu_custom_call.1} parent=115 // pred_check_branch
          %1076 = sbr.rel (%p1074) target = $region132
        $region131: #{tpu_custom_call.1} parent=115 // pred_region
          %p1077 = scmp.lt.s32.totalorder %s81, 1
          %s1078 = scalar_select %p1077, %s81, 1
          %s1079 = smul.addr %s1078, 3
          %s1080 = smul.addr %s1079, 8
          %s1081 = scalar_lea.vmem %s7, %s1080
        $region132: #{tpu_custom_call.1} parent=115 // pred_fallthru
          _
        // Predicated region
        $region133: #{tpu_custom_call.1} parent=115 // pred_check
          %p1082 = pneg %p205
        $region134: #{tpu_custom_call.1} parent=115 // pred_check_branch
          %1084 = sbr.rel (%p1082) target = $region136
        $region135: #{tpu_custom_call.1} parent=115 // pred_region
          %p1085 = scmp.lt.s32.totalorder %s81, 1
          %s1086 = scalar_select %p1085, %s81, 1
          %s1087 = smul.addr %s1086, 2
          %s1088 = smul.addr %s1087, 8
          %s1089 = scalar_lea.vmem %s9, %s1088
        $region136: #{tpu_custom_call.1} parent=115 // pred_fallthru
          _
        // Predicated region
        $region137: #{tpu_custom_call.1} parent=115 // pred_check
          %p1090 = pneg %p231
        $region138: #{tpu_custom_call.1} parent=115 // pred_check_branch
          %1092 = sbr.rel (%p1090) target = $region140
        $region139: #{tpu_custom_call.1} parent=115 // pred_region
          %p1093 = scmp.lt.s32.totalorder %s81, 1
          %s1094 = scalar_select %p1093, %s81, 1
          %s1095 = smul.addr %s1094, 2
          %s1096 = smul.addr %s1095, 8
          %s1097 = scalar_lea.vmem %s11, %s1096
        $region140: #{tpu_custom_call.1} parent=115 // pred_fallthru
          _
      $region116: #{tpu_custom_call.1} parent=5 // pred_fallthru
        _
      %p1098 = scmp.le.s32.totalorder 1, %s81
      %p1099 = scmp.lt.s32.totalorder %s81, 3
      %p1100 = pnand %p1098, %p1099
      %p1101 = pneg %p1100
      // Predicated region
      $region141: #{tpu_custom_call.1} parent=5 // pred_check
        _
      $region142: #{tpu_custom_call.1} parent=5 // pred_check_branch
        %1103 = sbr.rel (%p1100) target = $region144
      $region143: #{tpu_custom_call.1} parent=5 // pred_region
        %s1104 = ssub.s32 %s81, 1
        // Predicated region
        $region145: #{tpu_custom_call.1} parent=143 // pred_check
          %p1105 = pneg %p258
        $region146: #{tpu_custom_call.1} parent=143 // pred_check_branch
          %1107 = sbr.rel (%p1105) target = $region148
        $region147: #{tpu_custom_call.1} parent=143 // pred_region
          %1108 = dma.done [#allocation3], 384
        $region148: #{tpu_custom_call.1} parent=143 // pred_fallthru
          _
        // Predicated region
        $region149: #{tpu_custom_call.1} parent=143 // pred_check
          %p1109 = pneg %p279
        $region150: #{tpu_custom_call.1} parent=143 // pred_check_branch
          %1111 = sbr.rel (%p1109) target = $region152
        $region151: #{tpu_custom_call.1} parent=143 // pred_region
          %1112 = dma.done [#allocation5], 16
        $region152: #{tpu_custom_call.1} parent=143 // pred_fallthru
          _
        // Predicated region
        $region153: #{tpu_custom_call.1} parent=143 // pred_check
          %p1113 = pneg %p321
        $region154: #{tpu_custom_call.1} parent=143 // pred_check_branch
          %1115 = sbr.rel (%p1113) target = $region156
        $region155: #{tpu_custom_call.1} parent=143 // pred_region
          %1116 = dma.done [#allocation5], 16
        $region156: #{tpu_custom_call.1} parent=143 // pred_fallthru
          _
        // Predicated region
        $region157: #{tpu_custom_call.1} parent=143 // pred_check
          %p1117 = pneg %p405
        $region158: #{tpu_custom_call.1} parent=143 // pred_check_branch
          %1119 = sbr.rel (%p1117) target = $region160
        $region159: #{tpu_custom_call.1} parent=143 // pred_region
          %1120 = dma.done [#allocation8], 16
        $region160: #{tpu_custom_call.1} parent=143 // pred_fallthru
          _
        // Predicated region
        $region161: #{tpu_custom_call.1} parent=143 // pred_check
          %p1121 = pneg %p447
        $region162: #{tpu_custom_call.1} parent=143 // pred_check_branch
          %1123 = sbr.rel (%p1121) target = $region164
        $region163: #{tpu_custom_call.1} parent=143 // pred_region
          %1124 = dma.done [#allocation8], 16
        $region164: #{tpu_custom_call.1} parent=143 // pred_fallthru
          _
        // Predicated region
        $region165: #{tpu_custom_call.1} parent=143 // pred_check
          %p1125 = pneg %p489
        $region166: #{tpu_custom_call.1} parent=143 // pred_check_branch
          %1127 = sbr.rel (%p1125) target = $region168
        $region167: #{tpu_custom_call.1} parent=143 // pred_region
          %1128 = dma.done [#allocation11], 16
        $region168: #{tpu_custom_call.1} parent=143 // pred_fallthru
          _
        // Predicated region
        $region169: #{tpu_custom_call.1} parent=143 // pred_check
          %p1129 = pneg %p510
        $region170: #{tpu_custom_call.1} parent=143 // pred_check_branch
          %1131 = sbr.rel (%p1129) target = $region172
        $region171: #{tpu_custom_call.1} parent=143 // pred_region
          %1132 = dma.done [#allocation11], 512
        $region172: #{tpu_custom_call.1} parent=143 // pred_fallthru
          _
        // Predicated region
        $region173: #{tpu_custom_call.1} parent=143 // pred_check
          %p1133 = pneg %p531
        $region174: #{tpu_custom_call.1} parent=143 // pred_check_branch
          %1135 = sbr.rel (%p1133) target = $region176
        $region175: #{tpu_custom_call.1} parent=143 // pred_region
          %1136 = dma.done [#allocation14], 512
        $region176: #{tpu_custom_call.1} parent=143 // pred_fallthru
          _
        // Predicated region
        $region177: #{tpu_custom_call.1} parent=143 // pred_check
          %p1137 = pneg %p552
        $region178: #{tpu_custom_call.1} parent=143 // pred_check_branch
          %1139 = sbr.rel (%p1137) target = $region180
        $region179: #{tpu_custom_call.1} parent=143 // pred_region
          %1140 = dma.done [#allocation14], 512
        $region180: #{tpu_custom_call.1} parent=143 // pred_fallthru
          _
        // Predicated region
        $region181: #{tpu_custom_call.1} parent=143 // pred_check
          %p1141 = pneg %p573
        $region182: #{tpu_custom_call.1} parent=143 // pred_check_branch
          %1143 = sbr.rel (%p1141) target = $region184
        $region183: #{tpu_custom_call.1} parent=143 // pred_region
          %1144 = dma.done [#allocation17], 16
        $region184: #{tpu_custom_call.1} parent=143 // pred_fallthru
          _
        // Predicated region
        $region185: #{tpu_custom_call.1} parent=143 // pred_check
          %p1145 = pneg %p594
        $region186: #{tpu_custom_call.1} parent=143 // pred_check_branch
          %1147 = sbr.rel (%p1145) target = $region188
        $region187: #{tpu_custom_call.1} parent=143 // pred_region
          %1148 = dma.done [#allocation17], 512
        $region188: #{tpu_custom_call.1} parent=143 // pred_fallthru
          _
        // Predicated region
        $region189: #{tpu_custom_call.1} parent=143 // pred_check
          %p1149 = pneg %p615
        $region190: #{tpu_custom_call.1} parent=143 // pred_check_branch
          %1151 = sbr.rel (%p1149) target = $region192
        $region191: #{tpu_custom_call.1} parent=143 // pred_region
          %1152 = dma.done [#allocation20], 512
        $region192: #{tpu_custom_call.1} parent=143 // pred_fallthru
          _
        // Predicated region
        $region193: #{tpu_custom_call.1} parent=143 // pred_check
          %p1153 = pneg %p636
        $region194: #{tpu_custom_call.1} parent=143 // pred_check_branch
          %1155 = sbr.rel (%p1153) target = $region196
        $region195: #{tpu_custom_call.1} parent=143 // pred_region
          %1156 = dma.done [#allocation20], 16
        $region196: #{tpu_custom_call.1} parent=143 // pred_fallthru
          _
        // Predicated region
        $region197: #{tpu_custom_call.1} parent=143 // pred_check
          %p1157 = pneg %p657
        $region198: #{tpu_custom_call.1} parent=143 // pred_check_branch
          %1159 = sbr.rel (%p1157) target = $region200
        $region199: #{tpu_custom_call.1} parent=143 // pred_region
          %1160 = dma.done [#allocation23], 512
        $region200: #{tpu_custom_call.1} parent=143 // pred_fallthru
          _
        // Predicated region
        $region201: #{tpu_custom_call.1} parent=143 // pred_check
          %p1161 = pneg %p678
        $region202: #{tpu_custom_call.1} parent=143 // pred_check_branch
          %1163 = sbr.rel (%p1161) target = $region204
        $region203: #{tpu_custom_call.1} parent=143 // pred_region
          %1164 = dma.done [#allocation23], 16
        $region204: #{tpu_custom_call.1} parent=143 // pred_fallthru
          _
        // Predicated region
        $region205: #{tpu_custom_call.1} parent=143 // pred_check
          %p1165 = pneg %p720
        $region206: #{tpu_custom_call.1} parent=143 // pred_check_branch
          %1167 = sbr.rel (%p1165) target = $region208
        $region207: #{tpu_custom_call.1} parent=143 // pred_region
          %1168 = dma.done [#allocation26], 16
        $region208: #{tpu_custom_call.1} parent=143 // pred_fallthru
          _
        %p1169 = scmp.lt.s32.totalorder %s86, 1
        %s1170 = scalar_select %p1169, %s86, 1
        %s1171 = smul.addr %s1170, 2
        %s1172 = smul.addr %s1171, 8
        %s1173 = scalar_lea.vmem %s1, %s1172
        %p1174 = pneg %p107
        %p1175 = pneg %p104
        %p1176 = scmp.lt.s32.totalorder %s86, 1
        %s1177 = scalar_select %p1176, %s86, 1
        %s1178 = smul.addr %s1177, 3
        %s1179 = smul.addr %s1178, 8
        %s1180 = scalar_lea.vmem %s3, %s1179
        %p1181 = pneg %p133
        %p1182 = pneg %p130
        %p1183 = scmp.lt.s32.totalorder %s86, 1
        %s1184 = scalar_select %p1183, %s86, 1
        %s1185 = smul.addr %s1184, 3
        %s1186 = smul.addr %s1185, 8
        %s1187 = scalar_lea.vmem %s5, %s1186
        %p1188 = pneg %p159
        %p1189 = pneg %p156
        %p1190 = scmp.lt.s32.totalorder %s86, 1
        %s1191 = scalar_select %p1190, %s86, 1
        %s1192 = smul.addr %s1191, 3
        %s1193 = smul.addr %s1192, 8
        %s1194 = scalar_lea.vmem %s7, %s1193
        %p1195 = pneg %p185
        %p1196 = pneg %p182
        %p1197 = scmp.lt.s32.totalorder %s86, 1
        %s1198 = scalar_select %p1197, %s86, 1
        %s1199 = smul.addr %s1198, 2
        %s1200 = smul.addr %s1199, 8
        %s1201 = scalar_lea.vmem %s9, %s1200
        %p1202 = pneg %p211
        %p1203 = pneg %p208
        %p1204 = scmp.lt.s32.totalorder %s86, 1
        %s1205 = scalar_select %p1204, %s86, 1
        %s1206 = smul.addr %s1205, 2
        %s1207 = smul.addr %s1206, 8
        %s1208 = scalar_lea.vmem %s11, %s1207
        %p1209 = pneg %p237
        %p1210 = pneg %p234
        %p1211 = pneg %p258
        %p1212 = pneg %p255
        %p1213 = pneg %p279
        %p1214 = pneg %p276
        %p1215 = pneg %p300
        %p1216 = pneg %p297
        %p1217 = pneg %p321
        %p1218 = pneg %p318
        %p1219 = pneg %p342
        %p1220 = pneg %p339
        %p1221 = pneg %p363
        %p1222 = pneg %p360
        %p1223 = pneg %p384
        %p1224 = pneg %p381
        %p1225 = pneg %p405
        %p1226 = pneg %p402
        %p1227 = pneg %p426
        %p1228 = pneg %p423
        %p1229 = pneg %p447
        %p1230 = pneg %p444
        %p1231 = pneg %p468
        %p1232 = pneg %p465
        %p1233 = pneg %p489
        %p1234 = pneg %p486
        %p1235 = pneg %p510
        %p1236 = pneg %p507
        %p1237 = pneg %p531
        %p1238 = pneg %p528
        %p1239 = pneg %p552
        %p1240 = pneg %p549
        %p1241 = pneg %p573
        %p1242 = pneg %p570
        %p1243 = pneg %p594
        %p1244 = pneg %p591
        %p1245 = pneg %p615
        %p1246 = pneg %p612
        %p1247 = pneg %p636
        %p1248 = pneg %p633
        %p1249 = pneg %p657
        %p1250 = pneg %p654
        %p1251 = pneg %p678
        %p1252 = pneg %p675
        %p1253 = pneg %p699
        %p1254 = pneg %p696
        %p1255 = pneg %p720
        %p1256 = pneg %p717
        %p1257 = pneg %p741
        %p1258 = pneg %p738
        %p1259 = pneg %p762
        %p1260 = pneg %p759
        %p1261 = pneg %p788
        %p1262 = pneg %p785
        %p1263 = scmp.lt.s32.totalorder %s86, 1
        %s1264 = scalar_select %p1263, %s86, 1
        %s1265 = smul.addr %s1264, 2
        %s1266 = smul.addr %s1265, 8
        %s1267 = scalar_lea.vmem %s63, %s1266
        %p1268 = pneg %p814
        %p1269 = pneg %p811
        %p1270 = scmp.lt.s32.totalorder %s86, 1
        %s1271 = scalar_select %p1270, %s86, 1
        %s1272 = smul.addr %s1271, 2
        %s1273 = smul.addr %s1272, 8
        %s1274 = scalar_lea.vmem %s65, %s1273
        %p1275 = scmp.lt.s32.totalorder %s86, 1
        %s1276 = scalar_select %p1275, %s86, 1
        %s1277 = smul.addr %s1276, 2
        %s1278 = smul.addr %s1277, 8
        %s1279 = scalar_lea.vmem %s1, %s1278
        %p1280 = scmp.lt.s32.totalorder %s86, 1
        %s1281 = scalar_select %p1280, %s86, 1
        %s1282 = smul.addr %s1281, 3
        %s1283 = smul.addr %s1282, 8
        %s1284 = scalar_lea.vmem %s3, %s1283
        %p1285 = scmp.lt.s32.totalorder %s86, 1
        %s1286 = scalar_select %p1285, %s86, 1
        %s1287 = smul.addr %s1286, 3
        %s1288 = smul.addr %s1287, 8
        %s1289 = scalar_lea.vmem %s5, %s1288
        %p1290 = scmp.lt.s32.totalorder %s86, 1
        %s1291 = scalar_select %p1290, %s86, 1
        %s1292 = smul.addr %s1291, 3
        %s1293 = smul.addr %s1292, 8
        %s1294 = scalar_lea.vmem %s7, %s1293
        %p1295 = scmp.lt.s32.totalorder %s86, 1
        %s1296 = scalar_select %p1295, %s86, 1
        %s1297 = smul.addr %s1296, 2
        %s1298 = smul.addr %s1297, 8
        %s1299 = scalar_lea.vmem %s9, %s1298
        %p1300 = scmp.lt.s32.totalorder %s86, 1
        %s1301 = scalar_select %p1300, %s86, 1
        %s1302 = smul.addr %s1301, 2
        %s1303 = smul.addr %s1302, 8
        %s1304 = scalar_lea.vmem %s11, %s1303
        %p1305 = scmp.lt.s32.totalorder %s86, 1
        %s1306 = scalar_select %p1305, %s86, 1
        %s1307 = smul.addr %s1306, 2
        %s1308 = smul.addr %s1307, 8
        %s1309 = scalar_lea.vmem %s63, %s1308
        %p1310 = scmp.lt.s32.totalorder %s86, 1
        %s1311 = scalar_select %p1310, %s86, 1
        %s1312 = smul.addr %s1311, 2
        %s1313 = smul.addr %s1312, 8
        %s1314 = scalar_lea.vmem %s65, %s1313
        %v1315 = vld [vmem:[%s1279] sm:$0xff]
        %v1316 = vld [vmem:[%s1279 + $0x8] sm:$0xff]
        %v1317 = vld [vmem:[%s1284] sm:$0xff]
        %v1318 = vld [vmem:[%s1284 + $0x8] sm:$0xff]
        %v1319 = vld [vmem:[%s1284 + $0x10] sm:$0xff]
        %v1320 = vld [vmem:[%s1289] sm:$0xff]
        %v1321 = vld [vmem:[%s1289 + $0x8] sm:$0xff]
        %v1322 = vld [vmem:[%s1289 + $0x10] sm:$0xff]
        %v1323 = vld [vmem:[%s1294] sm:$0xff]
        %v1324 = vld [vmem:[%s1294 + $0x8] sm:$0xff]
        %v1325 = vld [vmem:[%s1294 + $0x10] sm:$0xff]
        %v1326 = vld [vmem:[%s1299] sm:$0xff]
        %v1327 = vld [vmem:[%s1299 + $0x8] sm:$0xff]
        %v1328 = vld [vmem:[#allocation2] sm:$0xff]
        %v1329 = vld [vmem:[#allocation2 + $0x8] sm:$0xff]
        %v1330 = vld [vmem:[#allocation2 + $0x10] sm:$0x1]
        %v1331 = vld [vmem:[#allocation4] sm:$0x1]
        %v1333 = vlaneseq
        %v1334 = vshrl.u32 %v1333, 7
        %v1335 = vsub.s32 0, %v1334
        %v1336 = vrot.slane %v1331, %v1335
        %vm1338 = vcmask 138240
        %v1340 = vsel %vm1338, %v1315, 0
        %v1343 = vsel %vm1338, %v1316, 0
        %vm1345 = vcmask 1040384
        %v1347 = vsel %vm1345, %v1330, 0
        %1349 = vmatprep.subr.mxu0 0.0
        %1350 = vmatpush1.msra.mxu0 0.0
        %1351 = vmatprep.subr.mxu0 0.0
        %1352 = vmatpush1.msra.mxu0 0.0
        %1353 = vmatprep.subr.mxu0 0.0
        %1354 = vmatpush1.msra.mxu0 0.0
        %1355 = vmatprep.subr.mxu0 0.0
        %1356 = vmatpush1.msra.mxu0 0.0
        %1357 = vmatprep.subr.mxu0 0.0
        %1358 = vmatpush1.msra.mxu0 0.0
        %1359 = vmatprep.subr.mxu0 0.0
        %1360 = vmatpush1.msra.mxu0 0.0
        %1361 = vmatprep.subr.mxu0 0.0
        %1362 = vmatpush1.msra.mxu0 0.0
        %1363 = vmatprep.subr.mxu0 0.0
        %1364 = vmatpush1.msra.mxu0 0.0
        %1365 = vmatprep.subr.mxu0 0.0
        %1366 = vmatpush1.msra.mxu0 0.0
        %1367 = vmatprep.subr.mxu0 0.0
        %1368 = vmatpush1.msra.mxu0 0.0
        %1369 = vmatprep.subr.mxu0 0.0
        %1370 = vmatpush1.msra.mxu0 0.0
        %1371 = vmatprep.subr.mxu0 0.0
        %1372 = vmatpush1.msra.mxu0 0.0
        %1373 = vmatprep.subr.mxu0 0.0
        %1374 = vmatpush1.msra.mxu0 0.0
        %1375 = vmatprep.subr.mxu0 0.0
        %1376 = vmatpush1.msra.mxu0 %v1347
        %1377 = vmatprep.subr.mxu0 0.0
        %1378 = vmatpush1.msra.mxu0 %v1329
        %1379 = vmatprep.subr.mxu0 0.0
        %1380 = vmatpush1.msra.mxu0 %v1328
        %1381 = vmatprep.subr.mxu0 0.0
        %1382 = vmatpush2.msra.mxu0 0.0
        %1383 = vmatprep.subr.mxu0 0.0
        %1384 = vmatpush2.msra.mxu0 0.0
        %1385 = vmatprep.subr.mxu0 0.0
        %1386 = vmatpush2.msra.mxu0 0.0
        %1387 = vmatprep.subr.mxu0 0.0
        %1388 = vmatpush2.msra.mxu0 0.0
        %1389 = vmatprep.subr.mxu0 0.0
        %1390 = vmatpush2.msra.mxu0 0.0
        %1391 = vmatprep.subr.mxu0 0.0
        %1392 = vmatpush2.msra.mxu0 0.0
        %1393 = vmatprep.subr.mxu0 0.0
        %1394 = vmatpush2.msra.mxu0 0.0
        %1395 = vmatprep.subr.mxu0 0.0
        %1396 = vmatpush2.msra.mxu0 0.0
        %1397 = vmatprep.subr.mxu0 0.0
        %1398 = vmatpush2.msra.mxu0 0.0
        %1399 = vmatprep.subr.mxu0 0.0
        %1400 = vmatpush2.msra.mxu0 0.0
        %1401 = vmatprep.subr.mxu0 0.0
        %1402 = vmatpush2.msra.mxu0 0.0
        %1403 = vmatprep.subr.mxu0 0.0
        %1404 = vmatpush2.msra.mxu0 0.0
        %1405 = vmatprep.subr.mxu0 0.0
        %1406 = vmatpush2.msra.mxu0 0.0
        %1407 = vmatprep.subr.mxu0 0.0
        %1408 = vmatpush2.msra.mxu0 0.0
        %1409 = vmatprep.subr.mxu0 0.0
        %1410 = vmatpush2.msra.mxu0 0.0
        %1411 = vmatprep.subr.mxu0 0.0
        %1412 = vmatpush2.msra.mxu0 0.0
        %1413 = vmatprep.mubr.f32.mxu0 0.0
        %1414 = vmatmul.mubr.f32.gmra.mxu0 %v1340
        %v1415 = vpop.f32.mrf.mxu0
        %v1416 = vadd.f32 %v1336, %v1415
        %v1417 = vpop.f32.mrf.mxu0
        %1418 = vmatprep.mubr.f32.mxu0 0.0
        %1419 = vmatmul.mubr.f32.gmra.mxu0 %v1343
        %v1420 = vpop.f32.mrf.mxu0
        %v1421 = vadd.f32 %v1336, %v1420
        %v1422 = vpop.f32.mrf.mxu0
        %1423 = vdwg.mxu0
        %v1424 = vmax.f32 %v1416, 0.0
        %v1425 = vmax.f32 %v1421, 0.0
        %v1426 = vld [vmem:[%s17] sm:$0xff]
        %v1427 = vld [vmem:[%s17 + $0x8] sm:$0xff]
        %v1428 = vld [vmem:[%s17 + $0x10] sm:$0xff]
        %v1429 = vld [vmem:[%s17 + $0x18] sm:$0xff]
        %v1430 = vld [vmem:[#allocation6] sm:$0x1]
        %v1432 = vlaneseq
        %v1433 = vshrl.u32 %v1432, 7
        %v1434 = vsub.s32 0, %v1433
        %v1435 = vrot.slane %v1430, %v1434
        %vm1437 = vcmask 261120
        %v1439 = vsel %vm1437, %v1424, 0
        %v1442 = vsel %vm1437, %v1425, 0
        %1444 = vmatprep.subr.mxu0 0.0
        %1445 = vmatpush1.msra.mxu0 0.0
        %1446 = vmatprep.subr.mxu0 0.0
        %1447 = vmatpush1.msra.mxu0 0.0
        %1448 = vmatprep.subr.mxu0 0.0
        %1449 = vmatpush1.msra.mxu0 0.0
        %1450 = vmatprep.subr.mxu0 0.0
        %1451 = vmatpush1.msra.mxu0 0.0
        %1452 = vmatprep.subr.mxu0 0.0
        %1453 = vmatpush1.msra.mxu0 0.0
        %1454 = vmatprep.subr.mxu0 0.0
        %1455 = vmatpush1.msra.mxu0 0.0
        %1456 = vmatprep.subr.mxu0 0.0
        %1457 = vmatpush1.msra.mxu0 0.0
        %1458 = vmatprep.subr.mxu0 0.0
        %1459 = vmatpush1.msra.mxu0 0.0
        %1460 = vmatprep.subr.mxu0 0.0
        %1461 = vmatpush1.msra.mxu0 0.0
        %1462 = vmatprep.subr.mxu0 0.0
        %1463 = vmatpush1.msra.mxu0 0.0
        %1464 = vmatprep.subr.mxu0 0.0
        %1465 = vmatpush1.msra.mxu0 0.0
        %1466 = vmatprep.subr.mxu0 0.0
        %1467 = vmatpush1.msra.mxu0 0.0
        %1468 = vmatprep.subr.mxu0 0.0
        %1469 = vmatpush1.msra.mxu0 %v1429
        %1470 = vmatprep.subr.mxu0 0.0
        %1471 = vmatpush1.msra.mxu0 %v1428
        %1472 = vmatprep.subr.mxu0 0.0
        %1473 = vmatpush1.msra.mxu0 %v1427
        %1474 = vmatprep.subr.mxu0 0.0
        %1475 = vmatpush1.msra.mxu0 %v1426
        %1476 = vmatprep.subr.mxu0 0.0
        %1477 = vmatpush2.msra.mxu0 0.0
        %1478 = vmatprep.subr.mxu0 0.0
        %1479 = vmatpush2.msra.mxu0 0.0
        %1480 = vmatprep.subr.mxu0 0.0
        %1481 = vmatpush2.msra.mxu0 0.0
        %1482 = vmatprep.subr.mxu0 0.0
        %1483 = vmatpush2.msra.mxu0 0.0
        %1484 = vmatprep.subr.mxu0 0.0
        %1485 = vmatpush2.msra.mxu0 0.0
        %1486 = vmatprep.subr.mxu0 0.0
        %1487 = vmatpush2.msra.mxu0 0.0
        %1488 = vmatprep.subr.mxu0 0.0
        %1489 = vmatpush2.msra.mxu0 0.0
        %1490 = vmatprep.subr.mxu0 0.0
        %1491 = vmatpush2.msra.mxu0 0.0
        %1492 = vmatprep.subr.mxu0 0.0
        %1493 = vmatpush2.msra.mxu0 0.0
        %1494 = vmatprep.subr.mxu0 0.0
        %1495 = vmatpush2.msra.mxu0 0.0
        %1496 = vmatprep.subr.mxu0 0.0
        %1497 = vmatpush2.msra.mxu0 0.0
        %1498 = vmatprep.subr.mxu0 0.0
        %1499 = vmatpush2.msra.mxu0 0.0
        %1500 = vmatprep.subr.mxu0 0.0
        %1501 = vmatpush2.msra.mxu0 0.0
        %1502 = vmatprep.subr.mxu0 0.0
        %1503 = vmatpush2.msra.mxu0 0.0
        %1504 = vmatprep.subr.mxu0 0.0
        %1505 = vmatpush2.msra.mxu0 0.0
        %1506 = vmatprep.subr.mxu0 0.0
        %1507 = vmatpush2.msra.mxu0 0.0
        %1508 = vmatprep.mubr.f32.mxu0 0.0
        %1509 = vmatmul.mubr.f32.gmra.mxu0 %v1439
        %v1510 = vpop.f32.mrf.mxu0
        %v1511 = vadd.f32 %v1435, %v1510
        %v1512 = vpop.f32.mrf.mxu0
        %1513 = vmatprep.mubr.f32.mxu0 0.0
        %1514 = vmatmul.mubr.f32.gmra.mxu0 %v1442
        %v1515 = vpop.f32.mrf.mxu0
        %v1516 = vadd.f32 %v1435, %v1515
        %v1517 = vpop.f32.mrf.mxu0
        %1518 = vdwg.mxu0
        %v1519 = vmax.f32 %v1511, 0.0
        %v1520 = vmax.f32 %v1516, 0.0
        %v1521 = vld [vmem:[%s21] sm:$0xff]
        %v1522 = vld [vmem:[%s21 + $0x8] sm:$0xff]
        %v1523 = vld [vmem:[%s21 + $0x10] sm:$0xff]
        %v1524 = vld [vmem:[%s21 + $0x18] sm:$0xff]
        %v1525 = vld [vmem:[%s23] sm:$0x1]
        %v1527 = vlaneseq
        %v1528 = vshrl.u32 %v1527, 7
        %v1529 = vsub.s32 0, %v1528
        %v1530 = vrot.slane %v1525, %v1529
        %v1533 = vsel %vm1437, %v1519, 0
        %v1536 = vsel %vm1437, %v1520, 0
        %1538 = vmatprep.subr.mxu0 0.0
        %1539 = vmatpush1.msra.mxu0 0.0
        %1540 = vmatprep.subr.mxu0 0.0
        %1541 = vmatpush1.msra.mxu0 0.0
        %1542 = vmatprep.subr.mxu0 0.0
        %1543 = vmatpush1.msra.mxu0 0.0
        %1544 = vmatprep.subr.mxu0 0.0
        %1545 = vmatpush1.msra.mxu0 0.0
        %1546 = vmatprep.subr.mxu0 0.0
        %1547 = vmatpush1.msra.mxu0 0.0
        %1548 = vmatprep.subr.mxu0 0.0
        %1549 = vmatpush1.msra.mxu0 0.0
        %1550 = vmatprep.subr.mxu0 0.0
        %1551 = vmatpush1.msra.mxu0 0.0
        %1552 = vmatprep.subr.mxu0 0.0
        %1553 = vmatpush1.msra.mxu0 0.0
        %1554 = vmatprep.subr.mxu0 0.0
        %1555 = vmatpush1.msra.mxu0 0.0
        %1556 = vmatprep.subr.mxu0 0.0
        %1557 = vmatpush1.msra.mxu0 0.0
        %1558 = vmatprep.subr.mxu0 0.0
        %1559 = vmatpush1.msra.mxu0 0.0
        %1560 = vmatprep.subr.mxu0 0.0
        %1561 = vmatpush1.msra.mxu0 0.0
        %1562 = vmatprep.subr.mxu0 0.0
        %1563 = vmatpush1.msra.mxu0 %v1524
        %1564 = vmatprep.subr.mxu0 0.0
        %1565 = vmatpush1.msra.mxu0 %v1523
        %1566 = vmatprep.subr.mxu0 0.0
        %1567 = vmatpush1.msra.mxu0 %v1522
        %1568 = vmatprep.subr.mxu0 0.0
        %1569 = vmatpush1.msra.mxu0 %v1521
        %1570 = vmatprep.subr.mxu0 0.0
        %1571 = vmatpush2.msra.mxu0 0.0
        %1572 = vmatprep.subr.mxu0 0.0
        %1573 = vmatpush2.msra.mxu0 0.0
        %1574 = vmatprep.subr.mxu0 0.0
        %1575 = vmatpush2.msra.mxu0 0.0
        %1576 = vmatprep.subr.mxu0 0.0
        %1577 = vmatpush2.msra.mxu0 0.0
        %1578 = vmatprep.subr.mxu0 0.0
        %1579 = vmatpush2.msra.mxu0 0.0
        %1580 = vmatprep.subr.mxu0 0.0
        %1581 = vmatpush2.msra.mxu0 0.0
        %1582 = vmatprep.subr.mxu0 0.0
        %1583 = vmatpush2.msra.mxu0 0.0
        %1584 = vmatprep.subr.mxu0 0.0
        %1585 = vmatpush2.msra.mxu0 0.0
        %1586 = vmatprep.subr.mxu0 0.0
        %1587 = vmatpush2.msra.mxu0 0.0
        %1588 = vmatprep.subr.mxu0 0.0
        %1589 = vmatpush2.msra.mxu0 0.0
        %1590 = vmatprep.subr.mxu0 0.0
        %1591 = vmatpush2.msra.mxu0 0.0
        %1592 = vmatprep.subr.mxu0 0.0
        %1593 = vmatpush2.msra.mxu0 0.0
        %1594 = vmatprep.subr.mxu0 0.0
        %1595 = vmatpush2.msra.mxu0 0.0
        %1596 = vmatprep.subr.mxu0 0.0
        %1597 = vmatpush2.msra.mxu0 0.0
        %1598 = vmatprep.subr.mxu0 0.0
        %1599 = vmatpush2.msra.mxu0 0.0
        %1600 = vmatprep.subr.mxu0 0.0
        %1601 = vmatpush2.msra.mxu0 0.0
        %1602 = vmatprep.mubr.f32.mxu0 0.0
        %1603 = vmatmul.mubr.f32.gmra.mxu0 %v1533
        %v1604 = vpop.f32.mrf.mxu0
        %v1605 = vadd.f32 %v1530, %v1604
        %v1606 = vpop.f32.mrf.mxu0
        %1607 = vmatprep.mubr.f32.mxu0 0.0
        %1608 = vmatmul.mubr.f32.gmra.mxu0 %v1536
        %v1609 = vpop.f32.mrf.mxu0
        %v1610 = vadd.f32 %v1530, %v1609
        %v1611 = vpop.f32.mrf.mxu0
        %1612 = vdwg.mxu0
        %v1613 = vmax.f32 %v1605, 0.0
        %v1614 = vmax.f32 %v1610, 0.0
        %v1615 = vld [vmem:[%s25] sm:$0xff]
        %v1616 = vld [vmem:[%s25 + $0x8] sm:$0xff]
        %v1617 = vld [vmem:[%s25 + $0x10] sm:$0xff]
        %v1618 = vld [vmem:[%s25 + $0x18] sm:$0xff]
        %v1619 = vld [vmem:[%s25 + $0x20] sm:$0xff]
        %v1620 = vld [vmem:[%s25 + $0x28] sm:$0xff]
        %v1621 = vld [vmem:[%s25 + $0x30] sm:$0x1]
        %v1622 = vld [vmem:[#allocation7] sm:$0x1]
        %v1624 = vlaneseq
        %v1625 = vshrl.u32 %v1624, 7
        %v1626 = vsub.s32 0, %v1625
        %v1627 = vrot.slane %v1622, %v1626
        %vm1629 = vcmask 400384
        %v1631 = vsel %vm1629, %v1317, 0
        %v1634 = vsel %vm1629, %v1318, 0
        %v1637 = vsel %vm1629, %v1319, 0
        %v1640 = vsel %vm1345, %v1621, 0
        %1642 = vmatprep.subr.mxu0 0.0
        %1643 = vmatpush1.msra.mxu0 0.0
        %1644 = vmatprep.subr.mxu0 0.0
        %1645 = vmatpush1.msra.mxu0 0.0
        %1646 = vmatprep.subr.mxu0 0.0
        %1647 = vmatpush1.msra.mxu0 0.0
        %1648 = vmatprep.subr.mxu0 0.0
        %1649 = vmatpush1.msra.mxu0 0.0
        %1650 = vmatprep.subr.mxu0 0.0
        %1651 = vmatpush1.msra.mxu0 0.0
        %1652 = vmatprep.subr.mxu0 0.0
        %1653 = vmatpush1.msra.mxu0 0.0
        %1654 = vmatprep.subr.mxu0 0.0
        %1655 = vmatpush1.msra.mxu0 0.0
        %1656 = vmatprep.subr.mxu0 0.0
        %1657 = vmatpush1.msra.mxu0 0.0
        %1658 = vmatprep.subr.mxu0 0.0
        %1659 = vmatpush1.msra.mxu0 0.0
        %1660 = vmatprep.subr.mxu0 0.0
        %1661 = vmatpush1.msra.mxu0 %v1640
        %1662 = vmatprep.subr.mxu0 0.0
        %1663 = vmatpush1.msra.mxu0 %v1620
        %1664 = vmatprep.subr.mxu0 0.0
        %1665 = vmatpush1.msra.mxu0 %v1619
        %1666 = vmatprep.subr.mxu0 0.0
        %1667 = vmatpush1.msra.mxu0 %v1618
        %1668 = vmatprep.subr.mxu0 0.0
        %1669 = vmatpush1.msra.mxu0 %v1617
        %1670 = vmatprep.subr.mxu0 0.0
        %1671 = vmatpush1.msra.mxu0 %v1616
        %1672 = vmatprep.subr.mxu0 0.0
        %1673 = vmatpush1.msra.mxu0 %v1615
        %1674 = vmatprep.subr.mxu0 0.0
        %1675 = vmatpush2.msra.mxu0 0.0
        %1676 = vmatprep.subr.mxu0 0.0
        %1677 = vmatpush2.msra.mxu0 0.0
        %1678 = vmatprep.subr.mxu0 0.0
        %1679 = vmatpush2.msra.mxu0 0.0
        %1680 = vmatprep.subr.mxu0 0.0
        %1681 = vmatpush2.msra.mxu0 0.0
        %1682 = vmatprep.subr.mxu0 0.0
        %1683 = vmatpush2.msra.mxu0 0.0
        %1684 = vmatprep.subr.mxu0 0.0
        %1685 = vmatpush2.msra.mxu0 0.0
        %1686 = vmatprep.subr.mxu0 0.0
        %1687 = vmatpush2.msra.mxu0 0.0
        %1688 = vmatprep.subr.mxu0 0.0
        %1689 = vmatpush2.msra.mxu0 0.0
        %1690 = vmatprep.subr.mxu0 0.0
        %1691 = vmatpush2.msra.mxu0 0.0
        %1692 = vmatprep.subr.mxu0 0.0
        %1693 = vmatpush2.msra.mxu0 0.0
        %1694 = vmatprep.subr.mxu0 0.0
        %1695 = vmatpush2.msra.mxu0 0.0
        %1696 = vmatprep.subr.mxu0 0.0
        %1697 = vmatpush2.msra.mxu0 0.0
        %1698 = vmatprep.subr.mxu0 0.0
        %1699 = vmatpush2.msra.mxu0 0.0
        %1700 = vmatprep.subr.mxu0 0.0
        %1701 = vmatpush2.msra.mxu0 0.0
        %1702 = vmatprep.subr.mxu0 0.0
        %1703 = vmatpush2.msra.mxu0 0.0
        %1704 = vmatprep.subr.mxu0 0.0
        %1705 = vmatpush2.msra.mxu0 0.0
        %1706 = vmatprep.mubr.f32.mxu0 0.0
        %1707 = vmatmul.mubr.f32.gmra.mxu0 %v1631
        %v1708 = vpop.f32.mrf.mxu0
        %v1709 = vadd.f32 %v1627, %v1708
        %v1710 = vpop.f32.mrf.mxu0
        %1711 = vmatprep.mubr.f32.mxu0 0.0
        %1712 = vmatmul.mubr.f32.gmra.mxu0 %v1634
        %v1713 = vpop.f32.mrf.mxu0
        %v1714 = vadd.f32 %v1627, %v1713
        %v1715 = vpop.f32.mrf.mxu0
        %1716 = vmatprep.mubr.f32.mxu0 0.0
        %1717 = vmatmul.mubr.f32.gmra.mxu0 %v1637
        %v1718 = vpop.f32.mrf.mxu0
        %v1719 = vadd.f32 %v1627, %v1718
        %v1720 = vpop.f32.mrf.mxu0
        %1721 = vdwg.mxu0
        %v1722 = vmax.f32 %v1709, 0.0
        %v1723 = vmax.f32 %v1714, 0.0
        %v1724 = vmax.f32 %v1719, 0.0
        %v1725 = vld [vmem:[%s29] sm:$0xff]
        %v1726 = vld [vmem:[%s29 + $0x8] sm:$0xff]
        %v1727 = vld [vmem:[%s29 + $0x10] sm:$0xff]
        %v1728 = vld [vmem:[%s29 + $0x18] sm:$0xff]
        %v1729 = vld [vmem:[#allocation9] sm:$0x1]
        %v1731 = vlaneseq
        %v1732 = vshrl.u32 %v1731, 7
        %v1733 = vsub.s32 0, %v1732
        %v1734 = vrot.slane %v1729, %v1733
        %v1737 = vsel %vm1437, %v1722, 0
        %v1740 = vsel %vm1437, %v1723, 0
        %v1743 = vsel %vm1437, %v1724, 0
        %1745 = vmatprep.subr.mxu0 0.0
        %1746 = vmatpush1.msra.mxu0 0.0
        %1747 = vmatprep.subr.mxu0 0.0
        %1748 = vmatpush1.msra.mxu0 0.0
        %1749 = vmatprep.subr.mxu0 0.0
        %1750 = vmatpush1.msra.mxu0 0.0
        %1751 = vmatprep.subr.mxu0 0.0
        %1752 = vmatpush1.msra.mxu0 0.0
        %1753 = vmatprep.subr.mxu0 0.0
        %1754 = vmatpush1.msra.mxu0 0.0
        %1755 = vmatprep.subr.mxu0 0.0
        %1756 = vmatpush1.msra.mxu0 0.0
        %1757 = vmatprep.subr.mxu0 0.0
        %1758 = vmatpush1.msra.mxu0 0.0
        %1759 = vmatprep.subr.mxu0 0.0
        %1760 = vmatpush1.msra.mxu0 0.0
        %1761 = vmatprep.subr.mxu0 0.0
        %1762 = vmatpush1.msra.mxu0 0.0
        %1763 = vmatprep.subr.mxu0 0.0
        %1764 = vmatpush1.msra.mxu0 0.0
        %1765 = vmatprep.subr.mxu0 0.0
        %1766 = vmatpush1.msra.mxu0 0.0
        %1767 = vmatprep.subr.mxu0 0.0
        %1768 = vmatpush1.msra.mxu0 0.0
        %1769 = vmatprep.subr.mxu0 0.0
        %1770 = vmatpush1.msra.mxu0 %v1728
        %1771 = vmatprep.subr.mxu0 0.0
        %1772 = vmatpush1.msra.mxu0 %v1727
        %1773 = vmatprep.subr.mxu0 0.0
        %1774 = vmatpush1.msra.mxu0 %v1726
        %1775 = vmatprep.subr.mxu0 0.0
        %1776 = vmatpush1.msra.mxu0 %v1725
        %1777 = vmatprep.subr.mxu0 0.0
        %1778 = vmatpush2.msra.mxu0 0.0
        %1779 = vmatprep.subr.mxu0 0.0
        %1780 = vmatpush2.msra.mxu0 0.0
        %1781 = vmatprep.subr.mxu0 0.0
        %1782 = vmatpush2.msra.mxu0 0.0
        %1783 = vmatprep.subr.mxu0 0.0
        %1784 = vmatpush2.msra.mxu0 0.0
        %1785 = vmatprep.subr.mxu0 0.0
        %1786 = vmatpush2.msra.mxu0 0.0
        %1787 = vmatprep.subr.mxu0 0.0
        %1788 = vmatpush2.msra.mxu0 0.0
        %1789 = vmatprep.subr.mxu0 0.0
        %1790 = vmatpush2.msra.mxu0 0.0
        %1791 = vmatprep.subr.mxu0 0.0
        %1792 = vmatpush2.msra.mxu0 0.0
        %1793 = vmatprep.subr.mxu0 0.0
        %1794 = vmatpush2.msra.mxu0 0.0
        %1795 = vmatprep.subr.mxu0 0.0
        %1796 = vmatpush2.msra.mxu0 0.0
        %1797 = vmatprep.subr.mxu0 0.0
        %1798 = vmatpush2.msra.mxu0 0.0
        %1799 = vmatprep.subr.mxu0 0.0
        %1800 = vmatpush2.msra.mxu0 0.0
        %1801 = vmatprep.subr.mxu0 0.0
        %1802 = vmatpush2.msra.mxu0 0.0
        %1803 = vmatprep.subr.mxu0 0.0
        %1804 = vmatpush2.msra.mxu0 0.0
        %1805 = vmatprep.subr.mxu0 0.0
        %1806 = vmatpush2.msra.mxu0 0.0
        %1807 = vmatprep.subr.mxu0 0.0
        %1808 = vmatpush2.msra.mxu0 0.0
        %1809 = vmatprep.mubr.f32.mxu0 0.0
        %1810 = vmatmul.mubr.f32.gmra.mxu0 %v1737
        %v1811 = vpop.f32.mrf.mxu0
        %v1812 = vadd.f32 %v1734, %v1811
        %v1813 = vpop.f32.mrf.mxu0
        %1814 = vmatprep.mubr.f32.mxu0 0.0
        %1815 = vmatmul.mubr.f32.gmra.mxu0 %v1740
        %v1816 = vpop.f32.mrf.mxu0
        %v1817 = vadd.f32 %v1734, %v1816
        %v1818 = vpop.f32.mrf.mxu0
        %1819 = vmatprep.mubr.f32.mxu0 0.0
        %1820 = vmatmul.mubr.f32.gmra.mxu0 %v1743
        %v1821 = vpop.f32.mrf.mxu0
        %v1822 = vadd.f32 %v1734, %v1821
        %v1823 = vpop.f32.mrf.mxu0
        %1824 = vdwg.mxu0
        %v1825 = vmax.f32 %v1812, 0.0
        %v1826 = vmax.f32 %v1817, 0.0
        %v1827 = vmax.f32 %v1822, 0.0
        %v1828 = vld [vmem:[%s33] sm:$0xff]
        %v1829 = vld [vmem:[%s33 + $0x8] sm:$0xff]
        %v1830 = vld [vmem:[%s33 + $0x10] sm:$0xff]
        %v1831 = vld [vmem:[%s33 + $0x18] sm:$0xff]
        %v1832 = vld [vmem:[#allocation10] sm:$0x1]
        %v1834 = vlaneseq
        %v1835 = vshrl.u32 %v1834, 7
        %v1836 = vsub.s32 0, %v1835
        %v1837 = vrot.slane %v1832, %v1836
        %v1840 = vsel %vm1437, %v1825, 0
        %v1843 = vsel %vm1437, %v1826, 0
        %v1846 = vsel %vm1437, %v1827, 0
        %1848 = vmatprep.subr.mxu0 0.0
        %1849 = vmatpush1.msra.mxu0 0.0
        %1850 = vmatprep.subr.mxu0 0.0
        %1851 = vmatpush1.msra.mxu0 0.0
        %1852 = vmatprep.subr.mxu0 0.0
        %1853 = vmatpush1.msra.mxu0 0.0
        %1854 = vmatprep.subr.mxu0 0.0
        %1855 = vmatpush1.msra.mxu0 0.0
        %1856 = vmatprep.subr.mxu0 0.0
        %1857 = vmatpush1.msra.mxu0 0.0
        %1858 = vmatprep.subr.mxu0 0.0
        %1859 = vmatpush1.msra.mxu0 0.0
        %1860 = vmatprep.subr.mxu0 0.0
        %1861 = vmatpush1.msra.mxu0 0.0
        %1862 = vmatprep.subr.mxu0 0.0
        %1863 = vmatpush1.msra.mxu0 0.0
        %1864 = vmatprep.subr.mxu0 0.0
        %1865 = vmatpush1.msra.mxu0 0.0
        %1866 = vmatprep.subr.mxu0 0.0
        %1867 = vmatpush1.msra.mxu0 0.0
        %1868 = vmatprep.subr.mxu0 0.0
        %1869 = vmatpush1.msra.mxu0 0.0
        %1870 = vmatprep.subr.mxu0 0.0
        %1871 = vmatpush1.msra.mxu0 0.0
        %1872 = vmatprep.subr.mxu0 0.0
        %1873 = vmatpush1.msra.mxu0 %v1831
        %1874 = vmatprep.subr.mxu0 0.0
        %1875 = vmatpush1.msra.mxu0 %v1830
        %1876 = vmatprep.subr.mxu0 0.0
        %1877 = vmatpush1.msra.mxu0 %v1829
        %1878 = vmatprep.subr.mxu0 0.0
        %1879 = vmatpush1.msra.mxu0 %v1828
        %1880 = vmatprep.subr.mxu0 0.0
        %1881 = vmatpush2.msra.mxu0 0.0
        %1882 = vmatprep.subr.mxu0 0.0
        %1883 = vmatpush2.msra.mxu0 0.0
        %1884 = vmatprep.subr.mxu0 0.0
        %1885 = vmatpush2.msra.mxu0 0.0
        %1886 = vmatprep.subr.mxu0 0.0
        %1887 = vmatpush2.msra.mxu0 0.0
        %1888 = vmatprep.subr.mxu0 0.0
        %1889 = vmatpush2.msra.mxu0 0.0
        %1890 = vmatprep.subr.mxu0 0.0
        %1891 = vmatpush2.msra.mxu0 0.0
        %1892 = vmatprep.subr.mxu0 0.0
        %1893 = vmatpush2.msra.mxu0 0.0
        %1894 = vmatprep.subr.mxu0 0.0
        %1895 = vmatpush2.msra.mxu0 0.0
        %1896 = vmatprep.subr.mxu0 0.0
        %1897 = vmatpush2.msra.mxu0 0.0
        %1898 = vmatprep.subr.mxu0 0.0
        %1899 = vmatpush2.msra.mxu0 0.0
        %1900 = vmatprep.subr.mxu0 0.0
        %1901 = vmatpush2.msra.mxu0 0.0
        %1902 = vmatprep.subr.mxu0 0.0
        %1903 = vmatpush2.msra.mxu0 0.0
        %1904 = vmatprep.subr.mxu0 0.0
        %1905 = vmatpush2.msra.mxu0 0.0
        %1906 = vmatprep.subr.mxu0 0.0
        %1907 = vmatpush2.msra.mxu0 0.0
        %1908 = vmatprep.subr.mxu0 0.0
        %1909 = vmatpush2.msra.mxu0 0.0
        %1910 = vmatprep.subr.mxu0 0.0
        %1911 = vmatpush2.msra.mxu0 0.0
        %1912 = vmatprep.mubr.f32.mxu0 0.0
        %1913 = vmatmul.mubr.f32.gmra.mxu0 %v1840
        %v1914 = vpop.f32.mrf.mxu0
        %v1915 = vadd.f32 %v1837, %v1914
        %v1916 = vpop.f32.mrf.mxu0
        %1917 = vmatprep.mubr.f32.mxu0 0.0
        %1918 = vmatmul.mubr.f32.gmra.mxu0 %v1843
        %v1919 = vpop.f32.mrf.mxu0
        %v1920 = vadd.f32 %v1837, %v1919
        %v1921 = vpop.f32.mrf.mxu0
        %1922 = vmatprep.mubr.f32.mxu0 0.0
        %1923 = vmatmul.mubr.f32.gmra.mxu0 %v1846
        %v1924 = vpop.f32.mrf.mxu0
        %v1925 = vadd.f32 %v1837, %v1924
        %v1926 = vpop.f32.mrf.mxu0
        %1927 = vdwg.mxu0
        %v1928 = vmax.f32 %v1915, 0.0
        %v1929 = vmax.f32 %v1920, 0.0
        %v1930 = vmax.f32 %v1925, 0.0
        %v1931 = vld [vmem:[#allocation12] sm:$0xff]
        %v1932 = vld [vmem:[#allocation12 + $0x8] sm:$0xff]
        %v1933 = vld [vmem:[#allocation12 + $0x10] sm:$0xff]
        %v1934 = vld [vmem:[#allocation12 + $0x18] sm:$0xff]
        %v1935 = vld [vmem:[#allocation16] sm:$0x1]
        %v1937 = vlaneseq
        %v1938 = vshrl.u32 %v1937, 7
        %v1939 = vsub.s32 0, %v1938
        %v1940 = vrot.slane %v1935, %v1939
        %v1943 = vsel %vm1437, %v1928, 0
        %v1946 = vsel %vm1437, %v1929, 0
        %v1949 = vsel %vm1437, %v1930, 0
        %1951 = vmatprep.subr.mxu0 0.0
        %1952 = vmatpush1.msra.mxu0 0.0
        %1953 = vmatprep.subr.mxu0 0.0
        %1954 = vmatpush1.msra.mxu0 0.0
        %1955 = vmatprep.subr.mxu0 0.0
        %1956 = vmatpush1.msra.mxu0 0.0
        %1957 = vmatprep.subr.mxu0 0.0
        %1958 = vmatpush1.msra.mxu0 0.0
        %1959 = vmatprep.subr.mxu0 0.0
        %1960 = vmatpush1.msra.mxu0 0.0
        %1961 = vmatprep.subr.mxu0 0.0
        %1962 = vmatpush1.msra.mxu0 0.0
        %1963 = vmatprep.subr.mxu0 0.0
        %1964 = vmatpush1.msra.mxu0 0.0
        %1965 = vmatprep.subr.mxu0 0.0
        %1966 = vmatpush1.msra.mxu0 0.0
        %1967 = vmatprep.subr.mxu0 0.0
        %1968 = vmatpush1.msra.mxu0 0.0
        %1969 = vmatprep.subr.mxu0 0.0
        %1970 = vmatpush1.msra.mxu0 0.0
        %1971 = vmatprep.subr.mxu0 0.0
        %1972 = vmatpush1.msra.mxu0 0.0
        %1973 = vmatprep.subr.mxu0 0.0
        %1974 = vmatpush1.msra.mxu0 0.0
        %1975 = vmatprep.subr.mxu0 0.0
        %1976 = vmatpush1.msra.mxu0 %v1934
        %1977 = vmatprep.subr.mxu0 0.0
        %1978 = vmatpush1.msra.mxu0 %v1933
        %1979 = vmatprep.subr.mxu0 0.0
        %1980 = vmatpush1.msra.mxu0 %v1932
        %1981 = vmatprep.subr.mxu0 0.0
        %1982 = vmatpush1.msra.mxu0 %v1931
        %1983 = vmatprep.subr.mxu0 0.0
        %1984 = vmatpush2.msra.mxu0 0.0
        %1985 = vmatprep.subr.mxu0 0.0
        %1986 = vmatpush2.msra.mxu0 0.0
        %1987 = vmatprep.subr.mxu0 0.0
        %1988 = vmatpush2.msra.mxu0 0.0
        %1989 = vmatprep.subr.mxu0 0.0
        %1990 = vmatpush2.msra.mxu0 0.0
        %1991 = vmatprep.subr.mxu0 0.0
        %1992 = vmatpush2.msra.mxu0 0.0
        %1993 = vmatprep.subr.mxu0 0.0
        %1994 = vmatpush2.msra.mxu0 0.0
        %1995 = vmatprep.subr.mxu0 0.0
        %1996 = vmatpush2.msra.mxu0 0.0
        %1997 = vmatprep.subr.mxu0 0.0
        %1998 = vmatpush2.msra.mxu0 0.0
        %1999 = vmatprep.subr.mxu0 0.0
        %2000 = vmatpush2.msra.mxu0 0.0
        %2001 = vmatprep.subr.mxu0 0.0
        %2002 = vmatpush2.msra.mxu0 0.0
        %2003 = vmatprep.subr.mxu0 0.0
        %2004 = vmatpush2.msra.mxu0 0.0
        %2005 = vmatprep.subr.mxu0 0.0
        %2006 = vmatpush2.msra.mxu0 0.0
        %2007 = vmatprep.subr.mxu0 0.0
        %2008 = vmatpush2.msra.mxu0 0.0
        %2009 = vmatprep.subr.mxu0 0.0
        %2010 = vmatpush2.msra.mxu0 0.0
        %2011 = vmatprep.subr.mxu0 0.0
        %2012 = vmatpush2.msra.mxu0 0.0
        %2013 = vmatprep.subr.mxu0 0.0
        %2014 = vmatpush2.msra.mxu0 0.0
        %2015 = vmatprep.mubr.f32.mxu0 0.0
        %2016 = vmatmul.mubr.f32.gmra.mxu0 %v1943
        %v2017 = vpop.f32.mrf.mxu0
        %v2018 = vadd.f32 %v1940, %v2017
        %v2019 = vpop.f32.mrf.mxu0
        %2020 = vmatprep.mubr.f32.mxu0 0.0
        %2021 = vmatmul.mubr.f32.gmra.mxu0 %v1946
        %v2022 = vpop.f32.mrf.mxu0
        %v2023 = vadd.f32 %v1940, %v2022
        %v2024 = vpop.f32.mrf.mxu0
        %2025 = vmatprep.mubr.f32.mxu0 0.0
        %2026 = vmatmul.mubr.f32.gmra.mxu0 %v1949
        %v2027 = vpop.f32.mrf.mxu0
        %v2028 = vadd.f32 %v1940, %v2027
        %v2029 = vpop.f32.mrf.mxu0
        %2030 = vdwg.mxu0
        %v2031 = vld [vmem:[#allocation18] sm:$0xff]
        %v2032 = vld [vmem:[#allocation18 + $0x8] sm:$0xff]
        %v2033 = vld [vmem:[#allocation18 + $0x10] sm:$0xff]
        %v2034 = vld [vmem:[#allocation18 + $0x18] sm:$0xff]
        %v2035 = vld [vmem:[#allocation21] sm:$0x1]
        %v2037 = vlaneseq
        %v2038 = vshrl.u32 %v2037, 7
        %v2039 = vsub.s32 0, %v2038
        %v2040 = vrot.slane %v2035, %v2039
        %v2043 = vsel %vm1437, %v1613, 0
        %v2046 = vsel %vm1437, %v1614, 0
        %2048 = vmatprep.subr.mxu0 0.0
        %2049 = vmatpush1.msra.mxu0 0.0
        %2050 = vmatprep.subr.mxu0 0.0
        %2051 = vmatpush1.msra.mxu0 0.0
        %2052 = vmatprep.subr.mxu0 0.0
        %2053 = vmatpush1.msra.mxu0 0.0
        %2054 = vmatprep.subr.mxu0 0.0
        %2055 = vmatpush1.msra.mxu0 0.0
        %2056 = vmatprep.subr.mxu0 0.0
        %2057 = vmatpush1.msra.mxu0 0.0
        %2058 = vmatprep.subr.mxu0 0.0
        %2059 = vmatpush1.msra.mxu0 0.0
        %2060 = vmatprep.subr.mxu0 0.0
        %2061 = vmatpush1.msra.mxu0 0.0
        %2062 = vmatprep.subr.mxu0 0.0
        %2063 = vmatpush1.msra.mxu0 0.0
        %2064 = vmatprep.subr.mxu0 0.0
        %2065 = vmatpush1.msra.mxu0 0.0
        %2066 = vmatprep.subr.mxu0 0.0
        %2067 = vmatpush1.msra.mxu0 0.0
        %2068 = vmatprep.subr.mxu0 0.0
        %2069 = vmatpush1.msra.mxu0 0.0
        %2070 = vmatprep.subr.mxu0 0.0
        %2071 = vmatpush1.msra.mxu0 0.0
        %2072 = vmatprep.subr.mxu0 0.0
        %2073 = vmatpush1.msra.mxu0 %v2034
        %2074 = vmatprep.subr.mxu0 0.0
        %2075 = vmatpush1.msra.mxu0 %v2033
        %2076 = vmatprep.subr.mxu0 0.0
        %2077 = vmatpush1.msra.mxu0 %v2032
        %2078 = vmatprep.subr.mxu0 0.0
        %2079 = vmatpush1.msra.mxu0 %v2031
        %2080 = vmatprep.subr.mxu0 0.0
        %2081 = vmatpush2.msra.mxu0 0.0
        %2082 = vmatprep.subr.mxu0 0.0
        %2083 = vmatpush2.msra.mxu0 0.0
        %2084 = vmatprep.subr.mxu0 0.0
        %2085 = vmatpush2.msra.mxu0 0.0
        %2086 = vmatprep.subr.mxu0 0.0
        %2087 = vmatpush2.msra.mxu0 0.0
        %2088 = vmatprep.subr.mxu0 0.0
        %2089 = vmatpush2.msra.mxu0 0.0
        %2090 = vmatprep.subr.mxu0 0.0
        %2091 = vmatpush2.msra.mxu0 0.0
        %2092 = vmatprep.subr.mxu0 0.0
        %2093 = vmatpush2.msra.mxu0 0.0
        %2094 = vmatprep.subr.mxu0 0.0
        %2095 = vmatpush2.msra.mxu0 0.0
        %2096 = vmatprep.subr.mxu0 0.0
        %2097 = vmatpush2.msra.mxu0 0.0
        %2098 = vmatprep.subr.mxu0 0.0
        %2099 = vmatpush2.msra.mxu0 0.0
        %2100 = vmatprep.subr.mxu0 0.0
        %2101 = vmatpush2.msra.mxu0 0.0
        %2102 = vmatprep.subr.mxu0 0.0
        %2103 = vmatpush2.msra.mxu0 0.0
        %2104 = vmatprep.subr.mxu0 0.0
        %2105 = vmatpush2.msra.mxu0 0.0
        %2106 = vmatprep.subr.mxu0 0.0
        %2107 = vmatpush2.msra.mxu0 0.0
        %2108 = vmatprep.subr.mxu0 0.0
        %2109 = vmatpush2.msra.mxu0 0.0
        %2110 = vmatprep.subr.mxu0 0.0
        %2111 = vmatpush2.msra.mxu0 0.0
        %2112 = vmatprep.mubr.f32.mxu0 0.0
        %2113 = vmatmul.mubr.f32.gmra.mxu0 %v2043
        %v2114 = vpop.f32.mrf.mxu0
        %v2115 = vadd.f32 %v2040, %v2114
        %v2116 = vpop.f32.mrf.mxu0
        %2117 = vmatprep.mubr.f32.mxu0 0.0
        %2118 = vmatmul.mubr.f32.gmra.mxu0 %v2046
        %v2119 = vpop.f32.mrf.mxu0
        %v2120 = vadd.f32 %v2040, %v2119
        %v2121 = vpop.f32.mrf.mxu0
        %2122 = vdwg.mxu0
        %vm2123 = vcmask 130048
        %v2125 = vsel %vm2123, %v1320, 0
        %v2128 = vsel %vm2123, %v1321, 0
        %v2131 = vsel %vm2123, %v1322, 0
        %2133 = vmatprep.subr.mxu0 0.0
        %2134 = vmatpush1.msra.mxu0 0.0
        %2135 = vmatprep.subr.mxu0 0.0
        %2136 = vmatpush1.msra.mxu0 0.0
        %2137 = vmatprep.subr.mxu0 0.0
        %2138 = vmatpush1.msra.mxu0 0.0
        %2139 = vmatprep.subr.mxu0 0.0
        %2140 = vmatpush1.msra.mxu0 0.0
        %2141 = vmatprep.subr.mxu0 0.0
        %2142 = vmatpush1.msra.mxu0 0.0
        %2143 = vmatprep.subr.mxu0 0.0
        %2144 = vmatpush1.msra.mxu0 0.0
        %2145 = vmatprep.subr.mxu0 0.0
        %2146 = vmatpush1.msra.mxu0 0.0
        %2147 = vmatprep.subr.mxu0 0.0
        %2148 = vmatpush1.msra.mxu0 0.0
        %2149 = vmatprep.subr.mxu0 0.0
        %2150 = vmatpush1.msra.mxu0 0.0
        %2151 = vmatprep.subr.mxu0 0.0
        %2152 = vmatpush1.msra.mxu0 0.0
        %2153 = vmatprep.subr.mxu0 0.0
        %2154 = vmatpush1.msra.mxu0 0.0
        %2155 = vmatprep.subr.mxu0 0.0
        %2156 = vmatpush1.msra.mxu0 0.0
        %2157 = vmatprep.subr.mxu0 0.0
        %2158 = vmatpush1.msra.mxu0 0.0
        %2159 = vmatprep.subr.mxu0 0.0
        %2160 = vmatpush1.msra.mxu0 0.0
        %2161 = vmatprep.subr.mxu0 0.0
        %2162 = vmatpush1.msra.mxu0 %v1614
        %2163 = vmatprep.subr.mxu0 0.0
        %2164 = vmatpush1.msra.mxu0 %v1613
        %2165 = vmatprep.subr.mxu0 0.0
        %2166 = vmatpush2.msra.mxu0 0.0
        %2167 = vmatprep.subr.mxu0 0.0
        %2168 = vmatpush2.msra.mxu0 0.0
        %2169 = vmatprep.subr.mxu0 0.0
        %2170 = vmatpush2.msra.mxu0 0.0
        %2171 = vmatprep.subr.mxu0 0.0
        %2172 = vmatpush2.msra.mxu0 0.0
        %2173 = vmatprep.subr.mxu0 0.0
        %2174 = vmatpush2.msra.mxu0 0.0
        %2175 = vmatprep.subr.mxu0 0.0
        %2176 = vmatpush2.msra.mxu0 0.0
        %2177 = vmatprep.subr.mxu0 0.0
        %2178 = vmatpush2.msra.mxu0 0.0
        %2179 = vmatprep.subr.mxu0 0.0
        %2180 = vmatpush2.msra.mxu0 0.0
        %2181 = vmatprep.subr.mxu0 0.0
        %2182 = vmatpush2.msra.mxu0 0.0
        %2183 = vmatprep.subr.mxu0 0.0
        %2184 = vmatpush2.msra.mxu0 0.0
        %2185 = vmatprep.subr.mxu0 0.0
        %2186 = vmatpush2.msra.mxu0 0.0
        %2187 = vmatprep.subr.mxu0 0.0
        %2188 = vmatpush2.msra.mxu0 0.0
        %2189 = vmatprep.subr.mxu0 0.0
        %2190 = vmatpush2.msra.mxu0 0.0
        %2191 = vmatprep.subr.mxu0 0.0
        %2192 = vmatpush2.msra.mxu0 0.0
        %2193 = vmatprep.subr.mxu0 0.0
        %2194 = vmatpush2.msra.mxu0 0.0
        %2195 = vmatprep.subr.mxu0 0.0
        %2196 = vmatpush2.msra.mxu0 0.0
        %2197 = vmatprep.mubr.f32.mxu0 0.0
        %2198 = vmatmul.mubr.f32.gmra.mxu0 %v2125
        %v2199 = vpop.f32.mrf.mxu0
        %v2200 = vadd.f32 0.0, %v2199
        %v2201 = vpop.f32.mrf.mxu0
        %2202 = vmatprep.mubr.f32.mxu0 0.0
        %2203 = vmatmul.mubr.f32.gmra.mxu0 %v2128
        %v2204 = vpop.f32.mrf.mxu0
        %v2205 = vadd.f32 0.0, %v2204
        %v2206 = vpop.f32.mrf.mxu0
        %2207 = vmatprep.mubr.f32.mxu0 0.0
        %2208 = vmatmul.mubr.f32.gmra.mxu0 %v2131
        %v2209 = vpop.f32.mrf.mxu0
        %v2210 = vadd.f32 0.0, %v2209
        %v2211 = vpop.f32.mrf.mxu0
        %2212 = vdwg.mxu0
        %v2214 = vsel %vm2123, %v1323, 0
        %v2217 = vsel %vm2123, %v1324, 0
        %v2220 = vsel %vm2123, %v1325, 0
        %2222 = vmatprep.subr.mxu0 0.0
        %2223 = vmatpush1.msra.mxu0 0.0
        %2224 = vmatprep.subr.mxu0 0.0
        %2225 = vmatpush1.msra.mxu0 0.0
        %2226 = vmatprep.subr.mxu0 0.0
        %2227 = vmatpush1.msra.mxu0 0.0
        %2228 = vmatprep.subr.mxu0 0.0
        %2229 = vmatpush1.msra.mxu0 0.0
        %2230 = vmatprep.subr.mxu0 0.0
        %2231 = vmatpush1.msra.mxu0 0.0
        %2232 = vmatprep.subr.mxu0 0.0
        %2233 = vmatpush1.msra.mxu0 0.0
        %2234 = vmatprep.subr.mxu0 0.0
        %2235 = vmatpush1.msra.mxu0 0.0
        %2236 = vmatprep.subr.mxu0 0.0
        %2237 = vmatpush1.msra.mxu0 0.0
        %2238 = vmatprep.subr.mxu0 0.0
        %2239 = vmatpush1.msra.mxu0 0.0
        %2240 = vmatprep.subr.mxu0 0.0
        %2241 = vmatpush1.msra.mxu0 0.0
        %2242 = vmatprep.subr.mxu0 0.0
        %2243 = vmatpush1.msra.mxu0 0.0
        %2244 = vmatprep.subr.mxu0 0.0
        %2245 = vmatpush1.msra.mxu0 0.0
        %2246 = vmatprep.subr.mxu0 0.0
        %2247 = vmatpush1.msra.mxu0 0.0
        %2248 = vmatprep.subr.mxu0 0.0
        %2249 = vmatpush1.msra.mxu0 0.0
        %2250 = vmatprep.subr.mxu0 0.0
        %2251 = vmatpush1.msra.mxu0 %v1614
        %2252 = vmatprep.subr.mxu0 0.0
        %2253 = vmatpush1.msra.mxu0 %v1613
        %2254 = vmatprep.subr.mxu0 0.0
        %2255 = vmatpush2.msra.mxu0 0.0
        %2256 = vmatprep.subr.mxu0 0.0
        %2257 = vmatpush2.msra.mxu0 0.0
        %2258 = vmatprep.subr.mxu0 0.0
        %2259 = vmatpush2.msra.mxu0 0.0
        %2260 = vmatprep.subr.mxu0 0.0
        %2261 = vmatpush2.msra.mxu0 0.0
        %2262 = vmatprep.subr.mxu0 0.0
        %2263 = vmatpush2.msra.mxu0 0.0
        %2264 = vmatprep.subr.mxu0 0.0
        %2265 = vmatpush2.msra.mxu0 0.0
        %2266 = vmatprep.subr.mxu0 0.0
        %2267 = vmatpush2.msra.mxu0 0.0
        %2268 = vmatprep.subr.mxu0 0.0
        %2269 = vmatpush2.msra.mxu0 0.0
        %2270 = vmatprep.subr.mxu0 0.0
        %2271 = vmatpush2.msra.mxu0 0.0
        %2272 = vmatprep.subr.mxu0 0.0
        %2273 = vmatpush2.msra.mxu0 0.0
        %2274 = vmatprep.subr.mxu0 0.0
        %2275 = vmatpush2.msra.mxu0 0.0
        %2276 = vmatprep.subr.mxu0 0.0
        %2277 = vmatpush2.msra.mxu0 0.0
        %2278 = vmatprep.subr.mxu0 0.0
        %2279 = vmatpush2.msra.mxu0 0.0
        %2280 = vmatprep.subr.mxu0 0.0
        %2281 = vmatpush2.msra.mxu0 0.0
        %2282 = vmatprep.subr.mxu0 0.0
        %2283 = vmatpush2.msra.mxu0 0.0
        %2284 = vmatprep.subr.mxu0 0.0
        %2285 = vmatpush2.msra.mxu0 0.0
        %2286 = vmatprep.mubr.f32.mxu0 0.0
        %2287 = vmatmul.mubr.f32.gmra.mxu0 %v2214
        %v2288 = vpop.f32.mrf.mxu0
        %v2289 = vadd.f32 0.0, %v2288
        %v2290 = vpop.f32.mrf.mxu0
        %2291 = vmatprep.mubr.f32.mxu0 0.0
        %2292 = vmatmul.mubr.f32.gmra.mxu0 %v2217
        %v2293 = vpop.f32.mrf.mxu0
        %v2294 = vadd.f32 0.0, %v2293
        %v2295 = vpop.f32.mrf.mxu0
        %2296 = vmatprep.mubr.f32.mxu0 0.0
        %2297 = vmatmul.mubr.f32.gmra.mxu0 %v2220
        %v2298 = vpop.f32.mrf.mxu0
        %v2299 = vadd.f32 0.0, %v2298
        %v2300 = vpop.f32.mrf.mxu0
        %2301 = vdwg.mxu0
        %v2302 = vld [vmem:[#allocation13] sm:$0xff]
        %v2303 = vld [vmem:[#allocation13 + $0x8] sm:$0xff]
        %v2304 = vld [vmem:[#allocation13 + $0x10] sm:$0xff]
        %v2305 = vld [vmem:[#allocation13 + $0x18] sm:$0xff]
        %v2307 = vsel %vm1437, %v2200, 0
        %v2310 = vsel %vm1437, %v2205, 0
        %v2313 = vsel %vm1437, %v2210, 0
        %2315 = vmatprep.subr.mxu0 0.0
        %2316 = vmatpush1.msra.mxu0 0.0
        %2317 = vmatprep.subr.mxu0 0.0
        %2318 = vmatpush1.msra.mxu0 0.0
        %2319 = vmatprep.subr.mxu0 0.0
        %2320 = vmatpush1.msra.mxu0 0.0
        %2321 = vmatprep.subr.mxu0 0.0
        %2322 = vmatpush1.msra.mxu0 0.0
        %2323 = vmatprep.subr.mxu0 0.0
        %2324 = vmatpush1.msra.mxu0 0.0
        %2325 = vmatprep.subr.mxu0 0.0
        %2326 = vmatpush1.msra.mxu0 0.0
        %2327 = vmatprep.subr.mxu0 0.0
        %2328 = vmatpush1.msra.mxu0 0.0
        %2329 = vmatprep.subr.mxu0 0.0
        %2330 = vmatpush1.msra.mxu0 0.0
        %2331 = vmatprep.subr.mxu0 0.0
        %2332 = vmatpush1.msra.mxu0 0.0
        %2333 = vmatprep.subr.mxu0 0.0
        %2334 = vmatpush1.msra.mxu0 0.0
        %2335 = vmatprep.subr.mxu0 0.0
        %2336 = vmatpush1.msra.mxu0 0.0
        %2337 = vmatprep.subr.mxu0 0.0
        %2338 = vmatpush1.msra.mxu0 0.0
        %2339 = vmatprep.subr.mxu0 0.0
        %2340 = vmatpush1.msra.mxu0 %v2305
        %2341 = vmatprep.subr.mxu0 0.0
        %2342 = vmatpush1.msra.mxu0 %v2304
        %2343 = vmatprep.subr.mxu0 0.0
        %2344 = vmatpush1.msra.mxu0 %v2303
        %2345 = vmatprep.subr.mxu0 0.0
        %2346 = vmatpush1.msra.mxu0 %v2302
        %2347 = vmatprep.subr.mxu0 0.0
        %2348 = vmatpush2.msra.mxu0 0.0
        %2349 = vmatprep.subr.mxu0 0.0
        %2350 = vmatpush2.msra.mxu0 0.0
        %2351 = vmatprep.subr.mxu0 0.0
        %2352 = vmatpush2.msra.mxu0 0.0
        %2353 = vmatprep.subr.mxu0 0.0
        %2354 = vmatpush2.msra.mxu0 0.0
        %2355 = vmatprep.subr.mxu0 0.0
        %2356 = vmatpush2.msra.mxu0 0.0
        %2357 = vmatprep.subr.mxu0 0.0
        %2358 = vmatpush2.msra.mxu0 0.0
        %2359 = vmatprep.subr.mxu0 0.0
        %2360 = vmatpush2.msra.mxu0 0.0
        %2361 = vmatprep.subr.mxu0 0.0
        %2362 = vmatpush2.msra.mxu0 0.0
        %2363 = vmatprep.subr.mxu0 0.0
        %2364 = vmatpush2.msra.mxu0 0.0
        %2365 = vmatprep.subr.mxu0 0.0
        %2366 = vmatpush2.msra.mxu0 0.0
        %2367 = vmatprep.subr.mxu0 0.0
        %2368 = vmatpush2.msra.mxu0 0.0
        %2369 = vmatprep.subr.mxu0 0.0
        %2370 = vmatpush2.msra.mxu0 0.0
        %2371 = vmatprep.subr.mxu0 0.0
        %2372 = vmatpush2.msra.mxu0 0.0
        %2373 = vmatprep.subr.mxu0 0.0
        %2374 = vmatpush2.msra.mxu0 0.0
        %2375 = vmatprep.subr.mxu0 0.0
        %2376 = vmatpush2.msra.mxu0 0.0
        %2377 = vmatprep.subr.mxu0 0.0
        %2378 = vmatpush2.msra.mxu0 0.0
        %2379 = vmatprep.mubr.f32.mxu0 0.0
        %2380 = vmatmul.mubr.f32.gmra.mxu0 %v2307
        %v2381 = vpop.f32.mrf.mxu0
        %v2382 = vadd.f32 0.0, %v2381
        %v2383 = vpop.f32.mrf.mxu0
        %2384 = vmatprep.mubr.f32.mxu0 0.0
        %2385 = vmatmul.mubr.f32.gmra.mxu0 %v2310
        %v2386 = vpop.f32.mrf.mxu0
        %v2387 = vadd.f32 0.0, %v2386
        %v2388 = vpop.f32.mrf.mxu0
        %2389 = vmatprep.mubr.f32.mxu0 0.0
        %2390 = vmatmul.mubr.f32.gmra.mxu0 %v2313
        %v2391 = vpop.f32.mrf.mxu0
        %v2392 = vadd.f32 0.0, %v2391
        %v2393 = vpop.f32.mrf.mxu0
        %2394 = vdwg.mxu0
        %v2395 = vadd.f32 %v2018, %v2382
        %v2396 = vadd.f32 %v2023, %v2387
        %v2397 = vadd.f32 %v2028, %v2392
        %v2398 = vld [vmem:[#allocation15] sm:$0xff]
        %v2399 = vld [vmem:[#allocation15 + $0x8] sm:$0xff]
        %v2400 = vld [vmem:[#allocation15 + $0x10] sm:$0xff]
        %v2401 = vld [vmem:[#allocation15 + $0x18] sm:$0xff]
        %v2403 = vsel %vm1437, %v2289, 0
        %v2406 = vsel %vm1437, %v2294, 0
        %v2409 = vsel %vm1437, %v2299, 0
        %2411 = vmatprep.subr.mxu0 0.0
        %2412 = vmatpush1.msra.mxu0 0.0
        %2413 = vmatprep.subr.mxu0 0.0
        %2414 = vmatpush1.msra.mxu0 0.0
        %2415 = vmatprep.subr.mxu0 0.0
        %2416 = vmatpush1.msra.mxu0 0.0
        %2417 = vmatprep.subr.mxu0 0.0
        %2418 = vmatpush1.msra.mxu0 0.0
        %2419 = vmatprep.subr.mxu0 0.0
        %2420 = vmatpush1.msra.mxu0 0.0
        %2421 = vmatprep.subr.mxu0 0.0
        %2422 = vmatpush1.msra.mxu0 0.0
        %2423 = vmatprep.subr.mxu0 0.0
        %2424 = vmatpush1.msra.mxu0 0.0
        %2425 = vmatprep.subr.mxu0 0.0
        %2426 = vmatpush1.msra.mxu0 0.0
        %2427 = vmatprep.subr.mxu0 0.0
        %2428 = vmatpush1.msra.mxu0 0.0
        %2429 = vmatprep.subr.mxu0 0.0
        %2430 = vmatpush1.msra.mxu0 0.0
        %2431 = vmatprep.subr.mxu0 0.0
        %2432 = vmatpush1.msra.mxu0 0.0
        %2433 = vmatprep.subr.mxu0 0.0
        %2434 = vmatpush1.msra.mxu0 0.0
        %2435 = vmatprep.subr.mxu0 0.0
        %2436 = vmatpush1.msra.mxu0 %v2401
        %2437 = vmatprep.subr.mxu0 0.0
        %2438 = vmatpush1.msra.mxu0 %v2400
        %2439 = vmatprep.subr.mxu0 0.0
        %2440 = vmatpush1.msra.mxu0 %v2399
        %2441 = vmatprep.subr.mxu0 0.0
        %2442 = vmatpush1.msra.mxu0 %v2398
        %2443 = vmatprep.subr.mxu0 0.0
        %2444 = vmatpush2.msra.mxu0 0.0
        %2445 = vmatprep.subr.mxu0 0.0
        %2446 = vmatpush2.msra.mxu0 0.0
        %2447 = vmatprep.subr.mxu0 0.0
        %2448 = vmatpush2.msra.mxu0 0.0
        %2449 = vmatprep.subr.mxu0 0.0
        %2450 = vmatpush2.msra.mxu0 0.0
        %2451 = vmatprep.subr.mxu0 0.0
        %2452 = vmatpush2.msra.mxu0 0.0
        %2453 = vmatprep.subr.mxu0 0.0
        %2454 = vmatpush2.msra.mxu0 0.0
        %2455 = vmatprep.subr.mxu0 0.0
        %2456 = vmatpush2.msra.mxu0 0.0
        %2457 = vmatprep.subr.mxu0 0.0
        %2458 = vmatpush2.msra.mxu0 0.0
        %2459 = vmatprep.subr.mxu0 0.0
        %2460 = vmatpush2.msra.mxu0 0.0
        %2461 = vmatprep.subr.mxu0 0.0
        %2462 = vmatpush2.msra.mxu0 0.0
        %2463 = vmatprep.subr.mxu0 0.0
        %2464 = vmatpush2.msra.mxu0 0.0
        %2465 = vmatprep.subr.mxu0 0.0
        %2466 = vmatpush2.msra.mxu0 0.0
        %2467 = vmatprep.subr.mxu0 0.0
        %2468 = vmatpush2.msra.mxu0 0.0
        %2469 = vmatprep.subr.mxu0 0.0
        %2470 = vmatpush2.msra.mxu0 0.0
        %2471 = vmatprep.subr.mxu0 0.0
        %2472 = vmatpush2.msra.mxu0 0.0
        %2473 = vmatprep.subr.mxu0 0.0
        %2474 = vmatpush2.msra.mxu0 0.0
        %2475 = vmatprep.mubr.f32.mxu0 0.0
        %2476 = vmatmul.mubr.f32.gmra.mxu0 %v2403
        %v2477 = vpop.f32.mrf.mxu0
        %v2478 = vadd.f32 0.0, %v2477
        %v2479 = vpop.f32.mrf.mxu0
        %2480 = vmatprep.mubr.f32.mxu0 0.0
        %2481 = vmatmul.mubr.f32.gmra.mxu0 %v2406
        %v2482 = vpop.f32.mrf.mxu0
        %v2483 = vadd.f32 0.0, %v2482
        %v2484 = vpop.f32.mrf.mxu0
        %2485 = vmatprep.mubr.f32.mxu0 0.0
        %2486 = vmatmul.mubr.f32.gmra.mxu0 %v2409
        %v2487 = vpop.f32.mrf.mxu0
        %v2488 = vadd.f32 0.0, %v2487
        %v2489 = vpop.f32.mrf.mxu0
        %2490 = vdwg.mxu0
        %v2491 = vadd.f32 %v2395, %v2478
        %v2492 = vadd.f32 %v2396, %v2483
        %v2493 = vadd.f32 %v2397, %v2488
        %v2494 = vmax.f32 %v2491, 0.0
        %v2495 = vmax.f32 %v2492, 0.0
        %v2496 = vmax.f32 %v2493, 0.0
        %vm2497 = vcmask 195584
        %v2499 = vsel %vm2497, %v1326, 0
        %v2502 = vsel %vm2497, %v1327, 0
        %2504 = vmatprep.subr.mxu0 0.0
        %2505 = vmatpush1.msra.mxu0 0.0
        %2506 = vmatprep.subr.mxu0 0.0
        %2507 = vmatpush1.msra.mxu0 0.0
        %2508 = vmatprep.subr.mxu0 0.0
        %2509 = vmatpush1.msra.mxu0 0.0
        %2510 = vmatprep.subr.mxu0 0.0
        %2511 = vmatpush1.msra.mxu0 0.0
        %2512 = vmatprep.subr.mxu0 0.0
        %2513 = vmatpush1.msra.mxu0 0.0
        %2514 = vmatprep.subr.mxu0 0.0
        %2515 = vmatpush1.msra.mxu0 0.0
        %2516 = vmatprep.subr.mxu0 0.0
        %2517 = vmatpush1.msra.mxu0 0.0
        %2518 = vmatprep.subr.mxu0 0.0
        %2519 = vmatpush1.msra.mxu0 0.0
        %2520 = vmatprep.subr.mxu0 0.0
        %2521 = vmatpush1.msra.mxu0 0.0
        %2522 = vmatprep.subr.mxu0 0.0
        %2523 = vmatpush1.msra.mxu0 0.0
        %2524 = vmatprep.subr.mxu0 0.0
        %2525 = vmatpush1.msra.mxu0 0.0
        %2526 = vmatprep.subr.mxu0 0.0
        %2527 = vmatpush1.msra.mxu0 0.0
        %2528 = vmatprep.subr.mxu0 0.0
        %2529 = vmatpush1.msra.mxu0 0.0
        %2530 = vmatprep.subr.mxu0 0.0
        %2531 = vmatpush1.msra.mxu0 %v2496
        %2532 = vmatprep.subr.mxu0 0.0
        %2533 = vmatpush1.msra.mxu0 %v2495
        %2534 = vmatprep.subr.mxu0 0.0
        %2535 = vmatpush1.msra.mxu0 %v2494
        %2536 = vmatprep.subr.mxu0 0.0
        %2537 = vmatpush2.msra.mxu0 0.0
        %2538 = vmatprep.subr.mxu0 0.0
        %2539 = vmatpush2.msra.mxu0 0.0
        %2540 = vmatprep.subr.mxu0 0.0
        %2541 = vmatpush2.msra.mxu0 0.0
        %2542 = vmatprep.subr.mxu0 0.0
        %2543 = vmatpush2.msra.mxu0 0.0
        %2544 = vmatprep.subr.mxu0 0.0
        %2545 = vmatpush2.msra.mxu0 0.0
        %2546 = vmatprep.subr.mxu0 0.0
        %2547 = vmatpush2.msra.mxu0 0.0
        %2548 = vmatprep.subr.mxu0 0.0
        %2549 = vmatpush2.msra.mxu0 0.0
        %2550 = vmatprep.subr.mxu0 0.0
        %2551 = vmatpush2.msra.mxu0 0.0
        %2552 = vmatprep.subr.mxu0 0.0
        %2553 = vmatpush2.msra.mxu0 0.0
        %2554 = vmatprep.subr.mxu0 0.0
        %2555 = vmatpush2.msra.mxu0 0.0
        %2556 = vmatprep.subr.mxu0 0.0
        %2557 = vmatpush2.msra.mxu0 0.0
        %2558 = vmatprep.subr.mxu0 0.0
        %2559 = vmatpush2.msra.mxu0 0.0
        %2560 = vmatprep.subr.mxu0 0.0
        %2561 = vmatpush2.msra.mxu0 0.0
        %2562 = vmatprep.subr.mxu0 0.0
        %2563 = vmatpush2.msra.mxu0 0.0
        %2564 = vmatprep.subr.mxu0 0.0
        %2565 = vmatpush2.msra.mxu0 0.0
        %2566 = vmatprep.subr.mxu0 0.0
        %2567 = vmatpush2.msra.mxu0 0.0
        %2568 = vmatprep.mubr.f32.mxu0 0.0
        %2569 = vmatmul.mubr.f32.gmra.mxu0 %v2499
        %v2570 = vpop.f32.mrf.mxu0
        %v2571 = vadd.f32 0.0, %v2570
        %v2572 = vpop.f32.mrf.mxu0
        %2573 = vmatprep.mubr.f32.mxu0 0.0
        %2574 = vmatmul.mubr.f32.gmra.mxu0 %v2502
        %v2575 = vpop.f32.mrf.mxu0
        %v2576 = vadd.f32 0.0, %v2575
        %v2577 = vpop.f32.mrf.mxu0
        %2578 = vdwg.mxu0
        %v2579 = vld [vmem:[#allocation19] sm:$0xff]
        %v2580 = vld [vmem:[#allocation19 + $0x8] sm:$0xff]
        %v2581 = vld [vmem:[#allocation19 + $0x10] sm:$0xff]
        %v2582 = vld [vmem:[#allocation19 + $0x18] sm:$0xff]
        %v2584 = vsel %vm1437, %v2571, 0
        %v2587 = vsel %vm1437, %v2576, 0
        %2589 = vmatprep.subr.mxu0 0.0
        %2590 = vmatpush1.msra.mxu0 0.0
        %2591 = vmatprep.subr.mxu0 0.0
        %2592 = vmatpush1.msra.mxu0 0.0
        %2593 = vmatprep.subr.mxu0 0.0
        %2594 = vmatpush1.msra.mxu0 0.0
        %2595 = vmatprep.subr.mxu0 0.0
        %2596 = vmatpush1.msra.mxu0 0.0
        %2597 = vmatprep.subr.mxu0 0.0
        %2598 = vmatpush1.msra.mxu0 0.0
        %2599 = vmatprep.subr.mxu0 0.0
        %2600 = vmatpush1.msra.mxu0 0.0
        %2601 = vmatprep.subr.mxu0 0.0
        %2602 = vmatpush1.msra.mxu0 0.0
        %2603 = vmatprep.subr.mxu0 0.0
        %2604 = vmatpush1.msra.mxu0 0.0
        %2605 = vmatprep.subr.mxu0 0.0
        %2606 = vmatpush1.msra.mxu0 0.0
        %2607 = vmatprep.subr.mxu0 0.0
        %2608 = vmatpush1.msra.mxu0 0.0
        %2609 = vmatprep.subr.mxu0 0.0
        %2610 = vmatpush1.msra.mxu0 0.0
        %2611 = vmatprep.subr.mxu0 0.0
        %2612 = vmatpush1.msra.mxu0 0.0
        %2613 = vmatprep.subr.mxu0 0.0
        %2614 = vmatpush1.msra.mxu0 %v2582
        %2615 = vmatprep.subr.mxu0 0.0
        %2616 = vmatpush1.msra.mxu0 %v2581
        %2617 = vmatprep.subr.mxu0 0.0
        %2618 = vmatpush1.msra.mxu0 %v2580
        %2619 = vmatprep.subr.mxu0 0.0
        %2620 = vmatpush1.msra.mxu0 %v2579
        %2621 = vmatprep.subr.mxu0 0.0
        %2622 = vmatpush2.msra.mxu0 0.0
        %2623 = vmatprep.subr.mxu0 0.0
        %2624 = vmatpush2.msra.mxu0 0.0
        %2625 = vmatprep.subr.mxu0 0.0
        %2626 = vmatpush2.msra.mxu0 0.0
        %2627 = vmatprep.subr.mxu0 0.0
        %2628 = vmatpush2.msra.mxu0 0.0
        %2629 = vmatprep.subr.mxu0 0.0
        %2630 = vmatpush2.msra.mxu0 0.0
        %2631 = vmatprep.subr.mxu0 0.0
        %2632 = vmatpush2.msra.mxu0 0.0
        %2633 = vmatprep.subr.mxu0 0.0
        %2634 = vmatpush2.msra.mxu0 0.0
        %2635 = vmatprep.subr.mxu0 0.0
        %2636 = vmatpush2.msra.mxu0 0.0
        %2637 = vmatprep.subr.mxu0 0.0
        %2638 = vmatpush2.msra.mxu0 0.0
        %2639 = vmatprep.subr.mxu0 0.0
        %2640 = vmatpush2.msra.mxu0 0.0
        %2641 = vmatprep.subr.mxu0 0.0
        %2642 = vmatpush2.msra.mxu0 0.0
        %2643 = vmatprep.subr.mxu0 0.0
        %2644 = vmatpush2.msra.mxu0 0.0
        %2645 = vmatprep.subr.mxu0 0.0
        %2646 = vmatpush2.msra.mxu0 0.0
        %2647 = vmatprep.subr.mxu0 0.0
        %2648 = vmatpush2.msra.mxu0 0.0
        %2649 = vmatprep.subr.mxu0 0.0
        %2650 = vmatpush2.msra.mxu0 0.0
        %2651 = vmatprep.subr.mxu0 0.0
        %2652 = vmatpush2.msra.mxu0 0.0
        %2653 = vmatprep.mubr.f32.mxu0 0.0
        %2654 = vmatmul.mubr.f32.gmra.mxu0 %v2584
        %v2655 = vpop.f32.mrf.mxu0
        %v2656 = vadd.f32 0.0, %v2655
        %v2657 = vpop.f32.mrf.mxu0
        %2658 = vmatprep.mubr.f32.mxu0 0.0
        %2659 = vmatmul.mubr.f32.gmra.mxu0 %v2587
        %v2660 = vpop.f32.mrf.mxu0
        %v2661 = vadd.f32 0.0, %v2660
        %v2662 = vpop.f32.mrf.mxu0
        %2663 = vdwg.mxu0
        %v2664 = vadd.f32 %v2115, %v2656
        %v2665 = vadd.f32 %v2120, %v2661
        %v2666 = vadd.f32 %v2664, %v1613
        %v2667 = vadd.f32 %v2665, %v1614
        %v2668 = vmax.f32 %v2666, 0.0
        %v2669 = vmax.f32 %v2667, 0.0
        %2670 = vmatprep.subr.mxu0 0.0
        %2671 = vmatpush1.msra.mxu0 0.0
        %2672 = vmatprep.subr.mxu0 0.0
        %2673 = vmatpush1.msra.mxu0 0.0
        %2674 = vmatprep.subr.mxu0 0.0
        %2675 = vmatpush1.msra.mxu0 0.0
        %2676 = vmatprep.subr.mxu0 0.0
        %2677 = vmatpush1.msra.mxu0 0.0
        %2678 = vmatprep.subr.mxu0 0.0
        %2679 = vmatpush1.msra.mxu0 0.0
        %2680 = vmatprep.subr.mxu0 0.0
        %2681 = vmatpush1.msra.mxu0 0.0
        %2682 = vmatprep.subr.mxu0 0.0
        %2683 = vmatpush1.msra.mxu0 0.0
        %2684 = vmatprep.subr.mxu0 0.0
        %2685 = vmatpush1.msra.mxu0 0.0
        %2686 = vmatprep.subr.mxu0 0.0
        %2687 = vmatpush1.msra.mxu0 0.0
        %2688 = vmatprep.subr.mxu0 0.0
        %2689 = vmatpush1.msra.mxu0 0.0
        %2690 = vmatprep.subr.mxu0 0.0
        %2691 = vmatpush1.msra.mxu0 0.0
        %2692 = vmatprep.subr.mxu0 0.0
        %2693 = vmatpush1.msra.mxu0 0.0
        %2694 = vmatprep.subr.mxu0 0.0
        %2695 = vmatpush1.msra.mxu0 0.0
        %2696 = vmatprep.subr.mxu0 0.0
        %2697 = vmatpush1.msra.mxu0 0.0
        %2698 = vmatprep.subr.mxu0 0.0
        %2699 = vmatpush1.msra.mxu0 %v2669
        %2700 = vmatprep.subr.mxu0 0.0
        %2701 = vmatpush1.msra.mxu0 %v2668
        %2702 = vmatprep.subr.mxu0 0.0
        %2703 = vmatpush2.msra.mxu0 0.0
        %2704 = vmatprep.subr.mxu0 0.0
        %2705 = vmatpush2.msra.mxu0 0.0
        %2706 = vmatprep.subr.mxu0 0.0
        %2707 = vmatpush2.msra.mxu0 0.0
        %2708 = vmatprep.subr.mxu0 0.0
        %2709 = vmatpush2.msra.mxu0 0.0
        %2710 = vmatprep.subr.mxu0 0.0
        %2711 = vmatpush2.msra.mxu0 0.0
        %2712 = vmatprep.subr.mxu0 0.0
        %2713 = vmatpush2.msra.mxu0 0.0
        %2714 = vmatprep.subr.mxu0 0.0
        %2715 = vmatpush2.msra.mxu0 0.0
        %2716 = vmatprep.subr.mxu0 0.0
        %2717 = vmatpush2.msra.mxu0 0.0
        %2718 = vmatprep.subr.mxu0 0.0
        %2719 = vmatpush2.msra.mxu0 0.0
        %2720 = vmatprep.subr.mxu0 0.0
        %2721 = vmatpush2.msra.mxu0 0.0
        %2722 = vmatprep.subr.mxu0 0.0
        %2723 = vmatpush2.msra.mxu0 0.0
        %2724 = vmatprep.subr.mxu0 0.0
        %2725 = vmatpush2.msra.mxu0 0.0
        %2726 = vmatprep.subr.mxu0 0.0
        %2727 = vmatpush2.msra.mxu0 0.0
        %2728 = vmatprep.subr.mxu0 0.0
        %2729 = vmatpush2.msra.mxu0 0.0
        %2730 = vmatprep.subr.mxu0 0.0
        %2731 = vmatpush2.msra.mxu0 0.0
        %2732 = vmatprep.subr.mxu0 0.0
        %2733 = vmatpush2.msra.mxu0 0.0
        %2734 = vmatprep.mubr.f32.mxu0 0.0
        %2735 = vmatmul.mubr.f32.gmra.mxu0 %v2125
        %v2736 = vpop.f32.mrf.mxu0
        %v2737 = vadd.f32 0.0, %v2736
        %v2738 = vpop.f32.mrf.mxu0
        %2739 = vmatprep.mubr.f32.mxu0 0.0
        %2740 = vmatmul.mubr.f32.gmra.mxu0 %v2128
        %v2741 = vpop.f32.mrf.mxu0
        %v2742 = vadd.f32 0.0, %v2741
        %v2743 = vpop.f32.mrf.mxu0
        %2744 = vmatprep.mubr.f32.mxu0 0.0
        %2745 = vmatmul.mubr.f32.gmra.mxu0 %v2131
        %v2746 = vpop.f32.mrf.mxu0
        %v2747 = vadd.f32 0.0, %v2746
        %v2748 = vpop.f32.mrf.mxu0
        %2749 = vdwg.mxu0
        %2750 = vmatprep.subr.mxu0 0.0
        %2751 = vmatpush1.msra.mxu0 0.0
        %2752 = vmatprep.subr.mxu0 0.0
        %2753 = vmatpush1.msra.mxu0 0.0
        %2754 = vmatprep.subr.mxu0 0.0
        %2755 = vmatpush1.msra.mxu0 0.0
        %2756 = vmatprep.subr.mxu0 0.0
        %2757 = vmatpush1.msra.mxu0 0.0
        %2758 = vmatprep.subr.mxu0 0.0
        %2759 = vmatpush1.msra.mxu0 0.0
        %2760 = vmatprep.subr.mxu0 0.0
        %2761 = vmatpush1.msra.mxu0 0.0
        %2762 = vmatprep.subr.mxu0 0.0
        %2763 = vmatpush1.msra.mxu0 0.0
        %2764 = vmatprep.subr.mxu0 0.0
        %2765 = vmatpush1.msra.mxu0 0.0
        %2766 = vmatprep.subr.mxu0 0.0
        %2767 = vmatpush1.msra.mxu0 0.0
        %2768 = vmatprep.subr.mxu0 0.0
        %2769 = vmatpush1.msra.mxu0 0.0
        %2770 = vmatprep.subr.mxu0 0.0
        %2771 = vmatpush1.msra.mxu0 0.0
        %2772 = vmatprep.subr.mxu0 0.0
        %2773 = vmatpush1.msra.mxu0 0.0
        %2774 = vmatprep.subr.mxu0 0.0
        %2775 = vmatpush1.msra.mxu0 0.0
        %2776 = vmatprep.subr.mxu0 0.0
        %2777 = vmatpush1.msra.mxu0 0.0
        %2778 = vmatprep.subr.mxu0 0.0
        %2779 = vmatpush1.msra.mxu0 %v2669
        %2780 = vmatprep.subr.mxu0 0.0
        %2781 = vmatpush1.msra.mxu0 %v2668
        %2782 = vmatprep.subr.mxu0 0.0
        %2783 = vmatpush2.msra.mxu0 0.0
        %2784 = vmatprep.subr.mxu0 0.0
        %2785 = vmatpush2.msra.mxu0 0.0
        %2786 = vmatprep.subr.mxu0 0.0
        %2787 = vmatpush2.msra.mxu0 0.0
        %2788 = vmatprep.subr.mxu0 0.0
        %2789 = vmatpush2.msra.mxu0 0.0
        %2790 = vmatprep.subr.mxu0 0.0
        %2791 = vmatpush2.msra.mxu0 0.0
        %2792 = vmatprep.subr.mxu0 0.0
        %2793 = vmatpush2.msra.mxu0 0.0
        %2794 = vmatprep.subr.mxu0 0.0
        %2795 = vmatpush2.msra.mxu0 0.0
        %2796 = vmatprep.subr.mxu0 0.0
        %2797 = vmatpush2.msra.mxu0 0.0
        %2798 = vmatprep.subr.mxu0 0.0
        %2799 = vmatpush2.msra.mxu0 0.0
        %2800 = vmatprep.subr.mxu0 0.0
        %2801 = vmatpush2.msra.mxu0 0.0
        %2802 = vmatprep.subr.mxu0 0.0
        %2803 = vmatpush2.msra.mxu0 0.0
        %2804 = vmatprep.subr.mxu0 0.0
        %2805 = vmatpush2.msra.mxu0 0.0
        %2806 = vmatprep.subr.mxu0 0.0
        %2807 = vmatpush2.msra.mxu0 0.0
        %2808 = vmatprep.subr.mxu0 0.0
        %2809 = vmatpush2.msra.mxu0 0.0
        %2810 = vmatprep.subr.mxu0 0.0
        %2811 = vmatpush2.msra.mxu0 0.0
        %2812 = vmatprep.subr.mxu0 0.0
        %2813 = vmatpush2.msra.mxu0 0.0
        %2814 = vmatprep.mubr.f32.mxu0 0.0
        %2815 = vmatmul.mubr.f32.gmra.mxu0 %v2214
        %v2816 = vpop.f32.mrf.mxu0
        %v2817 = vadd.f32 0.0, %v2816
        %v2818 = vpop.f32.mrf.mxu0
        %2819 = vmatprep.mubr.f32.mxu0 0.0
        %2820 = vmatmul.mubr.f32.gmra.mxu0 %v2217
        %v2821 = vpop.f32.mrf.mxu0
        %v2822 = vadd.f32 0.0, %v2821
        %v2823 = vpop.f32.mrf.mxu0
        %2824 = vmatprep.mubr.f32.mxu0 0.0
        %2825 = vmatmul.mubr.f32.gmra.mxu0 %v2220
        %v2826 = vpop.f32.mrf.mxu0
        %v2827 = vadd.f32 0.0, %v2826
        %v2828 = vpop.f32.mrf.mxu0
        %2829 = vdwg.mxu0
        %v2831 = vsel %vm1437, %v2737, 0
        %v2834 = vsel %vm1437, %v2742, 0
        %v2837 = vsel %vm1437, %v2747, 0
        %2839 = vmatprep.subr.mxu0 0.0
        %2840 = vmatpush1.msra.mxu0 0.0
        %2841 = vmatprep.subr.mxu0 0.0
        %2842 = vmatpush1.msra.mxu0 0.0
        %2843 = vmatprep.subr.mxu0 0.0
        %2844 = vmatpush1.msra.mxu0 0.0
        %2845 = vmatprep.subr.mxu0 0.0
        %2846 = vmatpush1.msra.mxu0 0.0
        %2847 = vmatprep.subr.mxu0 0.0
        %2848 = vmatpush1.msra.mxu0 0.0
        %2849 = vmatprep.subr.mxu0 0.0
        %2850 = vmatpush1.msra.mxu0 0.0
        %2851 = vmatprep.subr.mxu0 0.0
        %2852 = vmatpush1.msra.mxu0 0.0
        %2853 = vmatprep.subr.mxu0 0.0
        %2854 = vmatpush1.msra.mxu0 0.0
        %2855 = vmatprep.subr.mxu0 0.0
        %2856 = vmatpush1.msra.mxu0 0.0
        %2857 = vmatprep.subr.mxu0 0.0
        %2858 = vmatpush1.msra.mxu0 0.0
        %2859 = vmatprep.subr.mxu0 0.0
        %2860 = vmatpush1.msra.mxu0 0.0
        %2861 = vmatprep.subr.mxu0 0.0
        %2862 = vmatpush1.msra.mxu0 0.0
        %2863 = vmatprep.subr.mxu0 0.0
        %2864 = vmatpush1.msra.mxu0 %v2305
        %2865 = vmatprep.subr.mxu0 0.0
        %2866 = vmatpush1.msra.mxu0 %v2304
        %2867 = vmatprep.subr.mxu0 0.0
        %2868 = vmatpush1.msra.mxu0 %v2303
        %2869 = vmatprep.subr.mxu0 0.0
        %2870 = vmatpush1.msra.mxu0 %v2302
        %2871 = vmatprep.subr.mxu0 0.0
        %2872 = vmatpush2.msra.mxu0 0.0
        %2873 = vmatprep.subr.mxu0 0.0
        %2874 = vmatpush2.msra.mxu0 0.0
        %2875 = vmatprep.subr.mxu0 0.0
        %2876 = vmatpush2.msra.mxu0 0.0
        %2877 = vmatprep.subr.mxu0 0.0
        %2878 = vmatpush2.msra.mxu0 0.0
        %2879 = vmatprep.subr.mxu0 0.0
        %2880 = vmatpush2.msra.mxu0 0.0
        %2881 = vmatprep.subr.mxu0 0.0
        %2882 = vmatpush2.msra.mxu0 0.0
        %2883 = vmatprep.subr.mxu0 0.0
        %2884 = vmatpush2.msra.mxu0 0.0
        %2885 = vmatprep.subr.mxu0 0.0
        %2886 = vmatpush2.msra.mxu0 0.0
        %2887 = vmatprep.subr.mxu0 0.0
        %2888 = vmatpush2.msra.mxu0 0.0
        %2889 = vmatprep.subr.mxu0 0.0
        %2890 = vmatpush2.msra.mxu0 0.0
        %2891 = vmatprep.subr.mxu0 0.0
        %2892 = vmatpush2.msra.mxu0 0.0
        %2893 = vmatprep.subr.mxu0 0.0
        %2894 = vmatpush2.msra.mxu0 0.0
        %2895 = vmatprep.subr.mxu0 0.0
        %2896 = vmatpush2.msra.mxu0 0.0
        %2897 = vmatprep.subr.mxu0 0.0
        %2898 = vmatpush2.msra.mxu0 0.0
        %2899 = vmatprep.subr.mxu0 0.0
        %2900 = vmatpush2.msra.mxu0 0.0
        %2901 = vmatprep.subr.mxu0 0.0
        %2902 = vmatpush2.msra.mxu0 0.0
        %2903 = vmatprep.mubr.f32.mxu0 0.0
        %2904 = vmatmul.mubr.f32.gmra.mxu0 %v2831
        %v2905 = vpop.f32.mrf.mxu0
        %v2906 = vadd.f32 0.0, %v2905
        %v2907 = vpop.f32.mrf.mxu0
        %2908 = vmatprep.mubr.f32.mxu0 0.0
        %2909 = vmatmul.mubr.f32.gmra.mxu0 %v2834
        %v2910 = vpop.f32.mrf.mxu0
        %v2911 = vadd.f32 0.0, %v2910
        %v2912 = vpop.f32.mrf.mxu0
        %2913 = vmatprep.mubr.f32.mxu0 0.0
        %2914 = vmatmul.mubr.f32.gmra.mxu0 %v2837
        %v2915 = vpop.f32.mrf.mxu0
        %v2916 = vadd.f32 0.0, %v2915
        %v2917 = vpop.f32.mrf.mxu0
        %2918 = vdwg.mxu0
        %v2919 = vadd.f32 %v2018, %v2906
        %v2920 = vadd.f32 %v2023, %v2911
        %v2921 = vadd.f32 %v2028, %v2916
        %v2923 = vsel %vm1437, %v2817, 0
        %v2926 = vsel %vm1437, %v2822, 0
        %v2929 = vsel %vm1437, %v2827, 0
        %2931 = vmatprep.subr.mxu0 0.0
        %2932 = vmatpush1.msra.mxu0 0.0
        %2933 = vmatprep.subr.mxu0 0.0
        %2934 = vmatpush1.msra.mxu0 0.0
        %2935 = vmatprep.subr.mxu0 0.0
        %2936 = vmatpush1.msra.mxu0 0.0
        %2937 = vmatprep.subr.mxu0 0.0
        %2938 = vmatpush1.msra.mxu0 0.0
        %2939 = vmatprep.subr.mxu0 0.0
        %2940 = vmatpush1.msra.mxu0 0.0
        %2941 = vmatprep.subr.mxu0 0.0
        %2942 = vmatpush1.msra.mxu0 0.0
        %2943 = vmatprep.subr.mxu0 0.0
        %2944 = vmatpush1.msra.mxu0 0.0
        %2945 = vmatprep.subr.mxu0 0.0
        %2946 = vmatpush1.msra.mxu0 0.0
        %2947 = vmatprep.subr.mxu0 0.0
        %2948 = vmatpush1.msra.mxu0 0.0
        %2949 = vmatprep.subr.mxu0 0.0
        %2950 = vmatpush1.msra.mxu0 0.0
        %2951 = vmatprep.subr.mxu0 0.0
        %2952 = vmatpush1.msra.mxu0 0.0
        %2953 = vmatprep.subr.mxu0 0.0
        %2954 = vmatpush1.msra.mxu0 0.0
        %2955 = vmatprep.subr.mxu0 0.0
        %2956 = vmatpush1.msra.mxu0 %v2401
        %2957 = vmatprep.subr.mxu0 0.0
        %2958 = vmatpush1.msra.mxu0 %v2400
        %2959 = vmatprep.subr.mxu0 0.0
        %2960 = vmatpush1.msra.mxu0 %v2399
        %2961 = vmatprep.subr.mxu0 0.0
        %2962 = vmatpush1.msra.mxu0 %v2398
        %2963 = vmatprep.subr.mxu0 0.0
        %2964 = vmatpush2.msra.mxu0 0.0
        %2965 = vmatprep.subr.mxu0 0.0
        %2966 = vmatpush2.msra.mxu0 0.0
        %2967 = vmatprep.subr.mxu0 0.0
        %2968 = vmatpush2.msra.mxu0 0.0
        %2969 = vmatprep.subr.mxu0 0.0
        %2970 = vmatpush2.msra.mxu0 0.0
        %2971 = vmatprep.subr.mxu0 0.0
        %2972 = vmatpush2.msra.mxu0 0.0
        %2973 = vmatprep.subr.mxu0 0.0
        %2974 = vmatpush2.msra.mxu0 0.0
        %2975 = vmatprep.subr.mxu0 0.0
        %2976 = vmatpush2.msra.mxu0 0.0
        %2977 = vmatprep.subr.mxu0 0.0
        %2978 = vmatpush2.msra.mxu0 0.0
        %2979 = vmatprep.subr.mxu0 0.0
        %2980 = vmatpush2.msra.mxu0 0.0
        %2981 = vmatprep.subr.mxu0 0.0
        %2982 = vmatpush2.msra.mxu0 0.0
        %2983 = vmatprep.subr.mxu0 0.0
        %2984 = vmatpush2.msra.mxu0 0.0
        %2985 = vmatprep.subr.mxu0 0.0
        %2986 = vmatpush2.msra.mxu0 0.0
        %2987 = vmatprep.subr.mxu0 0.0
        %2988 = vmatpush2.msra.mxu0 0.0
        %2989 = vmatprep.subr.mxu0 0.0
        %2990 = vmatpush2.msra.mxu0 0.0
        %2991 = vmatprep.subr.mxu0 0.0
        %2992 = vmatpush2.msra.mxu0 0.0
        %2993 = vmatprep.subr.mxu0 0.0
        %2994 = vmatpush2.msra.mxu0 0.0
        %2995 = vmatprep.mubr.f32.mxu0 0.0
        %2996 = vmatmul.mubr.f32.gmra.mxu0 %v2923
        %v2997 = vpop.f32.mrf.mxu0
        %v2998 = vadd.f32 0.0, %v2997
        %v2999 = vpop.f32.mrf.mxu0
        %3000 = vmatprep.mubr.f32.mxu0 0.0
        %3001 = vmatmul.mubr.f32.gmra.mxu0 %v2926
        %v3002 = vpop.f32.mrf.mxu0
        %v3003 = vadd.f32 0.0, %v3002
        %v3004 = vpop.f32.mrf.mxu0
        %3005 = vmatprep.mubr.f32.mxu0 0.0
        %3006 = vmatmul.mubr.f32.gmra.mxu0 %v2929
        %v3007 = vpop.f32.mrf.mxu0
        %v3008 = vadd.f32 0.0, %v3007
        %v3009 = vpop.f32.mrf.mxu0
        %3010 = vdwg.mxu0
        %v3011 = vadd.f32 %v2919, %v2998
        %v3012 = vadd.f32 %v2920, %v3003
        %v3013 = vadd.f32 %v2921, %v3008
        %v3014 = vmax.f32 %v3011, 0.0
        %v3015 = vmax.f32 %v3012, 0.0
        %v3016 = vmax.f32 %v3013, 0.0
        %3017 = vmatprep.subr.mxu0 0.0
        %3018 = vmatpush1.msra.mxu0 0.0
        %3019 = vmatprep.subr.mxu0 0.0
        %3020 = vmatpush1.msra.mxu0 0.0
        %3021 = vmatprep.subr.mxu0 0.0
        %3022 = vmatpush1.msra.mxu0 0.0
        %3023 = vmatprep.subr.mxu0 0.0
        %3024 = vmatpush1.msra.mxu0 0.0
        %3025 = vmatprep.subr.mxu0 0.0
        %3026 = vmatpush1.msra.mxu0 0.0
        %3027 = vmatprep.subr.mxu0 0.0
        %3028 = vmatpush1.msra.mxu0 0.0
        %3029 = vmatprep.subr.mxu0 0.0
        %3030 = vmatpush1.msra.mxu0 0.0
        %3031 = vmatprep.subr.mxu0 0.0
        %3032 = vmatpush1.msra.mxu0 0.0
        %3033 = vmatprep.subr.mxu0 0.0
        %3034 = vmatpush1.msra.mxu0 0.0
        %3035 = vmatprep.subr.mxu0 0.0
        %3036 = vmatpush1.msra.mxu0 0.0
        %3037 = vmatprep.subr.mxu0 0.0
        %3038 = vmatpush1.msra.mxu0 0.0
        %3039 = vmatprep.subr.mxu0 0.0
        %3040 = vmatpush1.msra.mxu0 0.0
        %3041 = vmatprep.subr.mxu0 0.0
        %3042 = vmatpush1.msra.mxu0 0.0
        %3043 = vmatprep.subr.mxu0 0.0
        %3044 = vmatpush1.msra.mxu0 %v3016
        %3045 = vmatprep.subr.mxu0 0.0
        %3046 = vmatpush1.msra.mxu0 %v3015
        %3047 = vmatprep.subr.mxu0 0.0
        %3048 = vmatpush1.msra.mxu0 %v3014
        %3049 = vmatprep.subr.mxu0 0.0
        %3050 = vmatpush2.msra.mxu0 0.0
        %3051 = vmatprep.subr.mxu0 0.0
        %3052 = vmatpush2.msra.mxu0 0.0
        %3053 = vmatprep.subr.mxu0 0.0
        %3054 = vmatpush2.msra.mxu0 0.0
        %3055 = vmatprep.subr.mxu0 0.0
        %3056 = vmatpush2.msra.mxu0 0.0
        %3057 = vmatprep.subr.mxu0 0.0
        %3058 = vmatpush2.msra.mxu0 0.0
        %3059 = vmatprep.subr.mxu0 0.0
        %3060 = vmatpush2.msra.mxu0 0.0
        %3061 = vmatprep.subr.mxu0 0.0
        %3062 = vmatpush2.msra.mxu0 0.0
        %3063 = vmatprep.subr.mxu0 0.0
        %3064 = vmatpush2.msra.mxu0 0.0
        %3065 = vmatprep.subr.mxu0 0.0
        %3066 = vmatpush2.msra.mxu0 0.0
        %3067 = vmatprep.subr.mxu0 0.0
        %3068 = vmatpush2.msra.mxu0 0.0
        %3069 = vmatprep.subr.mxu0 0.0
        %3070 = vmatpush2.msra.mxu0 0.0
        %3071 = vmatprep.subr.mxu0 0.0
        %3072 = vmatpush2.msra.mxu0 0.0
        %3073 = vmatprep.subr.mxu0 0.0
        %3074 = vmatpush2.msra.mxu0 0.0
        %3075 = vmatprep.subr.mxu0 0.0
        %3076 = vmatpush2.msra.mxu0 0.0
        %3077 = vmatprep.subr.mxu0 0.0
        %3078 = vmatpush2.msra.mxu0 0.0
        %3079 = vmatprep.subr.mxu0 0.0
        %3080 = vmatpush2.msra.mxu0 0.0
        %3081 = vmatprep.mubr.f32.mxu0 0.0
        %3082 = vmatmul.mubr.f32.gmra.mxu0 %v2499
        %v3083 = vpop.f32.mrf.mxu0
        %v3084 = vadd.f32 0.0, %v3083
        %v3085 = vpop.f32.mrf.mxu0
        %3086 = vmatprep.mubr.f32.mxu0 0.0
        %3087 = vmatmul.mubr.f32.gmra.mxu0 %v2502
        %v3088 = vpop.f32.mrf.mxu0
        %v3089 = vadd.f32 0.0, %v3088
        %v3090 = vpop.f32.mrf.mxu0
        %3091 = vdwg.mxu0
        %v3093 = vsel %vm1437, %v3084, 0
        %v3096 = vsel %vm1437, %v3089, 0
        %3098 = vmatprep.subr.mxu0 0.0
        %3099 = vmatpush1.msra.mxu0 0.0
        %3100 = vmatprep.subr.mxu0 0.0
        %3101 = vmatpush1.msra.mxu0 0.0
        %3102 = vmatprep.subr.mxu0 0.0
        %3103 = vmatpush1.msra.mxu0 0.0
        %3104 = vmatprep.subr.mxu0 0.0
        %3105 = vmatpush1.msra.mxu0 0.0
        %3106 = vmatprep.subr.mxu0 0.0
        %3107 = vmatpush1.msra.mxu0 0.0
        %3108 = vmatprep.subr.mxu0 0.0
        %3109 = vmatpush1.msra.mxu0 0.0
        %3110 = vmatprep.subr.mxu0 0.0
        %3111 = vmatpush1.msra.mxu0 0.0
        %3112 = vmatprep.subr.mxu0 0.0
        %3113 = vmatpush1.msra.mxu0 0.0
        %3114 = vmatprep.subr.mxu0 0.0
        %3115 = vmatpush1.msra.mxu0 0.0
        %3116 = vmatprep.subr.mxu0 0.0
        %3117 = vmatpush1.msra.mxu0 0.0
        %3118 = vmatprep.subr.mxu0 0.0
        %3119 = vmatpush1.msra.mxu0 0.0
        %3120 = vmatprep.subr.mxu0 0.0
        %3121 = vmatpush1.msra.mxu0 0.0
        %3122 = vmatprep.subr.mxu0 0.0
        %3123 = vmatpush1.msra.mxu0 %v2582
        %3124 = vmatprep.subr.mxu0 0.0
        %3125 = vmatpush1.msra.mxu0 %v2581
        %3126 = vmatprep.subr.mxu0 0.0
        %3127 = vmatpush1.msra.mxu0 %v2580
        %3128 = vmatprep.subr.mxu0 0.0
        %3129 = vmatpush1.msra.mxu0 %v2579
        %3130 = vmatprep.subr.mxu0 0.0
        %3131 = vmatpush2.msra.mxu0 0.0
        %3132 = vmatprep.subr.mxu0 0.0
        %3133 = vmatpush2.msra.mxu0 0.0
        %3134 = vmatprep.subr.mxu0 0.0
        %3135 = vmatpush2.msra.mxu0 0.0
        %3136 = vmatprep.subr.mxu0 0.0
        %3137 = vmatpush2.msra.mxu0 0.0
        %3138 = vmatprep.subr.mxu0 0.0
        %3139 = vmatpush2.msra.mxu0 0.0
        %3140 = vmatprep.subr.mxu0 0.0
        %3141 = vmatpush2.msra.mxu0 0.0
        %3142 = vmatprep.subr.mxu0 0.0
        %3143 = vmatpush2.msra.mxu0 0.0
        %3144 = vmatprep.subr.mxu0 0.0
        %3145 = vmatpush2.msra.mxu0 0.0
        %3146 = vmatprep.subr.mxu0 0.0
        %3147 = vmatpush2.msra.mxu0 0.0
        %3148 = vmatprep.subr.mxu0 0.0
        %3149 = vmatpush2.msra.mxu0 0.0
        %3150 = vmatprep.subr.mxu0 0.0
        %3151 = vmatpush2.msra.mxu0 0.0
        %3152 = vmatprep.subr.mxu0 0.0
        %3153 = vmatpush2.msra.mxu0 0.0
        %3154 = vmatprep.subr.mxu0 0.0
        %3155 = vmatpush2.msra.mxu0 0.0
        %3156 = vmatprep.subr.mxu0 0.0
        %3157 = vmatpush2.msra.mxu0 0.0
        %3158 = vmatprep.subr.mxu0 0.0
        %3159 = vmatpush2.msra.mxu0 0.0
        %3160 = vmatprep.subr.mxu0 0.0
        %3161 = vmatpush2.msra.mxu0 0.0
        %3162 = vmatprep.mubr.f32.mxu0 0.0
        %3163 = vmatmul.mubr.f32.gmra.mxu0 %v3093
        %v3164 = vpop.f32.mrf.mxu0
        %v3165 = vadd.f32 0.0, %v3164
        %v3166 = vpop.f32.mrf.mxu0
        %3167 = vmatprep.mubr.f32.mxu0 0.0
        %3168 = vmatmul.mubr.f32.gmra.mxu0 %v3096
        %v3169 = vpop.f32.mrf.mxu0
        %v3170 = vadd.f32 0.0, %v3169
        %v3171 = vpop.f32.mrf.mxu0
        %3172 = vdwg.mxu0
        %v3173 = vadd.f32 %v2115, %v3165
        %v3174 = vadd.f32 %v2120, %v3170
        %v3175 = vadd.f32 %v3173, %v2668
        %v3176 = vadd.f32 %v3174, %v2669
        %v3177 = vmax.f32 %v3175, 0.0
        %v3178 = vmax.f32 %v3176, 0.0
        %v3179 = vld [vmem:[#allocation22] sm:$0xff]
        %v3180 = vld [vmem:[#allocation22 + $0x8] sm:$0xff]
        %v3181 = vld [vmem:[#allocation22 + $0x10] sm:$0xff]
        %v3182 = vld [vmem:[#allocation22 + $0x18] sm:$0xff]
        %v3183 = vld [vmem:[#allocation24] sm:$0x1]
        %v3185 = vlaneseq
        %v3186 = vshrl.u32 %v3185, 7
        %v3187 = vsub.s32 0, %v3186
        %v3188 = vrot.slane %v3183, %v3187
        %v3191 = vsel %vm1437, %v3177, 0
        %v3194 = vsel %vm1437, %v3178, 0
        %3196 = vmatprep.subr.mxu0 0.0
        %3197 = vmatpush1.msra.mxu0 0.0
        %3198 = vmatprep.subr.mxu0 0.0
        %3199 = vmatpush1.msra.mxu0 0.0
        %3200 = vmatprep.subr.mxu0 0.0
        %3201 = vmatpush1.msra.mxu0 0.0
        %3202 = vmatprep.subr.mxu0 0.0
        %3203 = vmatpush1.msra.mxu0 0.0
        %3204 = vmatprep.subr.mxu0 0.0
        %3205 = vmatpush1.msra.mxu0 0.0
        %3206 = vmatprep.subr.mxu0 0.0
        %3207 = vmatpush1.msra.mxu0 0.0
        %3208 = vmatprep.subr.mxu0 0.0
        %3209 = vmatpush1.msra.mxu0 0.0
        %3210 = vmatprep.subr.mxu0 0.0
        %3211 = vmatpush1.msra.mxu0 0.0
        %3212 = vmatprep.subr.mxu0 0.0
        %3213 = vmatpush1.msra.mxu0 0.0
        %3214 = vmatprep.subr.mxu0 0.0
        %3215 = vmatpush1.msra.mxu0 0.0
        %3216 = vmatprep.subr.mxu0 0.0
        %3217 = vmatpush1.msra.mxu0 0.0
        %3218 = vmatprep.subr.mxu0 0.0
        %3219 = vmatpush1.msra.mxu0 0.0
        %3220 = vmatprep.subr.mxu0 0.0
        %3221 = vmatpush1.msra.mxu0 %v3182
        %3222 = vmatprep.subr.mxu0 0.0
        %3223 = vmatpush1.msra.mxu0 %v3181
        %3224 = vmatprep.subr.mxu0 0.0
        %3225 = vmatpush1.msra.mxu0 %v3180
        %3226 = vmatprep.subr.mxu0 0.0
        %3227 = vmatpush1.msra.mxu0 %v3179
        %3228 = vmatprep.subr.mxu0 0.0
        %3229 = vmatpush2.msra.mxu0 0.0
        %3230 = vmatprep.subr.mxu0 0.0
        %3231 = vmatpush2.msra.mxu0 0.0
        %3232 = vmatprep.subr.mxu0 0.0
        %3233 = vmatpush2.msra.mxu0 0.0
        %3234 = vmatprep.subr.mxu0 0.0
        %3235 = vmatpush2.msra.mxu0 0.0
        %3236 = vmatprep.subr.mxu0 0.0
        %3237 = vmatpush2.msra.mxu0 0.0
        %3238 = vmatprep.subr.mxu0 0.0
        %3239 = vmatpush2.msra.mxu0 0.0
        %3240 = vmatprep.subr.mxu0 0.0
        %3241 = vmatpush2.msra.mxu0 0.0
        %3242 = vmatprep.subr.mxu0 0.0
        %3243 = vmatpush2.msra.mxu0 0.0
        %3244 = vmatprep.subr.mxu0 0.0
        %3245 = vmatpush2.msra.mxu0 0.0
        %3246 = vmatprep.subr.mxu0 0.0
        %3247 = vmatpush2.msra.mxu0 0.0
        %3248 = vmatprep.subr.mxu0 0.0
        %3249 = vmatpush2.msra.mxu0 0.0
        %3250 = vmatprep.subr.mxu0 0.0
        %3251 = vmatpush2.msra.mxu0 0.0
        %3252 = vmatprep.subr.mxu0 0.0
        %3253 = vmatpush2.msra.mxu0 0.0
        %3254 = vmatprep.subr.mxu0 0.0
        %3255 = vmatpush2.msra.mxu0 0.0
        %3256 = vmatprep.subr.mxu0 0.0
        %3257 = vmatpush2.msra.mxu0 0.0
        %3258 = vmatprep.subr.mxu0 0.0
        %3259 = vmatpush2.msra.mxu0 0.0
        %3260 = vmatprep.mubr.f32.mxu0 0.0
        %3261 = vmatmul.mubr.f32.gmra.mxu0 %v3191
        %v3262 = vpop.f32.mrf.mxu0
        %v3263 = vadd.f32 %v3188, %v3262
        %v3264 = vpop.f32.mrf.mxu0
        %3265 = vmatprep.mubr.f32.mxu0 0.0
        %3266 = vmatmul.mubr.f32.gmra.mxu0 %v3194
        %v3267 = vpop.f32.mrf.mxu0
        %v3268 = vadd.f32 %v3188, %v3267
        %v3269 = vpop.f32.mrf.mxu0
        %3270 = vdwg.mxu0
        %v3271 = vmax.f32 %v3263, 0.0
        %v3272 = vmax.f32 %v3268, 0.0
        %v3273 = vld [vmem:[%s55] sm:$0xff]
        %v3274 = vld [vmem:[%s55 + $0x8] sm:$0xff]
        %v3275 = vld [vmem:[%s55 + $0x10] sm:$0xff]
        %v3276 = vld [vmem:[%s55 + $0x18] sm:$0xff]
        %v3277 = vld [vmem:[#allocation25] sm:$0x1]
        %v3279 = vlaneseq
        %v3280 = vshrl.u32 %v3279, 7
        %v3281 = vsub.s32 0, %v3280
        %v3282 = vrot.slane %v3277, %v3281
        %v3285 = vsel %vm1437, %v3271, 0
        %v3288 = vsel %vm1437, %v3272, 0
        %3290 = vmatprep.subr.mxu0 0.0
        %3291 = vmatpush1.msra.mxu0 0.0
        %3292 = vmatprep.subr.mxu0 0.0
        %3293 = vmatpush1.msra.mxu0 0.0
        %3294 = vmatprep.subr.mxu0 0.0
        %3295 = vmatpush1.msra.mxu0 0.0
        %3296 = vmatprep.subr.mxu0 0.0
        %3297 = vmatpush1.msra.mxu0 0.0
        %3298 = vmatprep.subr.mxu0 0.0
        %3299 = vmatpush1.msra.mxu0 0.0
        %3300 = vmatprep.subr.mxu0 0.0
        %3301 = vmatpush1.msra.mxu0 0.0
        %3302 = vmatprep.subr.mxu0 0.0
        %3303 = vmatpush1.msra.mxu0 0.0
        %3304 = vmatprep.subr.mxu0 0.0
        %3305 = vmatpush1.msra.mxu0 0.0
        %3306 = vmatprep.subr.mxu0 0.0
        %3307 = vmatpush1.msra.mxu0 0.0
        %3308 = vmatprep.subr.mxu0 0.0
        %3309 = vmatpush1.msra.mxu0 0.0
        %3310 = vmatprep.subr.mxu0 0.0
        %3311 = vmatpush1.msra.mxu0 0.0
        %3312 = vmatprep.subr.mxu0 0.0
        %3313 = vmatpush1.msra.mxu0 0.0
        %3314 = vmatprep.subr.mxu0 0.0
        %3315 = vmatpush1.msra.mxu0 %v3276
        %3316 = vmatprep.subr.mxu0 0.0
        %3317 = vmatpush1.msra.mxu0 %v3275
        %3318 = vmatprep.subr.mxu0 0.0
        %3319 = vmatpush1.msra.mxu0 %v3274
        %3320 = vmatprep.subr.mxu0 0.0
        %3321 = vmatpush1.msra.mxu0 %v3273
        %3322 = vmatprep.subr.mxu0 0.0
        %3323 = vmatpush2.msra.mxu0 0.0
        %3324 = vmatprep.subr.mxu0 0.0
        %3325 = vmatpush2.msra.mxu0 0.0
        %3326 = vmatprep.subr.mxu0 0.0
        %3327 = vmatpush2.msra.mxu0 0.0
        %3328 = vmatprep.subr.mxu0 0.0
        %3329 = vmatpush2.msra.mxu0 0.0
        %3330 = vmatprep.subr.mxu0 0.0
        %3331 = vmatpush2.msra.mxu0 0.0
        %3332 = vmatprep.subr.mxu0 0.0
        %3333 = vmatpush2.msra.mxu0 0.0
        %3334 = vmatprep.subr.mxu0 0.0
        %3335 = vmatpush2.msra.mxu0 0.0
        %3336 = vmatprep.subr.mxu0 0.0
        %3337 = vmatpush2.msra.mxu0 0.0
        %3338 = vmatprep.subr.mxu0 0.0
        %3339 = vmatpush2.msra.mxu0 0.0
        %3340 = vmatprep.subr.mxu0 0.0
        %3341 = vmatpush2.msra.mxu0 0.0
        %3342 = vmatprep.subr.mxu0 0.0
        %3343 = vmatpush2.msra.mxu0 0.0
        %3344 = vmatprep.subr.mxu0 0.0
        %3345 = vmatpush2.msra.mxu0 0.0
        %3346 = vmatprep.subr.mxu0 0.0
        %3347 = vmatpush2.msra.mxu0 0.0
        %3348 = vmatprep.subr.mxu0 0.0
        %3349 = vmatpush2.msra.mxu0 0.0
        %3350 = vmatprep.subr.mxu0 0.0
        %3351 = vmatpush2.msra.mxu0 0.0
        %3352 = vmatprep.subr.mxu0 0.0
        %3353 = vmatpush2.msra.mxu0 0.0
        %3354 = vmatprep.mubr.f32.mxu0 0.0
        %3355 = vmatmul.mubr.f32.gmra.mxu0 %v3285
        %v3356 = vpop.f32.mrf.mxu0
        %v3357 = vadd.f32 %v3282, %v3356
        %v3358 = vpop.f32.mrf.mxu0
        %3359 = vmatprep.mubr.f32.mxu0 0.0
        %3360 = vmatmul.mubr.f32.gmra.mxu0 %v3288
        %v3361 = vpop.f32.mrf.mxu0
        %v3362 = vadd.f32 %v3282, %v3361
        %v3363 = vpop.f32.mrf.mxu0
        %3364 = vdwg.mxu0
        %v3365 = vmax.f32 %v3357, 0.0
        %v3366 = vmax.f32 %v3362, 0.0
        %v3367 = vld [vmem:[%s59] sm:$0xff]
        %v3368 = vld [vmem:[%s59 + $0x8] sm:$0xff]
        %v3369 = vld [vmem:[%s59 + $0x10] sm:$0xff]
        %v3370 = vld [vmem:[%s59 + $0x18] sm:$0xff]
        %v3371 = vld [vmem:[%s61] sm:$0x1]
        %v3373 = vlaneseq
        %v3374 = vshrl.u32 %v3373, 7
        %v3375 = vsub.s32 0, %v3374
        %v3376 = vrot.slane %v3371, %v3375
        %v3379 = vsel %vm1437, %v3365, 0
        %v3382 = vsel %vm1437, %v3366, 0
        %3384 = vmatprep.subr.mxu0 0.0
        %3385 = vmatpush1.msra.mxu0 0.0
        %3386 = vmatprep.subr.mxu0 0.0
        %3387 = vmatpush1.msra.mxu0 0.0
        %3388 = vmatprep.subr.mxu0 0.0
        %3389 = vmatpush1.msra.mxu0 0.0
        %3390 = vmatprep.subr.mxu0 0.0
        %3391 = vmatpush1.msra.mxu0 0.0
        %3392 = vmatprep.subr.mxu0 0.0
        %3393 = vmatpush1.msra.mxu0 0.0
        %3394 = vmatprep.subr.mxu0 0.0
        %3395 = vmatpush1.msra.mxu0 0.0
        %3396 = vmatprep.subr.mxu0 0.0
        %3397 = vmatpush1.msra.mxu0 0.0
        %3398 = vmatprep.subr.mxu0 0.0
        %3399 = vmatpush1.msra.mxu0 0.0
        %3400 = vmatprep.subr.mxu0 0.0
        %3401 = vmatpush1.msra.mxu0 0.0
        %3402 = vmatprep.subr.mxu0 0.0
        %3403 = vmatpush1.msra.mxu0 0.0
        %3404 = vmatprep.subr.mxu0 0.0
        %3405 = vmatpush1.msra.mxu0 0.0
        %3406 = vmatprep.subr.mxu0 0.0
        %3407 = vmatpush1.msra.mxu0 0.0
        %3408 = vmatprep.subr.mxu0 0.0
        %3409 = vmatpush1.msra.mxu0 %v3370
        %3410 = vmatprep.subr.mxu0 0.0
        %3411 = vmatpush1.msra.mxu0 %v3369
        %3412 = vmatprep.subr.mxu0 0.0
        %3413 = vmatpush1.msra.mxu0 %v3368
        %3414 = vmatprep.subr.mxu0 0.0
        %3415 = vmatpush1.msra.mxu0 %v3367
        %3416 = vmatprep.subr.mxu0 0.0
        %3417 = vmatpush2.msra.mxu0 0.0
        %3418 = vmatprep.subr.mxu0 0.0
        %3419 = vmatpush2.msra.mxu0 0.0
        %3420 = vmatprep.subr.mxu0 0.0
        %3421 = vmatpush2.msra.mxu0 0.0
        %3422 = vmatprep.subr.mxu0 0.0
        %3423 = vmatpush2.msra.mxu0 0.0
        %3424 = vmatprep.subr.mxu0 0.0
        %3425 = vmatpush2.msra.mxu0 0.0
        %3426 = vmatprep.subr.mxu0 0.0
        %3427 = vmatpush2.msra.mxu0 0.0
        %3428 = vmatprep.subr.mxu0 0.0
        %3429 = vmatpush2.msra.mxu0 0.0
        %3430 = vmatprep.subr.mxu0 0.0
        %3431 = vmatpush2.msra.mxu0 0.0
        %3432 = vmatprep.subr.mxu0 0.0
        %3433 = vmatpush2.msra.mxu0 0.0
        %3434 = vmatprep.subr.mxu0 0.0
        %3435 = vmatpush2.msra.mxu0 0.0
        %3436 = vmatprep.subr.mxu0 0.0
        %3437 = vmatpush2.msra.mxu0 0.0
        %3438 = vmatprep.subr.mxu0 0.0
        %3439 = vmatpush2.msra.mxu0 0.0
        %3440 = vmatprep.subr.mxu0 0.0
        %3441 = vmatpush2.msra.mxu0 0.0
        %3442 = vmatprep.subr.mxu0 0.0
        %3443 = vmatpush2.msra.mxu0 0.0
        %3444 = vmatprep.subr.mxu0 0.0
        %3445 = vmatpush2.msra.mxu0 0.0
        %3446 = vmatprep.subr.mxu0 0.0
        %3447 = vmatpush2.msra.mxu0 0.0
        %3448 = vmatprep.mubr.f32.mxu0 0.0
        %3449 = vmatmul.mubr.f32.gmra.mxu0 %v3379
        %v3450 = vpop.f32.mrf.mxu0
        %v3451 = vadd.f32 %v3376, %v3450
        %v3452 = vpop.f32.mrf.mxu0
        %3453 = vmatprep.mubr.f32.mxu0 0.0
        %3454 = vmatmul.mubr.f32.gmra.mxu0 %v3382
        %v3455 = vpop.f32.mrf.mxu0
        %v3456 = vadd.f32 %v3376, %v3455
        %v3457 = vpop.f32.mrf.mxu0
        %3458 = vdwg.mxu0
        %vm3459 = vcmask 23552
        %3460 = vst.msk [vmem:[%s1314] sm:$0xff] %vm3459, %v3451
        %vm3461 = vcmask 19456
        %3462 = vst.msk [vmem:[%s1314 + $0x8] sm:$0xf] %vm3461, %v3456
        %v3463 = vld [vmem:[%s1304] sm:$0xff]
        %v3464 = vld [vmem:[%s1304 + $0x8] sm:$0xf]
        %v3465 = vmax.f32 %v3451, -100.0
        %v3466 = vmax.f32 %v3456, -100.0
        %v3467 = vmin.f32 %v3465, 100.0
        %v3468 = vmin.f32 %v3466, 100.0
        %v3469 = vadd.f32 %v3463, %v3467
        %v3470 = vadd.f32 %v3464, %v3468
        %3471 = vst.msk [vmem:[%s1309] sm:$0xff] %vm3459, %v3469
        %3472 = vst.msk [vmem:[%s1309 + $0x8] sm:$0xf] %vm3461, %v3470
        %p3473 = scmp.lt.s32.totalorder %s86, 1
        %s3474 = scalar_select %p3473, %s86, 1
        %s3475 = smul.addr %s3474, 2
        %s3476 = smul.addr %s3475, 8
        %s3477 = scalar_lea.vmem %s63, %s3476
        %p3478 = scmp.lt.s32.totalorder %s86, 1
        %s3479 = scalar_select %p3478, %s86, 1
        %s3480 = smul.addr %s3479, 2
        %s3481 = smul.addr %s3480, 8
        %s3482 = scalar_lea.vmem %s65, %s3481
        // Predicated region
        $region209: #{tpu_custom_call.1} parent=143 // pred_check
          %p3483 = pneg %p785
        $region210: #{tpu_custom_call.1} parent=143 // pred_check_branch
          %3485 = sbr.rel (%p3483) target = $region212
        $region211: #{tpu_custom_call.1} parent=143 // pred_region
          _
        $region212: #{tpu_custom_call.1} parent=143 // pred_fallthru
          _
        // Predicated region
        $region213: #{tpu_custom_call.1} parent=143 // pred_check
          %p3486 = pneg %p811
        $region214: #{tpu_custom_call.1} parent=143 // pred_check_branch
          %3488 = sbr.rel (%p3486) target = $region216
        $region215: #{tpu_custom_call.1} parent=143 // pred_region
          _
        $region216: #{tpu_custom_call.1} parent=143 // pred_fallthru
          _
      $region144: #{tpu_custom_call.1} parent=5 // pred_fallthru
        _
      %p3489 = scmp.le.s32.totalorder 2, %s81
      // Predicated region
      $region217: #{tpu_custom_call.1} parent=5 // pred_check
        %p3490 = pneg %p3489
      $region218: #{tpu_custom_call.1} parent=5 // pred_check_branch
        %3492 = sbr.rel (%p3490) target = $region220
      $region219: #{tpu_custom_call.1} parent=5 // pred_region
        %s3493 = ssub.s32 %s81, 2
        // Predicated region
        $region221: #{tpu_custom_call.1} parent=219 // pred_check
          %p3494 = pneg %p791
        $region222: #{tpu_custom_call.1} parent=219 // pred_check_branch
          %3496 = sbr.rel (%p3494) target = $region224
        $region223: #{tpu_custom_call.1} parent=219 // pred_region
          %p3497 = scmp.lt.s32.totalorder %s87, 1
          %s3498 = scalar_select %p3497, %s87, 1
          %s3499 = smul.addr %s3498, 2
          %s3500 = smul.addr %s3499, 8
          %s3501 = scalar_lea.vmem %s63, %s3500
        $region224: #{tpu_custom_call.1} parent=219 // pred_fallthru
          _
        // Predicated region
        $region225: #{tpu_custom_call.1} parent=219 // pred_check
          %p3502 = pneg %p817
        $region226: #{tpu_custom_call.1} parent=219 // pred_check_branch
          %3504 = sbr.rel (%p3502) target = $region228
        $region227: #{tpu_custom_call.1} parent=219 // pred_region
          %p3505 = scmp.lt.s32.totalorder %s87, 1
          %s3506 = scalar_select %p3505, %s87, 1
          %s3507 = smul.addr %s3506, 2
          %s3508 = smul.addr %s3507, 8
          %s3509 = scalar_lea.vmem %s65, %s3508
        $region228: #{tpu_custom_call.1} parent=219 // pred_fallthru
          _
      $region220: #{tpu_custom_call.1} parent=5 // pred_fallthru
        _
    $region6: #{tpu_custom_call.1} parent=1 // loop_footer
      %s85 = sadd.s32 1, %s81
    $region7: #{tpu_custom_call.1} parent=1 // loop_footer_branch
      %80 = sbr.rel target = $region3
    $region8: #{tpu_custom_call.1} parent=1 // loop_exit
      _
    %3510 = vsyncpa [#allocation3], 1
    %s3511 = scalar_lea.sflag [#allocation3], 1
    %3512 = vsyncpa %s3511, 1
    %3513 = vsyncpa [#allocation5], 1
    %3514 = vsyncpa [#allocation8], 1
    %3515 = vsyncpa [#allocation11], 1
    %3516 = vsyncpa [#allocation14], 1
    %3517 = vsyncpa [#allocation17], 1
    %3518 = vsyncpa [#allocation20], 1
    %3519 = vsyncpa [#allocation23], 1
    %3520 = vsyncpa [#allocation26], 1

</llo_original>
